<compile_context>
chip_gen: v7x
topology: tpu7x:2x2x1
jax: 0.10.0
libtpu: 0.0.40
codegen_flags: <defaults>
</compile_context>

<pallas_src>
import functools

import jax
import jax.numpy as jnp
from jax.experimental import pallas as pl
from jax.experimental.pallas import tpu as pltpu

LN_EPS = 1e-5  # torch.nn.LayerNorm default


def _layernorm(v, gamma, beta):
    mean = jnp.mean(v, axis=-1, keepdims=True)
    cen = v - mean
    var = jnp.mean(cen * cen, axis=-1, keepdims=True)
    inv = jax.lax.rsqrt(var + LN_EPS)
    return cen * inv * gamma + beta


def _gelu(v):
    # exact (erf-based) GELU, matching torch.nn.GELU(approximate='none')
    return 0.5 * v * (1.0 + jax.lax.erf(v * (1.0 / jnp.sqrt(2.0))))


def encoder_block_kernel(x_ref, gamma_ref, beta_ref,
                         wqkv_ref, bqkv_ref, wo_ref, bo_ref,
                         w1_ref, b1_ref, w2_ref, b2_ref,
                         o_ref, *, num_heads, kc):
    f32 = jnp.float32
    mm = wqkv_ref.dtype          # matmul operand dtype (bf16 by default); accumulation is f32

    L, Bt, E = x_ref.shape
    H = num_heads
    Dh = E // H
    M = Bt * L
    BH = Bt * H

    gamma = gamma_ref[...]
    beta = beta_ref[...]

    # (L, Bt, E) -> (Bt, L, E) relayout in VMEM (no wrapper-side HBM transpose).
    x = jnp.swapaxes(x_ref[...].astype(f32), 0, 1)
    xf = x.reshape(M, E)                       # fused batch*seq rows for all matmuls

    # ---- h = LayerNorm(x)  (shared norm; reused again before the MLP) ----
    h = _layernorm(xf, gamma, beta)
    h_mm = h.astype(mm)

    # ---- fused QKV projection: single full-width MXU matmul ----
    # 1/sqrt(Dh) is pre-folded into the q columns of wqkv / bqkv in the wrapper.
    qkv = jnp.dot(h_mm, wqkv_ref[...], preferred_element_type=f32) + bqkv_ref[...]

    def to_heads(t):                           # (M, E) -> (Bt*H, L, Dh)
        return t.reshape(Bt, L, H, Dh).transpose(0, 2, 1, 3).reshape(BH, L, Dh)

    q = to_heads(qkv[:, :E]).astype(mm)
    k = to_heads(qkv[:, E:2 * E]).astype(mm)
    v = to_heads(qkv[:, 2 * E:]).astype(mm)

    # ---- attention: single batched einsum over Bt*H, online softmax over key chunks ----
    nkc = L // kc
    m_i = jnp.full((BH, L, 1), -jnp.inf, f32)
    l_i = jnp.zeros((BH, L, 1), f32)
    acc = jnp.zeros((BH, L, Dh), f32)
    for c in range(nkc):
        k_c = k[:, c * kc:(c + 1) * kc, :]
        v_c = v[:, c * kc:(c + 1) * kc, :]
        s = jnp.einsum('bld,bmd->blm', q, k_c, preferred_element_type=f32)
        m_new = jnp.maximum(m_i, jnp.max(s, axis=-1, keepdims=True))
        alpha = jnp.exp(m_i - m_new)
        p = jnp.exp(s - m_new)
        l_i = alpha * l_i + jnp.sum(p, axis=-1, keepdims=True)
        acc = alpha * acc + jnp.einsum('blm,bmd->bld', p.astype(mm), v_c,
                                       preferred_element_type=f32)
        m_i = m_new
    # Deferred softmax normalization on the EUP reciprocal (free VLIW slot).
    ctx = acc * pl.reciprocal(l_i, approx=True)

    # Back to head-concatenated (M, E) layout, then one full-width output projection.
    ctx_f = ctx.reshape(Bt, H, L, Dh).transpose(0, 2, 1, 3).reshape(M, E)
    attn = jnp.dot(ctx_f.astype(mm), wo_ref[...], preferred_element_type=f32) + bo_ref[...]

    h1 = attn + xf                              # residual 1

    # ---- MLP branch: Linear -> GELU -> Linear -> GELU (dropouts are identity) ----
    h2 = _layernorm(h1, gamma, beta)            # same LayerNorm params (shared module)
    m1 = _gelu(jnp.dot(h2.astype(mm), w1_ref[...], preferred_element_type=f32)
               + b1_ref[...])
    m2 = _gelu(jnp.dot(m1.astype(mm), w2_ref[...], preferred_element_type=f32)
               + b2_ref[...])

    out = (m2 + h1).reshape(Bt, L, E)           # residual 2
    o_ref[...] = jnp.swapaxes(out, 0, 1).astype(o_ref.dtype)


def _device_vmem_budget():
    """Physical per-core VMEM minus headroom; conservative (v7x) fallback."""
    try:
        cap = int(pltpu.get_tpu_info().vmem_capacity_bytes)
    except Exception:
        cap = 64 * 1024 * 1024
    return max(cap - (8 << 20), 16 << 20)


def _pick_key_chunk(L):
    """Key-chunk size for online softmax: full L when small, else a divisor <= 512."""
    if L <= 512:
        return L
    for cand in (512, 384, 256, 128):
        if L % cand == 0:
            return cand
    return max(d for d in range(1, 513) if L % d == 0)


def _act_bytes(Bt, L, E, F, H, kc):
    """Rough per-block VMEM activation estimate (the compiler reuses buffers)."""
    M = Bt * L
    big = 8 * M * E * 4                       # handful of (M,E) f32 live values
    qkv = M * 3 * E * (4 + 2)                 # f32 qkv + bf16 matmul-operand copies
    scores = 2 * Bt * H * L * kc * 4          # s and p for one key chunk
    mlp = M * F * (4 + 2)
    io = 2 * 2 * L * Bt * E * 4               # double-buffered x in / out blocks
    return big + qkv + scores + mlp + io


def _pick_batch_tile(N, L, est_fn, budget):
    """Batch tile: full batch when tiny / unaligned, otherwise a multiple of 8 dividing
    N, grown until M=Bt*L ~ 2048 subject to the VMEM budget; keeps >= 2 grid steps when
    the batch allows it (v7x has two TensorCores under dimension_semantics='parallel')."""
    if N % 8 != 0:
        return N
    bt = 8
    while (bt * 2 <= N and N % (bt * 2) == 0 and (bt * 2) * L <= 2048
           and est_fn(bt * 2) <= 0.6 * budget):
        bt *= 2
    if bt == N and N >= 16 and (N // 2) % 8 == 0:
        bt = N // 2
    return bt


def encoder_block(x, params, *, num_heads, batch_tile=None, mm_dtype=jnp.bfloat16,
                  single_buffer_weights=True):
    """x: (L, N, E) -> (L, N, E).  mm_dtype controls matmul-operand dtype (bf16 default
    for MXU-native throughput); accumulation and all elementwise math stay f32."""
    L, N, E = x.shape
    H = num_heads
    Dh = E // H
    F = params["w1"].shape[0]
    f32 = jnp.float32

    # Pad unaligned large batches to a multiple of 8 (padded rows are independent and
    # sliced off); tiny unaligned batches use the full-dims block exception.
    orig_N = N
    if N % 8 != 0 and N > 8:
        pad = (-N) % 8
        x = jnp.concatenate([x, jnp.zeros((L, pad, E), x.dtype)], axis=1)
        N = N + pad

    kc = _pick_key_chunk(L)
    itmm = jnp.dtype(mm_dtype).itemsize
    w_bytes = (3 * E * E + E * E + 2 * E * F) * itmm + (9 * E + F) * 4
    w_factor = 1 if single_buffer_weights else 2
    budget = _device_vmem_budget()
    est_fn = lambda bt: w_factor * w_bytes + _act_bytes(bt, L, E, F, H, kc)

    Bt = _pick_batch_tile(N, L, est_fn, budget) if batch_tile is None else batch_tile
    assert N % Bt == 0 and (Bt == N or Bt % 8 == 0), (N, Bt)

    # ---- weight prep: reshapes / casts / scale folding happen once, outside the kernel ----
    gamma = params["ln_gamma"].reshape(1, E).astype(f32)
    beta = params["ln_beta"].reshape(1, E).astype(f32)

    w_in = params["w_in"].astype(f32)          # (3E, E), rows = packed q,k,v out-features
    b_in = params["b_in"].astype(f32)          # (3E,)
    scale = float(Dh) ** -0.5                  # folded into the q projection
    col_scale = jnp.concatenate([jnp.full((E,), scale, f32), jnp.ones((2 * E,), f32)])
    w_qkv = (w_in.T * col_scale[None, :]).astype(mm_dtype)   # (E, 3E): [q | k | v]
    b_qkv = (b_in * col_scale).reshape(1, 3 * E).astype(f32)

    wo = params["w_out"].T.astype(mm_dtype)    # (E_in=H*Dh, E_out=E), head-major rows
    bo = params["b_out"].reshape(1, E).astype(f32)

    w1_t = params["w1"].T.astype(mm_dtype)     # (E, F)
    b1 = params["b1"].reshape(1, F).astype(f32)
    w2_t = params["w2"].T.astype(mm_dtype)     # (F, E)
    b2 = params["b2"].reshape(1, E).astype(f32)

    args = (x, gamma, beta, w_qkv, b_qkv, wo, bo, w1_t, b1, w2_t, b2)

    def full_spec(a):
        zeros = (0,) * a.ndim
        idx = lambda b, zeros=zeros: zeros
        if single_buffer_weights:
            # Constant-index blocks are fetched once; don't waste VMEM double-buffering.
            return pl.BlockSpec(a.shape, idx, pipeline_mode=pl.Buffered(1))
        return pl.BlockSpec(a.shape, idx)

    in_specs = [pl.BlockSpec((L, Bt, E), lambda b: (0, b, 0))] + \
               [full_spec(a) for a in args[1:]]
    out_spec = pl.BlockSpec((L, Bt, E), lambda b: (0, b, 0))

    # Explicit VMEM budget, clamped to the device's physical capacity (v7x = 64 MiB/TC).
    vmem_limit = int(min(budget,
                         max(32 << 20,
                             w_factor * w_bytes + _act_bytes(Bt, L, E, F, H, kc)
                             + (4 << 20))))

    out = pl.pallas_call(
        functools.partial(encoder_block_kernel, num_heads=num_heads, kc=kc),
        out_shape=jax.ShapeDtypeStruct((L, N, E), x.dtype),
        grid_spec=pltpu.PrefetchScalarGridSpec(
            num_scalar_prefetch=0,
            grid=(N // Bt,),
            in_specs=in_specs,
            out_specs=out_spec,
        ),
        compiler_params=pltpu.CompilerParams(
            dimension_semantics=("parallel",),
            vmem_limit_bytes=vmem_limit,
        ),
    )(*args)

    if N != orig_N:
        out = out[:, :orig_N, :]
    return out


def reference(x, params, num_heads):
    """Pure-JAX reference mirroring the PyTorch forward (eval mode)."""
    L, N, E = x.shape
    H = num_heads
    Dh = E // H

    def ln(v):
        mean = v.mean(-1, keepdims=True)
        var = ((v - mean) ** 2).mean(-1, keepdims=True)
        return (v - mean) / jnp.sqrt(var + LN_EPS) * params["ln_gamma"] + params["ln_beta"]

    def gelu(v):
        return 0.5 * v * (1.0 + jax.lax.erf(v / jnp.sqrt(2.0)))

    h = ln(x)
    qkv = h @ params["w_in"].T + params["b_in"]          # (L, N, 3E)
    q, k, v = jnp.split(qkv, 3, axis=-1)

    def heads(t):
        return t.reshape(L, N, H, Dh).transpose(1, 2, 0, 3)   # (N, H, L, Dh)

    qh, kh, vh = heads(q), heads(k), heads(v)
    s = jnp.einsum('nhld,nhmd->nhlm', qh, kh) / jnp.sqrt(jnp.float32(Dh))
    p = jax.nn.softmax(s, axis=-1)
    ctx = jnp.einsum('nhlm,nhmd->nhld', p, vh)
    ctx = ctx.transpose(2, 0, 1, 3).reshape(L, N, E)
    attn_out = ctx @ params["w_out"].T + params["b_out"]
    h1 = attn_out + x
    h2 = ln(h1)
    m = gelu(h2 @ params["w1"].T + params["b1"])
    m = gelu(m @ params["w2"].T + params["b2"])
    return m + h1


if __name__ == "__main__":
    import numpy as np

    # small shapes: seq=8, batch=2, dim=32, heads=4, fc_dims=64
    L, N, E, H, F = 8, 2, 32, 4, 64
    key = jax.random.PRNGKey(0)
    ks = jax.random.split(key, 12)
    sc = 0.1
    params = {
        "ln_gamma": jax.random.normal(ks[0], (E,), jnp.float32) * sc + 1.0,
        "ln_beta":  jax.random.normal(ks[1], (E,), jnp.float32) * sc,
        "w_in":     jax.random.normal(ks[2], (3 * E, E), jnp.float32) * sc,
        "b_in":     jax.random.normal(ks[3], (3 * E,), jnp.float32) * sc,
        "w_out":    jax.random.normal(ks[4], (E, E), jnp.float32) * sc,
        "b_out":    jax.random.normal(ks[5], (E,), jnp.float32) * sc,
        "w1":       jax.random.normal(ks[6], (F, E), jnp.float32) * sc,
        "b1":       jax.random.normal(ks[7], (F,), jnp.float32) * sc,
        "w2":       jax.random.normal(ks[8], (E, F), jnp.float32) * sc,
        "b2":       jax.random.normal(ks[9], (E,), jnp.float32) * sc,
    }
    x = jax.random.normal(ks[10], (L, N, E), jnp.float32)

    ref = reference(x, params, H)

    def run(**kw):
        return jax.block_until_ready(encoder_block(x, params, num_heads=H, **kw))

    # Default path: bf16 matmul operands (MXU-native), f32 accumulation. If this jax
    # build does not accept pipeline_mode=pl.Buffered(1), retry with default buffering.
    sbw = True
    try:
        out_bf16 = run(single_buffer_weights=sbw)
    except Exception:
        sbw = False
        out_bf16 = run(single_buffer_weights=sbw)
    np.testing.assert_allclose(np.asarray(out_bf16), np.asarray(ref), rtol=5e-2, atol=5e-2)

    # f32 matmul-operand path: tight check against the f32 reference.
    out_f32 = run(mm_dtype=jnp.float32, single_buffer_weights=sbw)
    np.testing.assert_allclose(np.asarray(out_f32), np.asarray(ref), rtol=2e-3, atol=2e-3)

    print("KERNEL_OK")
</pallas_src>

<mosaic_0001>
module attributes {stable_mosaic.version = 11 : i64} {
  func.func @encoder_block_kernel(%arg0: i32, %arg1: memref<8x2x32xf32, #tpu.memory_space<vmem>>, %arg2: memref<1x32xf32, #tpu.memory_space<vmem>>, %arg3: memref<1x32xf32, #tpu.memory_space<vmem>>, %arg4: memref<32x96xbf16, #tpu.memory_space<vmem>>, %arg5: memref<1x96xf32, #tpu.memory_space<vmem>>, %arg6: memref<32x32xbf16, #tpu.memory_space<vmem>>, %arg7: memref<1x32xf32, #tpu.memory_space<vmem>>, %arg8: memref<32x64xbf16, #tpu.memory_space<vmem>>, %arg9: memref<1x64xf32, #tpu.memory_space<vmem>>, %arg10: memref<64x32xbf16, #tpu.memory_space<vmem>>, %arg11: memref<1x32xf32, #tpu.memory_space<vmem>>, %arg12: memref<8x2x32xf32, #tpu.memory_space<vmem>>) attributes {dimension_semantics = [#tpu.dimension_semantics<parallel>], iteration_bounds = array<i64: 1>, scalar_prefetch = 0 : i64, scratch_operands = 0 : i64, tpu.core_type = #tpu.core_type<tc>, window_params = [{transform_indices = @transform_0, window_bounds = array<i64: 8, 2, 32>}, {pipeline_mode = #tpu.pipeline_mode<synchronous>, transform_indices = @transform_1, window_bounds = array<i64: 1, 32>}, {pipeline_mode = #tpu.pipeline_mode<synchronous>, transform_indices = @transform_2, window_bounds = array<i64: 1, 32>}, {pipeline_mode = #tpu.pipeline_mode<synchronous>, transform_indices = @transform_3, window_bounds = array<i64: 32, 96>}, {pipeline_mode = #tpu.pipeline_mode<synchronous>, transform_indices = @transform_4, window_bounds = array<i64: 1, 96>}, {pipeline_mode = #tpu.pipeline_mode<synchronous>, transform_indices = @transform_5, window_bounds = array<i64: 32, 32>}, {pipeline_mode = #tpu.pipeline_mode<synchronous>, transform_indices = @transform_6, window_bounds = array<i64: 1, 32>}, {pipeline_mode = #tpu.pipeline_mode<synchronous>, transform_indices = @transform_7, window_bounds = array<i64: 32, 64>}, {pipeline_mode = #tpu.pipeline_mode<synchronous>, transform_indices = @transform_8, window_bounds = array<i64: 1, 64>}, {pipeline_mode = #tpu.pipeline_mode<synchronous>, transform_indices = @transform_9, window_bounds = array<i64: 64, 32>}, {pipeline_mode = #tpu.pipeline_mode<synchronous>, transform_indices = @transform_10, window_bounds = array<i64: 1, 32>}, {transform_indices = @transform_11, window_bounds = array<i64: 8, 2, 32>}]} {
    %c0 = arith.constant 0 : index
    %c0_0 = arith.constant 0 : index
    %0 = vector.load %arg2[%c0, %c0_0] : memref<1x32xf32, #tpu.memory_space<vmem>>, vector<1x32xf32>
    %c0_1 = arith.constant 0 : index
    %c0_2 = arith.constant 0 : index
    %1 = vector.load %arg3[%c0_1, %c0_2] : memref<1x32xf32, #tpu.memory_space<vmem>>, vector<1x32xf32>
    %c0_3 = arith.constant 0 : index
    %c0_4 = arith.constant 0 : index
    %c0_5 = arith.constant 0 : index
    %2 = vector.load %arg1[%c0_3, %c0_4, %c0_5] : memref<8x2x32xf32, #tpu.memory_space<vmem>>, vector<8x2x32xf32>
    %3 = tpu.transpose %2, [1, 0, 2] : vector<8x2x32xf32> -> vector<2x8x32xf32>
    %4 = vector.shape_cast %3 : vector<2x8x32xf32> to vector<16x32xf32>
    %cst = arith.constant dense<0.000000e+00> : vector<16xf32>
    %5 = vector.multi_reduction <add>, %4, %cst [1] : vector<16x32xf32> to vector<16xf32>
    %6 = vector.shape_cast %5 : vector<16xf32> to vector<16x1xf32>
    %cst_6 = arith.constant 3.200000e+01 : f32
    %7 = vector.broadcast %cst_6 : f32 to vector<16x1xf32>
    %8 = arith.divf %6, %7 : vector<16x1xf32>
    %9 = vector.broadcast %8 : vector<16x1xf32> to vector<16x32xf32>
    %10 = arith.subf %4, %9 : vector<16x32xf32>
    %11 = arith.mulf %10, %10 : vector<16x32xf32>
    %cst_7 = arith.constant dense<0.000000e+00> : vector<16xf32>
    %12 = vector.multi_reduction <add>, %11, %cst_7 [1] : vector<16x32xf32> to vector<16xf32>
    %13 = vector.shape_cast %12 : vector<16xf32> to vector<16x1xf32>
    %cst_8 = arith.constant 3.200000e+01 : f32
    %14 = vector.broadcast %cst_8 : f32 to vector<16x1xf32>
    %15 = arith.divf %13, %14 : vector<16x1xf32>
    %cst_9 = arith.constant 9.99999974E-6 : f32
    %16 = vector.broadcast %cst_9 : f32 to vector<16x1xf32>
    %17 = arith.addf %15, %16 : vector<16x1xf32>
    %18 = math.rsqrt %17 : vector<16x1xf32>
    %19 = vector.broadcast %18 : vector<16x1xf32> to vector<16x32xf32>
    %20 = arith.mulf %10, %19 : vector<16x32xf32>
    %21 = vector.broadcast %0 : vector<1x32xf32> to vector<16x32xf32>
    %22 = arith.mulf %20, %21 : vector<16x32xf32>
    %23 = vector.broadcast %1 : vector<1x32xf32> to vector<16x32xf32>
    %24 = arith.addf %22, %23 : vector<16x32xf32>
    %25 = arith.truncf %24 : vector<16x32xf32> to vector<16x32xbf16>
    %c0_10 = arith.constant 0 : index
    %c0_11 = arith.constant 0 : index
    %26 = vector.load %arg4[%c0_10, %c0_11] : memref<32x96xbf16, #tpu.memory_space<vmem>>, vector<32x96xbf16>
    %cst_12 = arith.constant dense<0.000000e+00> : vector<16x96xf32>
    %27 = tpu.matmul %25, %26, %cst_12 {dimension_numbers = #tpu.dot_dimension_numbers<[1], [0], [0], [1], [0, 0, 1, 1], [], []>} : vector<16x32xbf16>, vector<32x96xbf16>, vector<16x96xf32> -> vector<16x96xf32>
    %c0_13 = arith.constant 0 : index
    %c0_14 = arith.constant 0 : index
    %28 = vector.load %arg5[%c0_13, %c0_14] : memref<1x96xf32, #tpu.memory_space<vmem>>, vector<1x96xf32>
    %29 = vector.broadcast %28 : vector<1x96xf32> to vector<16x96xf32>
    %30 = arith.addf %27, %29 : vector<16x96xf32>
    %31 = vector.extract_strided_slice %30 {offsets = [0, 0], sizes = [16, 32], strides = [1, 1]} : vector<16x96xf32> to vector<16x32xf32>
    %32 = vector.shape_cast %31 : vector<16x32xf32> to vector<2x8x4x8xf32>
    %33 = tpu.transpose %32, [0, 2, 1, 3] : vector<2x8x4x8xf32> -> vector<2x4x8x8xf32>
    %34 = vector.shape_cast %33 : vector<2x4x8x8xf32> to vector<8x8x8xf32>
    %35 = arith.truncf %34 : vector<8x8x8xf32> to vector<8x8x8xbf16>
    %36 = vector.extract_strided_slice %30 {offsets = [0, 32], sizes = [16, 32], strides = [1, 1]} : vector<16x96xf32> to vector<16x32xf32>
    %37 = vector.shape_cast %36 : vector<16x32xf32> to vector<2x8x4x8xf32>
    %38 = tpu.transpose %37, [0, 2, 1, 3] : vector<2x8x4x8xf32> -> vector<2x4x8x8xf32>
    %39 = vector.shape_cast %38 : vector<2x4x8x8xf32> to vector<8x8x8xf32>
    %40 = arith.truncf %39 : vector<8x8x8xf32> to vector<8x8x8xbf16>
    %41 = vector.extract_strided_slice %30 {offsets = [0, 64], sizes = [16, 32], strides = [1, 1]} : vector<16x96xf32> to vector<16x32xf32>
    %42 = vector.shape_cast %41 : vector<16x32xf32> to vector<2x8x4x8xf32>
    %43 = tpu.transpose %42, [0, 2, 1, 3] : vector<2x8x4x8xf32> -> vector<2x4x8x8xf32>
    %44 = vector.shape_cast %43 : vector<2x4x8x8xf32> to vector<8x8x8xf32>
    %45 = arith.truncf %44 : vector<8x8x8xf32> to vector<8x8x8xbf16>
    %cst_15 = arith.constant 0xFF800000 : f32
    %46 = vector.broadcast %cst_15 : f32 to vector<8x8x1xf32>
    %cst_16 = arith.constant 0.000000e+00 : f32
    %47 = vector.broadcast %cst_16 : f32 to vector<8x8x1xf32>
    %cst_17 = arith.constant 0.000000e+00 : f32
    %48 = vector.broadcast %cst_17 : f32 to vector<8x8x8xf32>
    "tpu.trace_start"() <{level = 10 : i32, message = "bld,bmd->blm"}> : () -> ()
    %cst_18 = arith.constant dense<0.000000e+00> : vector<8x8x8xf32>
    %49 = tpu.matmul %35, %40, %cst_18 {dimension_numbers = #tpu.dot_dimension_numbers<[2], [2], [1], [1], [0, 0, 0, 1, 1, 1], [0], [0]>} : vector<8x8x8xbf16>, vector<8x8x8xbf16>, vector<8x8x8xf32> -> vector<8x8x8xf32>
    "tpu.trace_stop"() : () -> ()
    %cst_19 = arith.constant dense<0xFF800000> : vector<8x8xf32>
    %50 = vector.multi_reduction <maximumf>, %49, %cst_19 [2] : vector<8x8x8xf32> to vector<8x8xf32>
    %51 = vector.shape_cast %50 : vector<8x8xf32> to vector<8x8x1xf32>
    %52 = arith.maximumf %46, %51 : vector<8x8x1xf32>
    %53 = arith.subf %46, %52 : vector<8x8x1xf32>
    %54 = math.exp %53 : vector<8x8x1xf32>
    %55 = vector.broadcast %52 : vector<8x8x1xf32> to vector<8x8x8xf32>
    %56 = arith.subf %49, %55 : vector<8x8x8xf32>
    %57 = math.exp %56 : vector<8x8x8xf32>
    %58 = arith.mulf %54, %47 : vector<8x8x1xf32>
    %cst_20 = arith.constant dense<0.000000e+00> : vector<8x8xf32>
    %59 = vector.multi_reduction <add>, %57, %cst_20 [2] : vector<8x8x8xf32> to vector<8x8xf32>
    %60 = vector.shape_cast %59 : vector<8x8xf32> to vector<8x8x1xf32>
    %61 = arith.addf %58, %60 : vector<8x8x1xf32>
    %62 = vector.broadcast %54 : vector<8x8x1xf32> to vector<8x8x8xf32>
    %63 = arith.mulf %62, %48 : vector<8x8x8xf32>
    %64 = arith.truncf %57 : vector<8x8x8xf32> to vector<8x8x8xbf16>
    "tpu.trace_start"() <{level = 10 : i32, message = "blm,bmd->bld"}> : () -> ()
    %cst_21 = arith.constant dense<0.000000e+00> : vector<8x8x8xf32>
    %65 = tpu.matmul %64, %45, %cst_21 {dimension_numbers = #tpu.dot_dimension_numbers<[2], [1], [1], [2], [0, 0, 0, 1, 1, 2], [0], [0]>} : vector<8x8x8xbf16>, vector<8x8x8xbf16>, vector<8x8x8xf32> -> vector<8x8x8xf32>
    "tpu.trace_stop"() : () -> ()
    %66 = arith.addf %63, %65 : vector<8x8x8xf32>
    %67 = tpu.reciprocal %61 {approx = true} : vector<8x8x1xf32> -> vector<8x8x1xf32>
    %68 = vector.broadcast %67 : vector<8x8x1xf32> to vector<8x8x8xf32>
    %69 = arith.mulf %66, %68 : vector<8x8x8xf32>
    %70 = vector.shape_cast %69 : vector<8x8x8xf32> to vector<2x4x8x8xf32>
    %71 = tpu.transpose %70, [0, 2, 1, 3] : vector<2x4x8x8xf32> -> vector<2x8x4x8xf32>
    %72 = vector.shape_cast %71 : vector<2x8x4x8xf32> to vector<16x32xf32>
    %73 = arith.truncf %72 : vector<16x32xf32> to vector<16x32xbf16>
    %c0_22 = arith.constant 0 : index
    %c0_23 = arith.constant 0 : index
    %74 = vector.load %arg6[%c0_22, %c0_23] : memref<32x32xbf16, #tpu.memory_space<vmem>>, vector<32x32xbf16>
    %cst_24 = arith.constant dense<0.000000e+00> : vector<16x32xf32>
    %75 = tpu.matmul %73, %74, %cst_24 {dimension_numbers = #tpu.dot_dimension_numbers<[1], [0], [0], [1], [0, 0, 1, 1], [], []>} : vector<16x32xbf16>, vector<32x32xbf16>, vector<16x32xf32> -> vector<16x32xf32>
    %c0_25 = arith.constant 0 : index
    %c0_26 = arith.constant 0 : index
    %76 = vector.load %arg7[%c0_25, %c0_26] : memref<1x32xf32, #tpu.memory_space<vmem>>, vector<1x32xf32>
    %77 = vector.broadcast %76 : vector<1x32xf32> to vector<16x32xf32>
    %78 = arith.addf %75, %77 : vector<16x32xf32>
    %79 = arith.addf %78, %4 : vector<16x32xf32>
    %cst_27 = arith.constant dense<0.000000e+00> : vector<16xf32>
    %80 = vector.multi_reduction <add>, %79, %cst_27 [1] : vector<16x32xf32> to vector<16xf32>
    %81 = vector.shape_cast %80 : vector<16xf32> to vector<16x1xf32>
    %cst_28 = arith.constant 3.200000e+01 : f32
    %82 = vector.broadcast %cst_28 : f32 to vector<16x1xf32>
    %83 = arith.divf %81, %82 : vector<16x1xf32>
    %84 = vector.broadcast %83 : vector<16x1xf32> to vector<16x32xf32>
    %85 = arith.subf %79, %84 : vector<16x32xf32>
    %86 = arith.mulf %85, %85 : vector<16x32xf32>
    %cst_29 = arith.constant dense<0.000000e+00> : vector<16xf32>
    %87 = vector.multi_reduction <add>, %86, %cst_29 [1] : vector<16x32xf32> to vector<16xf32>
    %88 = vector.shape_cast %87 : vector<16xf32> to vector<16x1xf32>
    %cst_30 = arith.constant 3.200000e+01 : f32
    %89 = vector.broadcast %cst_30 : f32 to vector<16x1xf32>
    %90 = arith.divf %88, %89 : vector<16x1xf32>
    %cst_31 = arith.constant 9.99999974E-6 : f32
    %91 = vector.broadcast %cst_31 : f32 to vector<16x1xf32>
    %92 = arith.addf %90, %91 : vector<16x1xf32>
    %93 = math.rsqrt %92 : vector<16x1xf32>
    %94 = vector.broadcast %93 : vector<16x1xf32> to vector<16x32xf32>
    %95 = arith.mulf %85, %94 : vector<16x32xf32>
    %96 = vector.broadcast %0 : vector<1x32xf32> to vector<16x32xf32>
    %97 = arith.mulf %95, %96 : vector<16x32xf32>
    %98 = vector.broadcast %1 : vector<1x32xf32> to vector<16x32xf32>
    %99 = arith.addf %97, %98 : vector<16x32xf32>
    %100 = arith.truncf %99 : vector<16x32xf32> to vector<16x32xbf16>
    %c0_32 = arith.constant 0 : index
    %c0_33 = arith.constant 0 : index
    %101 = vector.load %arg8[%c0_32, %c0_33] : memref<32x64xbf16, #tpu.memory_space<vmem>>, vector<32x64xbf16>
    %cst_34 = arith.constant dense<0.000000e+00> : vector<16x64xf32>
    %102 = tpu.matmul %100, %101, %cst_34 {dimension_numbers = #tpu.dot_dimension_numbers<[1], [0], [0], [1], [0, 0, 1, 1], [], []>} : vector<16x32xbf16>, vector<32x64xbf16>, vector<16x64xf32> -> vector<16x64xf32>
    %c0_35 = arith.constant 0 : index
    %c0_36 = arith.constant 0 : index
    %103 = vector.load %arg9[%c0_35, %c0_36] : memref<1x64xf32, #tpu.memory_space<vmem>>, vector<1x64xf32>
    %104 = vector.broadcast %103 : vector<1x64xf32> to vector<16x64xf32>
    %105 = arith.addf %102, %104 : vector<16x64xf32>
    %cst_37 = arith.constant 5.000000e-01 : f32
    %106 = vector.broadcast %cst_37 : f32 to vector<16x64xf32>
    %107 = arith.mulf %106, %105 : vector<16x64xf32>
    %cst_38 = arith.constant 2.000000e+00 : f32
    %108 = math.sqrt %cst_38 : f32
    %cst_39 = arith.constant 1.000000e+00 : f32
    %109 = arith.divf %cst_39, %108 : f32
    %110 = vector.broadcast %109 : f32 to vector<16x64xf32>
    %111 = arith.mulf %105, %110 : vector<16x64xf32>
    %112 = math.erf %111 : vector<16x64xf32>
    %cst_40 = arith.constant 1.000000e+00 : f32
    %113 = vector.broadcast %cst_40 : f32 to vector<16x64xf32>
    %114 = arith.addf %113, %112 : vector<16x64xf32>
    %115 = arith.mulf %107, %114 : vector<16x64xf32>
    %116 = arith.truncf %115 : vector<16x64xf32> to vector<16x64xbf16>
    %c0_41 = arith.constant 0 : index
    %c0_42 = arith.constant 0 : index
    %117 = vector.load %arg10[%c0_41, %c0_42] : memref<64x32xbf16, #tpu.memory_space<vmem>>, vector<64x32xbf16>
    %cst_43 = arith.constant dense<0.000000e+00> : vector<16x32xf32>
    %118 = tpu.matmul %116, %117, %cst_43 {dimension_numbers = #tpu.dot_dimension_numbers<[1], [0], [0], [1], [0, 0, 1, 1], [], []>} : vector<16x64xbf16>, vector<64x32xbf16>, vector<16x32xf32> -> vector<16x32xf32>
    %c0_44 = arith.constant 0 : index
    %c0_45 = arith.constant 0 : index
    %119 = vector.load %arg11[%c0_44, %c0_45] : memref<1x32xf32, #tpu.memory_space<vmem>>, vector<1x32xf32>
    %120 = vector.broadcast %119 : vector<1x32xf32> to vector<16x32xf32>
    %121 = arith.addf %118, %120 : vector<16x32xf32>
    %cst_46 = arith.constant 5.000000e-01 : f32
    %122 = vector.broadcast %cst_46 : f32 to vector<16x32xf32>
    %123 = arith.mulf %122, %121 : vector<16x32xf32>
    %cst_47 = arith.constant 2.000000e+00 : f32
    %124 = math.sqrt %cst_47 : f32
    %cst_48 = arith.constant 1.000000e+00 : f32
    %125 = arith.divf %cst_48, %124 : f32
    %126 = vector.broadcast %125 : f32 to vector<16x32xf32>
    %127 = arith.mulf %121, %126 : vector<16x32xf32>
    %128 = math.erf %127 : vector<16x32xf32>
    %cst_49 = arith.constant 1.000000e+00 : f32
    %129 = vector.broadcast %cst_49 : f32 to vector<16x32xf32>
    %130 = arith.addf %129, %128 : vector<16x32xf32>
    %131 = arith.mulf %123, %130 : vector<16x32xf32>
    %132 = arith.addf %131, %79 : vector<16x32xf32>
    %133 = vector.shape_cast %132 : vector<16x32xf32> to vector<2x8x32xf32>
    %134 = tpu.transpose %133, [1, 0, 2] : vector<2x8x32xf32> -> vector<8x2x32xf32>
    %c0_50 = arith.constant 0 : index
    %c0_51 = arith.constant 0 : index
    %c0_52 = arith.constant 0 : index
    %135 = vector.load %arg12[%c0_50, %c0_51, %c0_52] : memref<8x2x32xf32, #tpu.memory_space<vmem>>, vector<8x2x32xf32>
    tpu.vector_store %arg12[%c0_50, %c0_51, %c0_52], %134 {strides = array<i32>} : memref<8x2x32xf32, #tpu.memory_space<vmem>>, vector<8x2x32xf32>,
    return
  }
  func.func @transform_0(%arg0: i32) -> (i32, i32, i32) {
    %c0_i32 = arith.constant 0 : i32
    %c0_i32_0 = arith.constant 0 : i32
    %c0_i32_1 = arith.constant 0 : i32
    return %c0_i32, %arg0, %c0_i32_0 : i32, i32, i32
  }
  func.func @transform_1(%arg0: i32) -> (i32, i32) {
    %c0_i32 = arith.constant 0 : i32
    %c0_i32_0 = arith.constant 0 : i32
    %c0_i32_1 = arith.constant 0 : i32
    return %c0_i32, %c0_i32_0 : i32, i32
  }
  func.func @transform_2(%arg0: i32) -> (i32, i32) {
    %c0_i32 = arith.constant 0 : i32
    %c0_i32_0 = arith.constant 0 : i32
    %c0_i32_1 = arith.constant 0 : i32
    return %c0_i32, %c0_i32_0 : i32, i32
  }
  func.func @transform_3(%arg0: i32) -> (i32, i32) {
    %c0_i32 = arith.constant 0 : i32
    %c0_i32_0 = arith.constant 0 : i32
    %c0_i32_1 = arith.constant 0 : i32
    return %c0_i32, %c0_i32_0 : i32, i32
  }
  func.func @transform_4(%arg0: i32) -> (i32, i32) {
    %c0_i32 = arith.constant 0 : i32
    %c0_i32_0 = arith.constant 0 : i32
    %c0_i32_1 = arith.constant 0 : i32
    return %c0_i32, %c0_i32_0 : i32, i32
  }
  func.func @transform_5(%arg0: i32) -> (i32, i32) {
    %c0_i32 = arith.constant 0 : i32
    %c0_i32_0 = arith.constant 0 : i32
    %c0_i32_1 = arith.constant 0 : i32
    return %c0_i32, %c0_i32_0 : i32, i32
  }
  func.func @transform_6(%arg0: i32) -> (i32, i32) {
    %c0_i32 = arith.constant 0 : i32
    %c0_i32_0 = arith.constant 0 : i32
    %c0_i32_1 = arith.constant 0 : i32
    return %c0_i32, %c0_i32_0 : i32, i32
  }
  func.func @transform_7(%arg0: i32) -> (i32, i32) {
    %c0_i32 = arith.constant 0 : i32
    %c0_i32_0 = arith.constant 0 : i32
    %c0_i32_1 = arith.constant 0 : i32
    return %c0_i32, %c0_i32_0 : i32, i32
  }
  func.func @transform_8(%arg0: i32) -> (i32, i32) {
    %c0_i32 = arith.constant 0 : i32
    %c0_i32_0 = arith.constant 0 : i32
    %c0_i32_1 = arith.constant 0 : i32
    return %c0_i32, %c0_i32_0 : i32, i32
  }
  func.func @transform_9(%arg0: i32) -> (i32, i32) {
    %c0_i32 = arith.constant 0 : i32
    %c0_i32_0 = arith.constant 0 : i32
    %c0_i32_1 = arith.constant 0 : i32
    return %c0_i32, %c0_i32_0 : i32, i32
  }
  func.func @transform_10(%arg0: i32) -> (i32, i32) {
    %c0_i32 = arith.constant 0 : i32
    %c0_i32_0 = arith.constant 0 : i32
    %c0_i32_1 = arith.constant 0 : i32
    return %c0_i32, %c0_i32_0 : i32, i32
  }
  func.func @transform_11(%arg0: i32) -> (i32, i32, i32) {
    %c0_i32 = arith.constant 0 : i32
    %c0_i32_0 = arith.constant 0 : i32
    %c0_i32_1 = arith.constant 0 : i32
    return %c0_i32, %arg0, %c0_i32_0 : i32, i32, i32
  }
}

module attributes {stable_mosaic.version = 11 : i64} {
  func.func @encoder_block_kernel(%arg0: i32, %arg1: memref<8x2x32xf32, #tpu.memory_space<vmem>>, %arg2: memref<1x32xf32, #tpu.memory_space<vmem>>, %arg3: memref<1x32xf32, #tpu.memory_space<vmem>>, %arg4: memref<32x96xbf16, #tpu.memory_space<vmem>>, %arg5: memref<1x96xf32, #tpu.memory_space<vmem>>, %arg6: memref<32x32xbf16, #tpu.memory_space<vmem>>, %arg7: memref<1x32xf32, #tpu.memory_space<vmem>>, %arg8: memref<32x64xbf16, #tpu.memory_space<vmem>>, %arg9: memref<1x64xf32, #tpu.memory_space<vmem>>, %arg10: memref<64x32xbf16, #tpu.memory_space<vmem>>, %arg11: memref<1x32xf32, #tpu.memory_space<vmem>>, %arg12: memref<8x2x32xf32, #tpu.memory_space<vmem>>) attributes {dimension_semantics = [#tpu.dimension_semantics<parallel>], iteration_bounds = array<i64: 1>, scalar_prefetch = 0 : i64, scratch_operands = 0 : i64, tpu.core_type = #tpu.core_type<tc>, window_params = [{transform_indices = @transform_0, window_bounds = array<i64: 8, 2, 32>}, {pipeline_mode = #tpu.pipeline_mode<synchronous>, transform_indices = @transform_1, window_bounds = array<i64: 1, 32>}, {pipeline_mode = #tpu.pipeline_mode<synchronous>, transform_indices = @transform_2, window_bounds = array<i64: 1, 32>}, {pipeline_mode = #tpu.pipeline_mode<synchronous>, transform_indices = @transform_3, window_bounds = array<i64: 32, 96>}, {pipeline_mode = #tpu.pipeline_mode<synchronous>, transform_indices = @transform_4, window_bounds = array<i64: 1, 96>}, {pipeline_mode = #tpu.pipeline_mode<synchronous>, transform_indices = @transform_5, window_bounds = array<i64: 32, 32>}, {pipeline_mode = #tpu.pipeline_mode<synchronous>, transform_indices = @transform_6, window_bounds = array<i64: 1, 32>}, {pipeline_mode = #tpu.pipeline_mode<synchronous>, transform_indices = @transform_7, window_bounds = array<i64: 32, 64>}, {pipeline_mode = #tpu.pipeline_mode<synchronous>, transform_indices = @transform_8, window_bounds = array<i64: 1, 64>}, {pipeline_mode = #tpu.pipeline_mode<synchronous>, transform_indices = @transform_9, window_bounds = array<i64: 64, 32>}, {pipeline_mode = #tpu.pipeline_mode<synchronous>, transform_indices = @transform_10, window_bounds = array<i64: 1, 32>}, {transform_indices = @transform_11, window_bounds = array<i64: 8, 2, 32>}]} {
    %c0 = arith.constant 0 : index
    %c0_0 = arith.constant 0 : index
    %0 = vector.load %arg2[%c0, %c0_0] : memref<1x32xf32, #tpu.memory_space<vmem>>, vector<1x32xf32>
    %c0_1 = arith.constant 0 : index
    %c0_2 = arith.constant 0 : index
    %1 = vector.load %arg3[%c0_1, %c0_2] : memref<1x32xf32, #tpu.memory_space<vmem>>, vector<1x32xf32>
    %c0_3 = arith.constant 0 : index
    %c0_4 = arith.constant 0 : index
    %c0_5 = arith.constant 0 : index
    %2 = vector.load %arg1[%c0_3, %c0_4, %c0_5] : memref<8x2x32xf32, #tpu.memory_space<vmem>>, vector<8x2x32xf32>
    %3 = tpu.transpose %2, [1, 0, 2] : vector<8x2x32xf32> -> vector<2x8x32xf32>
    %4 = vector.shape_cast %3 : vector<2x8x32xf32> to vector<16x32xf32>
    %cst = arith.constant dense<0.000000e+00> : vector<16xf32>
    %5 = vector.multi_reduction <add>, %4, %cst [1] : vector<16x32xf32> to vector<16xf32>
    %6 = vector.shape_cast %5 : vector<16xf32> to vector<16x1xf32>
    %cst_6 = arith.constant 3.200000e+01 : f32
    %7 = vector.broadcast %cst_6 : f32 to vector<16x1xf32>
    %8 = arith.divf %6, %7 : vector<16x1xf32>
    %9 = vector.broadcast %8 : vector<16x1xf32> to vector<16x32xf32>
    %10 = arith.subf %4, %9 : vector<16x32xf32>
    %11 = arith.mulf %10, %10 : vector<16x32xf32>
    %cst_7 = arith.constant dense<0.000000e+00> : vector<16xf32>
    %12 = vector.multi_reduction <add>, %11, %cst_7 [1] : vector<16x32xf32> to vector<16xf32>
    %13 = vector.shape_cast %12 : vector<16xf32> to vector<16x1xf32>
    %cst_8 = arith.constant 3.200000e+01 : f32
    %14 = vector.broadcast %cst_8 : f32 to vector<16x1xf32>
    %15 = arith.divf %13, %14 : vector<16x1xf32>
    %cst_9 = arith.constant 9.99999974E-6 : f32
    %16 = vector.broadcast %cst_9 : f32 to vector<16x1xf32>
    %17 = arith.addf %15, %16 : vector<16x1xf32>
    %18 = math.rsqrt %17 : vector<16x1xf32>
    %19 = vector.broadcast %18 : vector<16x1xf32> to vector<16x32xf32>
    %20 = arith.mulf %10, %19 : vector<16x32xf32>
    %21 = vector.broadcast %0 : vector<1x32xf32> to vector<16x32xf32>
    %22 = arith.mulf %20, %21 : vector<16x32xf32>
    %23 = vector.broadcast %1 : vector<1x32xf32> to vector<16x32xf32>
    %24 = arith.addf %22, %23 : vector<16x32xf32>
    %25 = arith.truncf %24 : vector<16x32xf32> to vector<16x32xbf16>
    %c0_10 = arith.constant 0 : index
    %c0_11 = arith.constant 0 : index
    %26 = vector.load %arg4[%c0_10, %c0_11] : memref<32x96xbf16, #tpu.memory_space<vmem>>, vector<32x96xbf16>
    %cst_12 = arith.constant dense<0.000000e+00> : vector<16x96xf32>
    %27 = tpu.matmul %25, %26, %cst_12 {dimension_numbers = #tpu.dot_dimension_numbers<[1], [0], [0], [1], [0, 0, 1, 1], [], []>} : vector<16x32xbf16>, vector<32x96xbf16>, vector<16x96xf32> -> vector<16x96xf32>
    %c0_13 = arith.constant 0 : index
    %c0_14 = arith.constant 0 : index
    %28 = vector.load %arg5[%c0_13, %c0_14] : memref<1x96xf32, #tpu.memory_space<vmem>>, vector<1x96xf32>
    %29 = vector.broadcast %28 : vector<1x96xf32> to vector<16x96xf32>
    %30 = arith.addf %27, %29 : vector<16x96xf32>
    %31 = vector.extract_strided_slice %30 {offsets = [0, 0], sizes = [16, 32], strides = [1, 1]} : vector<16x96xf32> to vector<16x32xf32>
    %32 = vector.shape_cast %31 : vector<16x32xf32> to vector<2x8x4x8xf32>
    %33 = tpu.transpose %32, [0, 2, 1, 3] : vector<2x8x4x8xf32> -> vector<2x4x8x8xf32>
    %34 = vector.shape_cast %33 : vector<2x4x8x8xf32> to vector<8x8x8xf32>
    %35 = arith.truncf %34 : vector<8x8x8xf32> to vector<8x8x8xbf16>
    %36 = vector.extract_strided_slice %30 {offsets = [0, 32], sizes = [16, 32], strides = [1, 1]} : vector<16x96xf32> to vector<16x32xf32>
    %37 = vector.shape_cast %36 : vector<16x32xf32> to vector<2x8x4x8xf32>
    %38 = tpu.transpose %37, [0, 2, 1, 3] : vector<2x8x4x8xf32> -> vector<2x4x8x8xf32>
    %39 = vector.shape_cast %38 : vector<2x4x8x8xf32> to vector<8x8x8xf32>
    %40 = arith.truncf %39 : vector<8x8x8xf32> to vector<8x8x8xbf16>
    %41 = vector.extract_strided_slice %30 {offsets = [0, 64], sizes = [16, 32], strides = [1, 1]} : vector<16x96xf32> to vector<16x32xf32>
    %42 = vector.shape_cast %41 : vector<16x32xf32> to vector<2x8x4x8xf32>
    %43 = tpu.transpose %42, [0, 2, 1, 3] : vector<2x8x4x8xf32> -> vector<2x4x8x8xf32>
    %44 = vector.shape_cast %43 : vector<2x4x8x8xf32> to vector<8x8x8xf32>
    %45 = arith.truncf %44 : vector<8x8x8xf32> to vector<8x8x8xbf16>
    %cst_15 = arith.constant 0xFF800000 : f32
    %46 = vector.broadcast %cst_15 : f32 to vector<8x8x1xf32>
    %cst_16 = arith.constant 0.000000e+00 : f32
    %47 = vector.broadcast %cst_16 : f32 to vector<8x8x1xf32>
    %cst_17 = arith.constant 0.000000e+00 : f32
    %48 = vector.broadcast %cst_17 : f32 to vector<8x8x8xf32>
    "tpu.trace_start"() <{level = 10 : i32, message = "bld,bmd->blm"}> : () -> ()
    %cst_18 = arith.constant dense<0.000000e+00> : vector<8x8x8xf32>
    %49 = tpu.matmul %35, %40, %cst_18 {dimension_numbers = #tpu.dot_dimension_numbers<[2], [2], [1], [1], [0, 0, 0, 1, 1, 1], [0], [0]>} : vector<8x8x8xbf16>, vector<8x8x8xbf16>, vector<8x8x8xf32> -> vector<8x8x8xf32>
    "tpu.trace_stop"() : () -> ()
    %cst_19 = arith.constant dense<0xFF800000> : vector<8x8xf32>
    %50 = vector.multi_reduction <maximumf>, %49, %cst_19 [2] : vector<8x8x8xf32> to vector<8x8xf32>
    %51 = vector.shape_cast %50 : vector<8x8xf32> to vector<8x8x1xf32>
    %52 = arith.maximumf %46, %51 : vector<8x8x1xf32>
    %53 = arith.subf %46, %52 : vector<8x8x1xf32>
    %54 = math.exp %53 : vector<8x8x1xf32>
    %55 = vector.broadcast %52 : vector<8x8x1xf32> to vector<8x8x8xf32>
    %56 = arith.subf %49, %55 : vector<8x8x8xf32>
    %57 = math.exp %56 : vector<8x8x8xf32>
    %58 = arith.mulf %54, %47 : vector<8x8x1xf32>
    %cst_20 = arith.constant dense<0.000000e+00> : vector<8x8xf32>
    %59 = vector.multi_reduction <add>, %57, %cst_20 [2] : vector<8x8x8xf32> to vector<8x8xf32>
    %60 = vector.shape_cast %59 : vector<8x8xf32> to vector<8x8x1xf32>
    %61 = arith.addf %58, %60 : vector<8x8x1xf32>
    %62 = vector.broadcast %54 : vector<8x8x1xf32> to vector<8x8x8xf32>
    %63 = arith.mulf %62, %48 : vector<8x8x8xf32>
    %64 = arith.truncf %57 : vector<8x8x8xf32> to vector<8x8x8xbf16>
    "tpu.trace_start"() <{level = 10 : i32, message = "blm,bmd->bld"}> : () -> ()
    %cst_21 = arith.constant dense<0.000000e+00> : vector<8x8x8xf32>
    %65 = tpu.matmul %64, %45, %cst_21 {dimension_numbers = #tpu.dot_dimension_numbers<[2], [1], [1], [2], [0, 0, 0, 1, 1, 2], [0], [0]>} : vector<8x8x8xbf16>, vector<8x8x8xbf16>, vector<8x8x8xf32> -> vector<8x8x8xf32>
    "tpu.trace_stop"() : () -> ()
    %66 = arith.addf %63, %65 : vector<8x8x8xf32>
    %67 = tpu.reciprocal %61 {approx = true} : vector<8x8x1xf32> -> vector<8x8x1xf32>
    %68 = vector.broadcast %67 : vector<8x8x1xf32> to vector<8x8x8xf32>
    %69 = arith.mulf %66, %68 : vector<8x8x8xf32>
    %70 = vector.shape_cast %69 : vector<8x8x8xf32> to vector<2x4x8x8xf32>
    %71 = tpu.transpose %70, [0, 2, 1, 3] : vector<2x4x8x8xf32> -> vector<2x8x4x8xf32>
    %72 = vector.shape_cast %71 : vector<2x8x4x8xf32> to vector<16x32xf32>
    %73 = arith.truncf %72 : vector<16x32xf32> to vector<16x32xbf16>
    %c0_22 = arith.constant 0 : index
    %c0_23 = arith.constant 0 : index
    %74 = vector.load %arg6[%c0_22, %c0_23] : memref<32x32xbf16, #tpu.memory_space<vmem>>, vector<32x32xbf16>
    %cst_24 = arith.constant dense<0.000000e+00> : vector<16x32xf32>
    %75 = tpu.matmul %73, %74, %cst_24 {dimension_numbers = #tpu.dot_dimension_numbers<[1], [0], [0], [1], [0, 0, 1, 1], [], []>} : vector<16x32xbf16>, vector<32x32xbf16>, vector<16x32xf32> -> vector<16x32xf32>
    %c0_25 = arith.constant 0 : index
    %c0_26 = arith.constant 0 : index
    %76 = vector.load %arg7[%c0_25, %c0_26] : memref<1x32xf32, #tpu.memory_space<vmem>>, vector<1x32xf32>
    %77 = vector.broadcast %76 : vector<1x32xf32> to vector<16x32xf32>
    %78 = arith.addf %75, %77 : vector<16x32xf32>
    %79 = arith.addf %78, %4 : vector<16x32xf32>
    %cst_27 = arith.constant dense<0.000000e+00> : vector<16xf32>
    %80 = vector.multi_reduction <add>, %79, %cst_27 [1] : vector<16x32xf32> to vector<16xf32>
    %81 = vector.shape_cast %80 : vector<16xf32> to vector<16x1xf32>
    %cst_28 = arith.constant 3.200000e+01 : f32
    %82 = vector.broadcast %cst_28 : f32 to vector<16x1xf32>
    %83 = arith.divf %81, %82 : vector<16x1xf32>
    %84 = vector.broadcast %83 : vector<16x1xf32> to vector<16x32xf32>
    %85 = arith.subf %79, %84 : vector<16x32xf32>
    %86 = arith.mulf %85, %85 : vector<16x32xf32>
    %cst_29 = arith.constant dense<0.000000e+00> : vector<16xf32>
    %87 = vector.multi_reduction <add>, %86, %cst_29 [1] : vector<16x32xf32> to vector<16xf32>
    %88 = vector.shape_cast %87 : vector<16xf32> to vector<16x1xf32>
    %cst_30 = arith.constant 3.200000e+01 : f32
    %89 = vector.broadcast %cst_30 : f32 to vector<16x1xf32>
    %90 = arith.divf %88, %89 : vector<16x1xf32>
    %cst_31 = arith.constant 9.99999974E-6 : f32
    %91 = vector.broadcast %cst_31 : f32 to vector<16x1xf32>
    %92 = arith.addf %90, %91 : vector<16x1xf32>
    %93 = math.rsqrt %92 : vector<16x1xf32>
    %94 = vector.broadcast %93 : vector<16x1xf32> to vector<16x32xf32>
    %95 = arith.mulf %85, %94 : vector<16x32xf32>
    %96 = vector.broadcast %0 : vector<1x32xf32> to vector<16x32xf32>
    %97 = arith.mulf %95, %96 : vector<16x32xf32>
    %98 = vector.broadcast %1 : vector<1x32xf32> to vector<16x32xf32>
    %99 = arith.addf %97, %98 : vector<16x32xf32>
    %100 = arith.truncf %99 : vector<16x32xf32> to vector<16x32xbf16>
    %c0_32 = arith.constant 0 : index
    %c0_33 = arith.constant 0 : index
    %101 = vector.load %arg8[%c0_32, %c0_33] : memref<32x64xbf16, #tpu.memory_space<vmem>>, vector<32x64xbf16>
    %cst_34 = arith.constant dense<0.000000e+00> : vector<16x64xf32>
    %102 = tpu.matmul %100, %101, %cst_34 {dimension_numbers = #tpu.dot_dimension_numbers<[1], [0], [0], [1], [0, 0, 1, 1], [], []>} : vector<16x32xbf16>, vector<32x64xbf16>, vector<16x64xf32> -> vector<16x64xf32>
    %c0_35 = arith.constant 0 : index
    %c0_36 = arith.constant 0 : index
    %103 = vector.load %arg9[%c0_35, %c0_36] : memref<1x64xf32, #tpu.memory_space<vmem>>, vector<1x64xf32>
    %104 = vector.broadcast %103 : vector<1x64xf32> to vector<16x64xf32>
    %105 = arith.addf %102, %104 : vector<16x64xf32>
    %cst_37 = arith.constant 5.000000e-01 : f32
    %106 = vector.broadcast %cst_37 : f32 to vector<16x64xf32>
    %107 = arith.mulf %106, %105 : vector<16x64xf32>
    %cst_38 = arith.constant 2.000000e+00 : f32
    %108 = math.sqrt %cst_38 : f32
    %cst_39 = arith.constant 1.000000e+00 : f32
    %109 = arith.divf %cst_39, %108 : f32
    %110 = vector.broadcast %109 : f32 to vector<16x64xf32>
    %111 = arith.mulf %105, %110 : vector<16x64xf32>
    %112 = math.erf %111 : vector<16x64xf32>
    %cst_40 = arith.constant 1.000000e+00 : f32
    %113 = vector.broadcast %cst_40 : f32 to vector<16x64xf32>
    %114 = arith.addf %113, %112 : vector<16x64xf32>
    %115 = arith.mulf %107, %114 : vector<16x64xf32>
    %116 = arith.truncf %115 : vector<16x64xf32> to vector<16x64xbf16>
    %c0_41 = arith.constant 0 : index
    %c0_42 = arith.constant 0 : index
    %117 = vector.load %arg10[%c0_41, %c0_42] : memref<64x32xbf16, #tpu.memory_space<vmem>>, vector<64x32xbf16>
    %cst_43 = arith.constant dense<0.000000e+00> : vector<16x32xf32>
    %118 = tpu.matmul %116, %117, %cst_43 {dimension_numbers = #tpu.dot_dimension_numbers<[1], [0], [0], [1], [0, 0, 1, 1], [], []>} : vector<16x64xbf16>, vector<64x32xbf16>, vector<16x32xf32> -> vector<16x32xf32>
    %c0_44 = arith.constant 0 : index
    %c0_45 = arith.constant 0 : index
    %119 = vector.load %arg11[%c0_44, %c0_45] : memref<1x32xf32, #tpu.memory_space<vmem>>, vector<1x32xf32>
    %120 = vector.broadcast %119 : vector<1x32xf32> to vector<16x32xf32>
    %121 = arith.addf %118, %120 : vector<16x32xf32>
    %cst_46 = arith.constant 5.000000e-01 : f32
    %122 = vector.broadcast %cst_46 : f32 to vector<16x32xf32>
    %123 = arith.mulf %122, %121 : vector<16x32xf32>
    %cst_47 = arith.constant 2.000000e+00 : f32
    %124 = math.sqrt %cst_47 : f32
    %cst_48 = arith.constant 1.000000e+00 : f32
    %125 = arith.divf %cst_48, %124 : f32
    %126 = vector.broadcast %125 : f32 to vector<16x32xf32>
    %127 = arith.mulf %121, %126 : vector<16x32xf32>
    %128 = math.erf %127 : vector<16x32xf32>
    %cst_49 = arith.constant 1.000000e+00 : f32
    %129 = vector.broadcast %cst_49 : f32 to vector<16x32xf32>
    %130 = arith.addf %129, %128 : vector<16x32xf32>
    %131 = arith.mulf %123, %130 : vector<16x32xf32>
    %132 = arith.addf %131, %79 : vector<16x32xf32>
    %133 = vector.shape_cast %132 : vector<16x32xf32> to vector<2x8x32xf32>
    %134 = tpu.transpose %133, [1, 0, 2] : vector<2x8x32xf32> -> vector<8x2x32xf32>
    %c0_50 = arith.constant 0 : index
    %c0_51 = arith.constant 0 : index
    %c0_52 = arith.constant 0 : index
    %135 = vector.load %arg12[%c0_50, %c0_51, %c0_52] : memref<8x2x32xf32, #tpu.memory_space<vmem>>, vector<8x2x32xf32>
    tpu.vector_store %arg12[%c0_50, %c0_51, %c0_52], %134 {strides = array<i32>} : memref<8x2x32xf32, #tpu.memory_space<vmem>>, vector<8x2x32xf32>,
    return
  }
  func.func @transform_0(%arg0: i32) -> (i32, i32, i32) {
    %c0_i32 = arith.constant 0 : i32
    %c0_i32_0 = arith.constant 0 : i32
    %c0_i32_1 = arith.constant 0 : i32
    return %c0_i32, %arg0, %c0_i32_0 : i32, i32, i32
  }
  func.func @transform_1(%arg0: i32) -> (i32, i32) {
    %c0_i32 = arith.constant 0 : i32
    %c0_i32_0 = arith.constant 0 : i32
    %c0_i32_1 = arith.constant 0 : i32
    return %c0_i32, %c0_i32_0 : i32, i32
  }
  func.func @transform_2(%arg0: i32) -> (i32, i32) {
    %c0_i32 = arith.constant 0 : i32
    %c0_i32_0 = arith.constant 0 : i32
    %c0_i32_1 = arith.constant 0 : i32
    return %c0_i32, %c0_i32_0 : i32, i32
  }
  func.func @transform_3(%arg0: i32) -> (i32, i32) {
    %c0_i32 = arith.constant 0 : i32
    %c0_i32_0 = arith.constant 0 : i32
    %c0_i32_1 = arith.constant 0 : i32
    return %c0_i32, %c0_i32_0 : i32, i32
  }
  func.func @transform_4(%arg0: i32) -> (i32, i32) {
    %c0_i32 = arith.constant 0 : i32
    %c0_i32_0 = arith.constant 0 : i32
    %c0_i32_1 = arith.constant 0 : i32
    return %c0_i32, %c0_i32_0 : i32, i32
  }
  func.func @transform_5(%arg0: i32) -> (i32, i32) {
    %c0_i32 = arith.constant 0 : i32
    %c0_i32_0 = arith.constant 0 : i32
    %c0_i32_1 = arith.constant 0 : i32
    return %c0_i32, %c0_i32_0 : i32, i32
  }
  func.func @transform_6(%arg0: i32) -> (i32, i32) {
    %c0_i32 = arith.constant 0 : i32
    %c0_i32_0 = arith.constant 0 : i32
    %c0_i32_1 = arith.constant 0 : i32
    return %c0_i32, %c0_i32_0 : i32, i32
  }
  func.func @transform_7(%arg0: i32) -> (i32, i32) {
    %c0_i32 = arith.constant 0 : i32
    %c0_i32_0 = arith.constant 0 : i32
    %c0_i32_1 = arith.constant 0 : i32
    return %c0_i32, %c0_i32_0 : i32, i32
  }
  func.func @transform_8(%arg0: i32) -> (i32, i32) {
    %c0_i32 = arith.constant 0 : i32
    %c0_i32_0 = arith.constant 0 : i32
    %c0_i32_1 = arith.constant 0 : i32
    return %c0_i32, %c0_i32_0 : i32, i32
  }
  func.func @transform_9(%arg0: i32) -> (i32, i32) {
    %c0_i32 = arith.constant 0 : i32
    %c0_i32_0 = arith.constant 0 : i32
    %c0_i32_1 = arith.constant 0 : i32
    return %c0_i32, %c0_i32_0 : i32, i32
  }
  func.func @transform_10(%arg0: i32) -> (i32, i32) {
    %c0_i32 = arith.constant 0 : i32
    %c0_i32_0 = arith.constant 0 : i32
    %c0_i32_1 = arith.constant 0 : i32
    return %c0_i32, %c0_i32_0 : i32, i32
  }
  func.func @transform_11(%arg0: i32) -> (i32, i32, i32) {
    %c0_i32 = arith.constant 0 : i32
    %c0_i32_0 = arith.constant 0 : i32
    %c0_i32_1 = arith.constant 0 : i32
    return %c0_i32, %arg0, %c0_i32_0 : i32, i32, i32
  }
}

</mosaic_0001>

<llo_original>
// kernel: tpu_custom_call.1
$region0: #{tpu_custom_call.1}
  #allocation0 [shape = 'u32[]', space=smem, size = 0x4, offset = 0x4, fixed_abs, tag = 'smem constant byte address 0x4 - core index']
  #allocation1 [shape = 'u32[144,128]{1,0:T(1,128)}', space=vmem, size = 0x12000, scoped, tag = 'internal scratch']
  %s0 = inlined_call_operand.vmem [shape: f32[8,2,32], index: 0, kind: input, shape index: {}]
  %s1 = inlined_call_operand.vmem [shape: f32[1,32], index: 1, kind: input, shape index: {}]
  %s2 = inlined_call_operand.vmem [shape: f32[1,32], index: 2, kind: input, shape index: {}]
  %s3 = inlined_call_operand.vmem [shape: bf16[32,96], index: 3, kind: input, shape index: {}]
  %s4 = inlined_call_operand.vmem [shape: f32[1,96], index: 4, kind: input, shape index: {}]
  %s5 = inlined_call_operand.vmem [shape: bf16[32,32], index: 5, kind: input, shape index: {}]
  %s6 = inlined_call_operand.vmem [shape: f32[1,32], index: 6, kind: input, shape index: {}]
  %s7 = inlined_call_operand.hbm [shape: bf16[32,64], index: 7, kind: input, shape index: {}]
  %s8 = inlined_call_operand.vmem [shape: f32[1,64], index: 8, kind: input, shape index: {}]
  %s9 = inlined_call_operand.vmem [shape: bf16[64,32], index: 9, kind: input, shape index: {}]
  %s10 = inlined_call_operand.vmem [shape: f32[1,32], index: 10, kind: input, shape index: {}]
  %s11 = inlined_call_operand.hbm [shape: f32[8,2,32], index: 11, kind: output, shape index: {}]
  %s12 = sld [smem:[#allocation0]]
  $region58: #{tpu_custom_call.1} parent=0
    _
  %s14 = ssub.s32 1, %s12
  %s15 = scalar_select 0, %s14, %s12
  $region1: #{tpu_custom_call.1} parent=0
    #allocation2 [shape = 'u8[8192]{0}', space=vmem, size = 0x2000, scoped, tag = 'input window, operand 7, single buffered']
    #allocation3 [shape = 's32[1]{0}', space=sflag, size = 0x4, scoped, tag = 'scoped memory for tpu_custom_call.1']
    #allocation4 [shape = 's32[1]{0}', space=sflag, size = 0x4, scoped, tag = 'scoped memory for tpu_custom_call.1']
    #allocation5 [shape = 'u8[8192]{0}', space=vmem, size = 0x2000, scoped, tag = 'output window, operand 0, single buffered']
    %16 = vsyncpa [#allocation3], 0
    %17 = vsyncpa [#allocation4], 0
    // Predicated region
    $region2: #{tpu_custom_call.1} parent=1 // pred_check
      _
    $region3: #{tpu_custom_call.1} parent=1 // pred_check_branch
      %19 = sbr.rel (0) target = $region5
    $region4: #{tpu_custom_call.1} parent=1 // pred_region
      _
    $region5: #{tpu_custom_call.1} parent=1 // pred_fallthru
      _
    // Predicated region
    $region6: #{tpu_custom_call.1} parent=1 // pred_check
      _
    $region7: #{tpu_custom_call.1} parent=1 // pred_check_branch
      %21 = sbr.rel (0) target = $region9
    $region8: #{tpu_custom_call.1} parent=1 // pred_region
      _
    $region9: #{tpu_custom_call.1} parent=1 // pred_fallthru
      _
    // Predicated region
    $region10: #{tpu_custom_call.1} parent=1 // pred_check
      _
    $region11: #{tpu_custom_call.1} parent=1 // pred_check_branch
      %23 = sbr.rel (0) target = $region13
    $region12: #{tpu_custom_call.1} parent=1 // pred_region
      _
    $region13: #{tpu_custom_call.1} parent=1 // pred_fallthru
      _
    // Predicated region
    $region14: #{tpu_custom_call.1} parent=1 // pred_check
      _
    $region15: #{tpu_custom_call.1} parent=1 // pred_check_branch
      %25 = sbr.rel (0) target = $region17
    $region16: #{tpu_custom_call.1} parent=1 // pred_region
      _
    $region17: #{tpu_custom_call.1} parent=1 // pred_fallthru
      _
    // Predicated region
    $region18: #{tpu_custom_call.1} parent=1 // pred_check
      _
    $region19: #{tpu_custom_call.1} parent=1 // pred_check_branch
      %27 = sbr.rel (0) target = $region21
    $region20: #{tpu_custom_call.1} parent=1 // pred_region
      _
    $region21: #{tpu_custom_call.1} parent=1 // pred_fallthru
      _
    // Predicated region
    $region22: #{tpu_custom_call.1} parent=1 // pred_check
      _
    $region23: #{tpu_custom_call.1} parent=1 // pred_check_branch
      %29 = sbr.rel (0) target = $region25
    $region24: #{tpu_custom_call.1} parent=1 // pred_region
      _
    $region25: #{tpu_custom_call.1} parent=1 // pred_fallthru
      _
    // Predicated region
    $region26: #{tpu_custom_call.1} parent=1 // pred_check
      _
    $region27: #{tpu_custom_call.1} parent=1 // pred_check_branch
      %31 = sbr.rel (0) target = $region29
    $region28: #{tpu_custom_call.1} parent=1 // pred_region
      _
    $region29: #{tpu_custom_call.1} parent=1 // pred_fallthru
      _
    // Predicated region
    $region30: #{tpu_custom_call.1} parent=1 // pred_check
      _
    $region31: #{tpu_custom_call.1} parent=1 // pred_check_branch
      %33 = sbr.rel (0) target = $region33
    $region32: #{tpu_custom_call.1} parent=1 // pred_region
      %s35 = ssub.s32 256, 256
      %36 = vsyncadd [#allocation3], %s35
      %s37 = sshll.u32 [#allocation2], 4
      %s38 = int_to_ptr.vmem [resolvable:$true] %s37
      %43 = dma.hbm_to_vmem [thread:$0]  %s7, 256, %s38, [#allocation3], 64, 64, 4
    $region33: #{tpu_custom_call.1} parent=1 // pred_fallthru
      _
    // Predicated region
    $region34: #{tpu_custom_call.1} parent=1 // pred_check
      _
    $region35: #{tpu_custom_call.1} parent=1 // pred_check_branch
      %45 = sbr.rel (0) target = $region37
    $region36: #{tpu_custom_call.1} parent=1 // pred_region
      _
    $region37: #{tpu_custom_call.1} parent=1 // pred_fallthru
      _
    // Predicated region
    $region38: #{tpu_custom_call.1} parent=1 // pred_check
      _
    $region39: #{tpu_custom_call.1} parent=1 // pred_check_branch
      %47 = sbr.rel (0) target = $region41
    $region40: #{tpu_custom_call.1} parent=1 // pred_region
      _
    $region41: #{tpu_custom_call.1} parent=1 // pred_fallthru
      _
    // Predicated region
    $region42: #{tpu_custom_call.1} parent=1 // pred_check
      _
    $region43: #{tpu_custom_call.1} parent=1 // pred_check_branch
      %49 = sbr.rel (0) target = $region45
    $region44: #{tpu_custom_call.1} parent=1 // pred_region
      _
    $region45: #{tpu_custom_call.1} parent=1 // pred_fallthru
      _
    // Predicated region
    $region46: #{tpu_custom_call.1} parent=1 // pred_check
      _
    $region47: #{tpu_custom_call.1} parent=1 // pred_check_branch
      %51 = sbr.rel (0) target = $region49
    $region48: #{tpu_custom_call.1} parent=1 // pred_region
      %52 = dma.done [#allocation3], 256
    $region49: #{tpu_custom_call.1} parent=1 // pred_fallthru
      _
    %v54 = vld [vmem:[%s1] sm:$0x1]
    %v55 = vld [vmem:[%s2] sm:$0x1]
    %v56 = vld [vmem:[%s0] sm:$0x3]
    %v57 = vld [vmem:[%s0 + $0x2] sm:$0x3]
    %v58 = vld [vmem:[%s0 + $0x4] sm:$0x3]
    %v59 = vld [vmem:[%s0 + $0x6] sm:$0x3]
    %v60 = vld [vmem:[%s0 + $0x8] sm:$0x3]
    %v61 = vld [vmem:[%s0 + $0xa] sm:$0x3]
    %v62 = vld [vmem:[%s0 + $0xc] sm:$0x3]
    %v63 = vld [vmem:[%s0 + $0xe] sm:$0x3]
    %v64 = vcombine.low %v56, %v58
    %v66 = vunpack.c.l.s4 1983009808
    %v67 = vunpack.c.0.s8 %v66
    %v68 = vlaneseq
    %v69 = vshrl.u32 %v68, 7
    %v70 = vsub.s32 %v67, %v69
    %v71 = vrot.slane %v64, %v70
    %v72 = vcombine.low %v57, %v59
    %v74 = vunpack.c.l.s4 1983009808
    %v75 = vunpack.c.0.s8 %v74
    %v76 = vlaneseq
    %v77 = vshrl.u32 %v76, 7
    %v78 = vsub.s32 %v75, %v77
    %v79 = vrot.slane %v72, %v78
    %v80 = vcombine.low %v60, %v62
    %v82 = vunpack.c.l.s4 1983009808
    %v83 = vunpack.c.0.s8 %v82
    %v84 = vlaneseq
    %v85 = vshrl.u32 %v84, 7
    %v86 = vsub.s32 %v83, %v85
    %v87 = vrot.slane %v80, %v86
    %v88 = vcombine.low %v61, %v63
    %v90 = vunpack.c.l.s4 1983009808
    %v91 = vunpack.c.0.s8 %v90
    %v92 = vlaneseq
    %v93 = vshrl.u32 %v92, 7
    %v94 = vsub.s32 %v91, %v93
    %v95 = vrot.slane %v88, %v94
    %v96 = vcombine.low %v71, %v79
    %v98 = vunpack.c.l.s4 1934713408
    %v99 = vunpack.c.0.s8 %v98
    %v100 = vlaneseq
    %v101 = vshrl.u32 %v100, 7
    %v102 = vsub.s32 %v99, %v101
    %v103 = vrot.slane %v96, %v102
    %v104 = vcombine.low %v87, %v95
    %v106 = vunpack.c.l.s4 1934713408
    %v107 = vunpack.c.0.s8 %v106
    %v108 = vlaneseq
    %v109 = vshrl.u32 %v108, 7
    %v110 = vsub.s32 %v107, %v109
    %v111 = vrot.slane %v104, %v110
    %v112 = vcombine.low %v103, %v111
    %v113 = vcombine.high %v103, %v111
    %vm114 = vcmask 261120
    %v115 = vsel %vm114, %v112, 0.0
    %116 = vadd.xlane.f32.xlu0 %v115
    %v117 = vpop.xlane.xlu0 %116
    %v118 = vsel %vm114, %v113, 0.0
    %119 = vadd.xlane.f32.xlu0 %v118
    %v120 = vpop.xlane.xlu0 %119
    %v121 = vrcp.pop 32.0
    %v122 = vmul.f32 %v117, %v121
    %v123 = vmul.f32 %v120, %v121
    %v124 = vsub.f32 %v112, %v122
    %v125 = vsub.f32 %v113, %v123
    %v126 = vmul.f32 %v124, %v124
    %v127 = vmul.f32 %v125, %v125
    %v128 = vsel %vm114, %v126, 0.0
    %129 = vadd.xlane.f32.xlu0 %v128
    %v130 = vpop.xlane.xlu0 %129
    %v131 = vsel %vm114, %v127, 0.0
    %132 = vadd.xlane.f32.xlu0 %v131
    %v133 = vpop.xlane.xlu0 %132
    %v134 = vmul.f32 %v130, %v121
    %v135 = vmul.f32 %v133, %v121
    %v136 = vadd.f32 %v134, 1e-05
    %v137 = vadd.f32 %v135, 1e-05
    %v138 = vrsqrt.pop %v136
    %v139 = vrsqrt.pop %v137
    %v140 = vmul.f32 %v124, %v138
    %v141 = vmul.f32 %v125, %v139
    %v143 = vlaneseq
    %v144 = vshrl.u32 %v143, 7
    %v145 = vsub.s32 0, %v144
    %v146 = vrot.slane %v54, %v145
    %v148 = vmul.f32 %v140, %v146
    %v149 = vmul.f32 %v141, %v146
    %v151 = vlaneseq
    %v152 = vshrl.u32 %v151, 7
    %v153 = vsub.s32 0, %v152
    %v154 = vrot.slane %v55, %v153
    %v156 = vadd.f32 %v148, %v154
    %v157 = vadd.f32 %v149, %v154
    %v158 = vpack.c.bf16 %v157, %v156
    %v159 = vld [vmem:[%s3] sm:$0xf]
    %v160 = vld [vmem:[%s3 + $0x4] sm:$0xf]
    %v161 = vld [vmem:[%s3 + $0x8] sm:$0xf]
    %v162 = vld [vmem:[%s3 + $0xc] sm:$0xf]
    %v163 = vld [vmem:[%s4] sm:$0x1]
    %v165 = vlaneseq
    %v166 = vshrl.u32 %v165, 7
    %v167 = vsub.s32 0, %v166
    %v168 = vrot.slane %v163, %v167
    %v174 = vunpack.c.l.b16 %v159
    %v175 = vunpack.c.l.b16 %v160
    %v176 = vunpack.c.l.b16 %v161
    %v177 = vunpack.c.l.b16 %v162
    %v178 = vpack.c.b16 %v175, %v174
    %v179 = vpack.c.b16 %v177, %v176
    %v183 = vsel %vm114, %v158, 0
    %185 = vmatprep.subr.bf16.mxu0 0
    %186 = vmatpush1.bf16.msra.mxu0 %v178
    %187 = vmatprep.subr.bf16.mxu0 0
    %188 = vmatpush1.bf16.msra.mxu0 %v179
    %189 = vmatprep.subr.bf16.mxu0 0
    %190 = vmatpush1.bf16.msra.mxu0 0
    %191 = vmatprep.subr.bf16.mxu0 0
    %192 = vmatpush1.bf16.msra.mxu0 0
    %193 = vmatprep.subr.bf16.mxu0 0
    %194 = vmatpush1.bf16.msra.mxu0 0
    %195 = vmatprep.subr.bf16.mxu0 0
    %196 = vmatpush1.bf16.msra.mxu0 0
    %197 = vmatprep.subr.bf16.mxu0 0
    %198 = vmatpush1.bf16.msra.mxu0 0
    %199 = vmatprep.subr.bf16.mxu0 0
    %200 = vmatpush1.bf16.msra.mxu0 0
    %201 = vmatprep.subr.bf16.mxu0 0
    %202 = vmatpush1.bf16.msra.mxu0 0
    %203 = vmatprep.subr.bf16.mxu0 0
    %204 = vmatpush1.bf16.msra.mxu0 0
    %205 = vmatprep.subr.bf16.mxu0 0
    %206 = vmatpush1.bf16.msra.mxu0 0
    %207 = vmatprep.subr.bf16.mxu0 0
    %208 = vmatpush1.bf16.msra.mxu0 0
    %209 = vmatprep.subr.bf16.mxu0 0
    %210 = vmatpush1.bf16.msra.mxu0 0
    %211 = vmatprep.subr.bf16.mxu0 0
    %212 = vmatpush1.bf16.msra.mxu0 0
    %213 = vmatprep.subr.bf16.mxu0 0
    %214 = vmatpush1.bf16.msra.mxu0 0
    %215 = vmatprep.subr.bf16.mxu0 0
    %216 = vmatpush1.bf16.msra.mxu0 0
    %217 = vmatprep.mubr.bf16.mxu0 0
    %218 = vmatmul.mubr.bf16.gmra.mrb[0].mxu0 %v183
    %v219 = vpop.f32.mrb[0].mxu0
    %v220 = vadd.f32 %v168, %v219
    %v221 = vpop.f32.mrb[0].mxu0
    %v222 = vpop.f32.mrb[0].mxu0
    %v223 = vadd.f32 %v168, %v222
    %v224 = vpop.f32.mrb[0].mxu0
    %225 = vdwg.mxu0
    %228 = vrot.lane.b32.xlu0 %v220, 120
    %v229 = vpop.permute.xlu0 %228
    %230 = vrot.lane.b32.xlu0 %v223, 120
    %v231 = vpop.permute.xlu0 %230
    %234 = vrot.lane.b32.xlu0 %v220, 112
    %v235 = vpop.permute.xlu0 %234
    %236 = vrot.lane.b32.xlu0 %v223, 112
    %v237 = vpop.permute.xlu0 %236
    %240 = vrot.lane.b32.xlu0 %v220, 104
    %v241 = vpop.permute.xlu0 %240
    %242 = vrot.lane.b32.xlu0 %v223, 104
    %v243 = vpop.permute.xlu0 %242
    %v246 = vcombine.low %v220, %v235
    %v247 = vcombine.high %v220, %v235
    %v249 = vunpack.c.l.s4 1983009808
    %v250 = vunpack.c.0.s8 %v249
    %v251 = vlaneseq
    %v252 = vshrl.u32 %v251, 7
    %v253 = vsub.s32 %v250, %v252
    %v254 = vrot.slane %v246, %v253
    %v256 = vunpack.c.l.s4 1983009808
    %v257 = vunpack.c.0.s8 %v256
    %v258 = vlaneseq
    %v259 = vshrl.u32 %v258, 7
    %v260 = vsub.s32 %v257, %v259
    %v261 = vrot.slane %v247, %v260
    %v262 = vcombine.low %v229, %v241
    %v263 = vcombine.high %v229, %v241
    %v265 = vunpack.c.l.s4 1983009808
    %v266 = vunpack.c.0.s8 %v265
    %v267 = vlaneseq
    %v268 = vshrl.u32 %v267, 7
    %v269 = vsub.s32 %v266, %v268
    %v270 = vrot.slane %v262, %v269
    %v272 = vunpack.c.l.s4 1983009808
    %v273 = vunpack.c.0.s8 %v272
    %v274 = vlaneseq
    %v275 = vshrl.u32 %v274, 7
    %v276 = vsub.s32 %v273, %v275
    %v277 = vrot.slane %v263, %v276
    %v278 = vcombine.low %v254, %v270
    %v279 = vcombine.high %v254, %v270
    %v281 = vunpack.c.l.s4 1934713408
    %v282 = vunpack.c.0.s8 %v281
    %v283 = vlaneseq
    %v284 = vshrl.u32 %v283, 7
    %v285 = vsub.s32 %v282, %v284
    %v286 = vrot.slane %v278, %v285
    %v288 = vunpack.c.l.s4 1934713408
    %v289 = vunpack.c.0.s8 %v288
    %v290 = vlaneseq
    %v291 = vshrl.u32 %v290, 7
    %v292 = vsub.s32 %v289, %v291
    %v293 = vrot.slane %v279, %v292
    %v294 = vcombine.low %v261, %v277
    %v295 = vcombine.high %v261, %v277
    %v297 = vunpack.c.l.s4 1934713408
    %v298 = vunpack.c.0.s8 %v297
    %v299 = vlaneseq
    %v300 = vshrl.u32 %v299, 7
    %v301 = vsub.s32 %v298, %v300
    %v302 = vrot.slane %v294, %v301
    %v304 = vunpack.c.l.s4 1934713408
    %v305 = vunpack.c.0.s8 %v304
    %v306 = vlaneseq
    %v307 = vshrl.u32 %v306, 7
    %v308 = vsub.s32 %v305, %v307
    %v309 = vrot.slane %v295, %v308
    %v310 = vcombine.high %v286, 0.0
    %v311 = vcombine.high %v293, 0.0
    %v312 = vcombine.high %v302, 0.0
    %v313 = vcombine.high %v309, 0.0
    %v314 = vcombine.low %v223, %v237
    %v315 = vcombine.high %v223, %v237
    %v317 = vunpack.c.l.s4 1983009808
    %v318 = vunpack.c.0.s8 %v317
    %v319 = vlaneseq
    %v320 = vshrl.u32 %v319, 7
    %v321 = vsub.s32 %v318, %v320
    %v322 = vrot.slane %v314, %v321
    %v324 = vunpack.c.l.s4 1983009808
    %v325 = vunpack.c.0.s8 %v324
    %v326 = vlaneseq
    %v327 = vshrl.u32 %v326, 7
    %v328 = vsub.s32 %v325, %v327
    %v329 = vrot.slane %v315, %v328
    %v330 = vcombine.low %v231, %v243
    %v331 = vcombine.high %v231, %v243
    %v333 = vunpack.c.l.s4 1983009808
    %v334 = vunpack.c.0.s8 %v333
    %v335 = vlaneseq
    %v336 = vshrl.u32 %v335, 7
    %v337 = vsub.s32 %v334, %v336
    %v338 = vrot.slane %v330, %v337
    %v340 = vunpack.c.l.s4 1983009808
    %v341 = vunpack.c.0.s8 %v340
    %v342 = vlaneseq
    %v343 = vshrl.u32 %v342, 7
    %v344 = vsub.s32 %v341, %v343
    %v345 = vrot.slane %v331, %v344
    %v346 = vcombine.low %v322, %v338
    %v347 = vcombine.high %v322, %v338
    %v349 = vunpack.c.l.s4 1934713408
    %v350 = vunpack.c.0.s8 %v349
    %v351 = vlaneseq
    %v352 = vshrl.u32 %v351, 7
    %v353 = vsub.s32 %v350, %v352
    %v354 = vrot.slane %v346, %v353
    %v356 = vunpack.c.l.s4 1934713408
    %v357 = vunpack.c.0.s8 %v356
    %v358 = vlaneseq
    %v359 = vshrl.u32 %v358, 7
    %v360 = vsub.s32 %v357, %v359
    %v361 = vrot.slane %v347, %v360
    %v362 = vcombine.low %v329, %v345
    %v363 = vcombine.high %v329, %v345
    %v365 = vunpack.c.l.s4 1934713408
    %v366 = vunpack.c.0.s8 %v365
    %v367 = vlaneseq
    %v368 = vshrl.u32 %v367, 7
    %v369 = vsub.s32 %v366, %v368
    %v370 = vrot.slane %v362, %v369
    %v372 = vunpack.c.l.s4 1934713408
    %v373 = vunpack.c.0.s8 %v372
    %v374 = vlaneseq
    %v375 = vshrl.u32 %v374, 7
    %v376 = vsub.s32 %v373, %v375
    %v377 = vrot.slane %v363, %v376
    %v378 = vcombine.high %v354, 0.0
    %v379 = vcombine.high %v361, 0.0
    %v380 = vcombine.high %v370, 0.0
    %v381 = vcombine.high %v377, 0.0
    %v382 = vcombine.low %v286, %v293
    %v384 = vunpack.c.l.s4 1983009808
    %v385 = vunpack.c.0.s8 %v384
    %v386 = vlaneseq
    %v387 = vshrl.u32 %v386, 7
    %v388 = vsub.s32 %v385, %v387
    %v389 = vrot.slane %v382, %v388
    %v390 = vcombine.low %v310, %v311
    %v392 = vunpack.c.l.s4 1983009808
    %v393 = vunpack.c.0.s8 %v392
    %v394 = vlaneseq
    %v395 = vshrl.u32 %v394, 7
    %v396 = vsub.s32 %v393, %v395
    %v397 = vrot.slane %v390, %v396
    %v398 = vcombine.low %v302, %v309
    %v400 = vunpack.c.l.s4 1983009808
    %v401 = vunpack.c.0.s8 %v400
    %v402 = vlaneseq
    %v403 = vshrl.u32 %v402, 7
    %v404 = vsub.s32 %v401, %v403
    %v405 = vrot.slane %v398, %v404
    %v406 = vcombine.low %v312, %v313
    %v408 = vunpack.c.l.s4 1983009808
    %v409 = vunpack.c.0.s8 %v408
    %v410 = vlaneseq
    %v411 = vshrl.u32 %v410, 7
    %v412 = vsub.s32 %v409, %v411
    %v413 = vrot.slane %v406, %v412
    %v414 = vcombine.low %v389, %v397
    %v415 = vcombine.high %v389, %v397
    %v417 = vunpack.c.l.s4 1934713408
    %v418 = vunpack.c.0.s8 %v417
    %v419 = vlaneseq
    %v420 = vshrl.u32 %v419, 7
    %v421 = vsub.s32 %v418, %v420
    %v422 = vrot.slane %v414, %v421
    %v424 = vunpack.c.l.s4 1934713408
    %v425 = vunpack.c.0.s8 %v424
    %v426 = vlaneseq
    %v427 = vshrl.u32 %v426, 7
    %v428 = vsub.s32 %v425, %v427
    %v429 = vrot.slane %v415, %v428
    %v430 = vcombine.low %v405, %v413
    %v431 = vcombine.high %v405, %v413
    %v433 = vunpack.c.l.s4 1934713408
    %v434 = vunpack.c.0.s8 %v433
    %v435 = vlaneseq
    %v436 = vshrl.u32 %v435, 7
    %v437 = vsub.s32 %v434, %v436
    %v438 = vrot.slane %v430, %v437
    %v440 = vunpack.c.l.s4 1934713408
    %v441 = vunpack.c.0.s8 %v440
    %v442 = vlaneseq
    %v443 = vshrl.u32 %v442, 7
    %v444 = vsub.s32 %v441, %v443
    %v445 = vrot.slane %v431, %v444
    %v446 = vcombine.low %v422, %v438
    %v447 = vcombine.high %v422, %v438
    %v448 = vcombine.low %v429, %v445
    %v449 = vcombine.high %v429, %v445
    %v450 = vcombine.low %v354, %v361
    %v452 = vunpack.c.l.s4 1983009808
    %v453 = vunpack.c.0.s8 %v452
    %v454 = vlaneseq
    %v455 = vshrl.u32 %v454, 7
    %v456 = vsub.s32 %v453, %v455
    %v457 = vrot.slane %v450, %v456
    %v458 = vcombine.low %v378, %v379
    %v460 = vunpack.c.l.s4 1983009808
    %v461 = vunpack.c.0.s8 %v460
    %v462 = vlaneseq
    %v463 = vshrl.u32 %v462, 7
    %v464 = vsub.s32 %v461, %v463
    %v465 = vrot.slane %v458, %v464
    %v466 = vcombine.low %v370, %v377
    %v468 = vunpack.c.l.s4 1983009808
    %v469 = vunpack.c.0.s8 %v468
    %v470 = vlaneseq
    %v471 = vshrl.u32 %v470, 7
    %v472 = vsub.s32 %v469, %v471
    %v473 = vrot.slane %v466, %v472
    %v474 = vcombine.low %v380, %v381
    %v476 = vunpack.c.l.s4 1983009808
    %v477 = vunpack.c.0.s8 %v476
    %v478 = vlaneseq
    %v479 = vshrl.u32 %v478, 7
    %v480 = vsub.s32 %v477, %v479
    %v481 = vrot.slane %v474, %v480
    %v482 = vcombine.low %v457, %v465
    %v483 = vcombine.high %v457, %v465
    %v485 = vunpack.c.l.s4 1934713408
    %v486 = vunpack.c.0.s8 %v485
    %v487 = vlaneseq
    %v488 = vshrl.u32 %v487, 7
    %v489 = vsub.s32 %v486, %v488
    %v490 = vrot.slane %v482, %v489
    %v492 = vunpack.c.l.s4 1934713408
    %v493 = vunpack.c.0.s8 %v492
    %v494 = vlaneseq
    %v495 = vshrl.u32 %v494, 7
    %v496 = vsub.s32 %v493, %v495
    %v497 = vrot.slane %v483, %v496
    %v498 = vcombine.low %v473, %v481
    %v499 = vcombine.high %v473, %v481
    %v501 = vunpack.c.l.s4 1934713408
    %v502 = vunpack.c.0.s8 %v501
    %v503 = vlaneseq
    %v504 = vshrl.u32 %v503, 7
    %v505 = vsub.s32 %v502, %v504
    %v506 = vrot.slane %v498, %v505
    %v508 = vunpack.c.l.s4 1934713408
    %v509 = vunpack.c.0.s8 %v508
    %v510 = vlaneseq
    %v511 = vshrl.u32 %v510, 7
    %v512 = vsub.s32 %v509, %v511
    %v513 = vrot.slane %v499, %v512
    %v514 = vcombine.low %v490, %v506
    %v515 = vcombine.high %v490, %v506
    %v516 = vcombine.low %v497, %v513
    %v517 = vcombine.high %v497, %v513
    %v518 = vpack.c.bf16 %v446, %v446
    %v519 = vpack.c.bf16 %v447, %v447
    %v520 = vpack.c.bf16 %v448, %v448
    %v521 = vpack.c.bf16 %v449, %v449
    %v522 = vpack.c.bf16 %v514, %v514
    %v523 = vpack.c.bf16 %v515, %v515
    %v524 = vpack.c.bf16 %v516, %v516
    %v525 = vpack.c.bf16 %v517, %v517
    %526 = vrot.lane.b32.xlu0 %v220, 96
    %v527 = vpop.permute.xlu0 %526
    %528 = vrot.lane.b32.xlu0 %v223, 96
    %v529 = vpop.permute.xlu0 %528
    %530 = vrot.lane.b32.xlu0 %v229, 96
    %v531 = vpop.permute.xlu0 %530
    %532 = vrot.lane.b32.xlu0 %v231, 96
    %v533 = vpop.permute.xlu0 %532
    %534 = vrot.lane.b32.xlu0 %v235, 96
    %v535 = vpop.permute.xlu0 %534
    %536 = vrot.lane.b32.xlu0 %v237, 96
    %v537 = vpop.permute.xlu0 %536
    %538 = vrot.lane.b32.xlu0 %v241, 96
    %v539 = vpop.permute.xlu0 %538
    %540 = vrot.lane.b32.xlu0 %v243, 96
    %v541 = vpop.permute.xlu0 %540
    %v550 = vcombine.low %v527, %v535
    %v551 = vcombine.high %v527, %v535
    %v553 = vunpack.c.l.s4 1983009808
    %v554 = vunpack.c.0.s8 %v553
    %v555 = vlaneseq
    %v556 = vshrl.u32 %v555, 7
    %v557 = vsub.s32 %v554, %v556
    %v558 = vrot.slane %v550, %v557
    %v560 = vunpack.c.l.s4 1983009808
    %v561 = vunpack.c.0.s8 %v560
    %v562 = vlaneseq
    %v563 = vshrl.u32 %v562, 7
    %v564 = vsub.s32 %v561, %v563
    %v565 = vrot.slane %v551, %v564
    %v566 = vcombine.low %v531, %v539
    %v567 = vcombine.high %v531, %v539
    %v569 = vunpack.c.l.s4 1983009808
    %v570 = vunpack.c.0.s8 %v569
    %v571 = vlaneseq
    %v572 = vshrl.u32 %v571, 7
    %v573 = vsub.s32 %v570, %v572
    %v574 = vrot.slane %v566, %v573
    %v576 = vunpack.c.l.s4 1983009808
    %v577 = vunpack.c.0.s8 %v576
    %v578 = vlaneseq
    %v579 = vshrl.u32 %v578, 7
    %v580 = vsub.s32 %v577, %v579
    %v581 = vrot.slane %v567, %v580
    %v582 = vcombine.low %v558, %v574
    %v583 = vcombine.high %v558, %v574
    %v585 = vunpack.c.l.s4 1934713408
    %v586 = vunpack.c.0.s8 %v585
    %v587 = vlaneseq
    %v588 = vshrl.u32 %v587, 7
    %v589 = vsub.s32 %v586, %v588
    %v590 = vrot.slane %v582, %v589
    %v592 = vunpack.c.l.s4 1934713408
    %v593 = vunpack.c.0.s8 %v592
    %v594 = vlaneseq
    %v595 = vshrl.u32 %v594, 7
    %v596 = vsub.s32 %v593, %v595
    %v597 = vrot.slane %v583, %v596
    %v598 = vcombine.low %v565, %v581
    %v599 = vcombine.high %v565, %v581
    %v601 = vunpack.c.l.s4 1934713408
    %v602 = vunpack.c.0.s8 %v601
    %v603 = vlaneseq
    %v604 = vshrl.u32 %v603, 7
    %v605 = vsub.s32 %v602, %v604
    %v606 = vrot.slane %v598, %v605
    %v608 = vunpack.c.l.s4 1934713408
    %v609 = vunpack.c.0.s8 %v608
    %v610 = vlaneseq
    %v611 = vshrl.u32 %v610, 7
    %v612 = vsub.s32 %v609, %v611
    %v613 = vrot.slane %v599, %v612
    %v614 = vcombine.high %v590, 0.0
    %v615 = vcombine.high %v597, 0.0
    %v616 = vcombine.high %v606, 0.0
    %v617 = vcombine.high %v613, 0.0
    %v618 = vcombine.low %v529, %v537
    %v619 = vcombine.high %v529, %v537
    %v621 = vunpack.c.l.s4 1983009808
    %v622 = vunpack.c.0.s8 %v621
    %v623 = vlaneseq
    %v624 = vshrl.u32 %v623, 7
    %v625 = vsub.s32 %v622, %v624
    %v626 = vrot.slane %v618, %v625
    %v628 = vunpack.c.l.s4 1983009808
    %v629 = vunpack.c.0.s8 %v628
    %v630 = vlaneseq
    %v631 = vshrl.u32 %v630, 7
    %v632 = vsub.s32 %v629, %v631
    %v633 = vrot.slane %v619, %v632
    %v634 = vcombine.low %v533, %v541
    %v635 = vcombine.high %v533, %v541
    %v637 = vunpack.c.l.s4 1983009808
    %v638 = vunpack.c.0.s8 %v637
    %v639 = vlaneseq
    %v640 = vshrl.u32 %v639, 7
    %v641 = vsub.s32 %v638, %v640
    %v642 = vrot.slane %v634, %v641
    %v644 = vunpack.c.l.s4 1983009808
    %v645 = vunpack.c.0.s8 %v644
    %v646 = vlaneseq
    %v647 = vshrl.u32 %v646, 7
    %v648 = vsub.s32 %v645, %v647
    %v649 = vrot.slane %v635, %v648
    %v650 = vcombine.low %v626, %v642
    %v651 = vcombine.high %v626, %v642
    %v653 = vunpack.c.l.s4 1934713408
    %v654 = vunpack.c.0.s8 %v653
    %v655 = vlaneseq
    %v656 = vshrl.u32 %v655, 7
    %v657 = vsub.s32 %v654, %v656
    %v658 = vrot.slane %v650, %v657
    %v660 = vunpack.c.l.s4 1934713408
    %v661 = vunpack.c.0.s8 %v660
    %v662 = vlaneseq
    %v663 = vshrl.u32 %v662, 7
    %v664 = vsub.s32 %v661, %v663
    %v665 = vrot.slane %v651, %v664
    %v666 = vcombine.low %v633, %v649
    %v667 = vcombine.high %v633, %v649
    %v669 = vunpack.c.l.s4 1934713408
    %v670 = vunpack.c.0.s8 %v669
    %v671 = vlaneseq
    %v672 = vshrl.u32 %v671, 7
    %v673 = vsub.s32 %v670, %v672
    %v674 = vrot.slane %v666, %v673
    %v676 = vunpack.c.l.s4 1934713408
    %v677 = vunpack.c.0.s8 %v676
    %v678 = vlaneseq
    %v679 = vshrl.u32 %v678, 7
    %v680 = vsub.s32 %v677, %v679
    %v681 = vrot.slane %v667, %v680
    %v682 = vcombine.high %v658, 0.0
    %v683 = vcombine.high %v665, 0.0
    %v684 = vcombine.high %v674, 0.0
    %v685 = vcombine.high %v681, 0.0
    %v686 = vcombine.low %v590, %v597
    %v688 = vunpack.c.l.s4 1983009808
    %v689 = vunpack.c.0.s8 %v688
    %v690 = vlaneseq
    %v691 = vshrl.u32 %v690, 7
    %v692 = vsub.s32 %v689, %v691
    %v693 = vrot.slane %v686, %v692
    %v694 = vcombine.low %v614, %v615
    %v696 = vunpack.c.l.s4 1983009808
    %v697 = vunpack.c.0.s8 %v696
    %v698 = vlaneseq
    %v699 = vshrl.u32 %v698, 7
    %v700 = vsub.s32 %v697, %v699
    %v701 = vrot.slane %v694, %v700
    %v702 = vcombine.low %v606, %v613
    %v704 = vunpack.c.l.s4 1983009808
    %v705 = vunpack.c.0.s8 %v704
    %v706 = vlaneseq
    %v707 = vshrl.u32 %v706, 7
    %v708 = vsub.s32 %v705, %v707
    %v709 = vrot.slane %v702, %v708
    %v710 = vcombine.low %v616, %v617
    %v712 = vunpack.c.l.s4 1983009808
    %v713 = vunpack.c.0.s8 %v712
    %v714 = vlaneseq
    %v715 = vshrl.u32 %v714, 7
    %v716 = vsub.s32 %v713, %v715
    %v717 = vrot.slane %v710, %v716
    %v718 = vcombine.low %v693, %v701
    %v719 = vcombine.high %v693, %v701
    %v721 = vunpack.c.l.s4 1934713408
    %v722 = vunpack.c.0.s8 %v721
    %v723 = vlaneseq
    %v724 = vshrl.u32 %v723, 7
    %v725 = vsub.s32 %v722, %v724
    %v726 = vrot.slane %v718, %v725
    %v728 = vunpack.c.l.s4 1934713408
    %v729 = vunpack.c.0.s8 %v728
    %v730 = vlaneseq
    %v731 = vshrl.u32 %v730, 7
    %v732 = vsub.s32 %v729, %v731
    %v733 = vrot.slane %v719, %v732
    %v734 = vcombine.low %v709, %v717
    %v735 = vcombine.high %v709, %v717
    %v737 = vunpack.c.l.s4 1934713408
    %v738 = vunpack.c.0.s8 %v737
    %v739 = vlaneseq
    %v740 = vshrl.u32 %v739, 7
    %v741 = vsub.s32 %v738, %v740
    %v742 = vrot.slane %v734, %v741
    %v744 = vunpack.c.l.s4 1934713408
    %v745 = vunpack.c.0.s8 %v744
    %v746 = vlaneseq
    %v747 = vshrl.u32 %v746, 7
    %v748 = vsub.s32 %v745, %v747
    %v749 = vrot.slane %v735, %v748
    %v750 = vcombine.low %v726, %v742
    %v751 = vcombine.high %v726, %v742
    %v752 = vcombine.low %v733, %v749
    %v753 = vcombine.high %v733, %v749
    %v754 = vcombine.low %v658, %v665
    %v756 = vunpack.c.l.s4 1983009808
    %v757 = vunpack.c.0.s8 %v756
    %v758 = vlaneseq
    %v759 = vshrl.u32 %v758, 7
    %v760 = vsub.s32 %v757, %v759
    %v761 = vrot.slane %v754, %v760
    %v762 = vcombine.low %v682, %v683
    %v764 = vunpack.c.l.s4 1983009808
    %v765 = vunpack.c.0.s8 %v764
    %v766 = vlaneseq
    %v767 = vshrl.u32 %v766, 7
    %v768 = vsub.s32 %v765, %v767
    %v769 = vrot.slane %v762, %v768
    %v770 = vcombine.low %v674, %v681
    %v772 = vunpack.c.l.s4 1983009808
    %v773 = vunpack.c.0.s8 %v772
    %v774 = vlaneseq
    %v775 = vshrl.u32 %v774, 7
    %v776 = vsub.s32 %v773, %v775
    %v777 = vrot.slane %v770, %v776
    %v778 = vcombine.low %v684, %v685
    %v780 = vunpack.c.l.s4 1983009808
    %v781 = vunpack.c.0.s8 %v780
    %v782 = vlaneseq
    %v783 = vshrl.u32 %v782, 7
    %v784 = vsub.s32 %v781, %v783
    %v785 = vrot.slane %v778, %v784
    %v786 = vcombine.low %v761, %v769
    %v787 = vcombine.high %v761, %v769
    %v789 = vunpack.c.l.s4 1934713408
    %v790 = vunpack.c.0.s8 %v789
    %v791 = vlaneseq
    %v792 = vshrl.u32 %v791, 7
    %v793 = vsub.s32 %v790, %v792
    %v794 = vrot.slane %v786, %v793
    %v796 = vunpack.c.l.s4 1934713408
    %v797 = vunpack.c.0.s8 %v796
    %v798 = vlaneseq
    %v799 = vshrl.u32 %v798, 7
    %v800 = vsub.s32 %v797, %v799
    %v801 = vrot.slane %v787, %v800
    %v802 = vcombine.low %v777, %v785
    %v803 = vcombine.high %v777, %v785
    %v805 = vunpack.c.l.s4 1934713408
    %v806 = vunpack.c.0.s8 %v805
    %v807 = vlaneseq
    %v808 = vshrl.u32 %v807, 7
    %v809 = vsub.s32 %v806, %v808
    %v810 = vrot.slane %v802, %v809
    %v812 = vunpack.c.l.s4 1934713408
    %v813 = vunpack.c.0.s8 %v812
    %v814 = vlaneseq
    %v815 = vshrl.u32 %v814, 7
    %v816 = vsub.s32 %v813, %v815
    %v817 = vrot.slane %v803, %v816
    %v818 = vcombine.low %v794, %v810
    %v819 = vcombine.high %v794, %v810
    %v820 = vcombine.low %v801, %v817
    %v821 = vcombine.high %v801, %v817
    %v822 = vpack.c.bf16 %v750, %v750
    %v823 = vpack.c.bf16 %v751, %v751
    %v824 = vpack.c.bf16 %v752, %v752
    %v825 = vpack.c.bf16 %v753, %v753
    %v826 = vpack.c.bf16 %v818, %v818
    %v827 = vpack.c.bf16 %v819, %v819
    %v828 = vpack.c.bf16 %v820, %v820
    %v829 = vpack.c.bf16 %v821, %v821
    %830 = vrot.lane.b32.xlu0 %v220, 64
    %v831 = vpop.permute.xlu0 %830
    %832 = vrot.lane.b32.xlu0 %v223, 64
    %v833 = vpop.permute.xlu0 %832
    %834 = vrot.lane.b32.xlu0 %v229, 64
    %v835 = vpop.permute.xlu0 %834
    %836 = vrot.lane.b32.xlu0 %v231, 64
    %v837 = vpop.permute.xlu0 %836
    %838 = vrot.lane.b32.xlu0 %v235, 64
    %v839 = vpop.permute.xlu0 %838
    %840 = vrot.lane.b32.xlu0 %v237, 64
    %v841 = vpop.permute.xlu0 %840
    %842 = vrot.lane.b32.xlu0 %v241, 64
    %v843 = vpop.permute.xlu0 %842
    %844 = vrot.lane.b32.xlu0 %v243, 64
    %v845 = vpop.permute.xlu0 %844
    %v854 = vcombine.low %v831, %v839
    %v855 = vcombine.high %v831, %v839
    %v857 = vunpack.c.l.s4 1983009808
    %v858 = vunpack.c.0.s8 %v857
    %v859 = vlaneseq
    %v860 = vshrl.u32 %v859, 7
    %v861 = vsub.s32 %v858, %v860
    %v862 = vrot.slane %v854, %v861
    %v864 = vunpack.c.l.s4 1983009808
    %v865 = vunpack.c.0.s8 %v864
    %v866 = vlaneseq
    %v867 = vshrl.u32 %v866, 7
    %v868 = vsub.s32 %v865, %v867
    %v869 = vrot.slane %v855, %v868
    %v870 = vcombine.low %v835, %v843
    %v871 = vcombine.high %v835, %v843
    %v873 = vunpack.c.l.s4 1983009808
    %v874 = vunpack.c.0.s8 %v873
    %v875 = vlaneseq
    %v876 = vshrl.u32 %v875, 7
    %v877 = vsub.s32 %v874, %v876
    %v878 = vrot.slane %v870, %v877
    %v880 = vunpack.c.l.s4 1983009808
    %v881 = vunpack.c.0.s8 %v880
    %v882 = vlaneseq
    %v883 = vshrl.u32 %v882, 7
    %v884 = vsub.s32 %v881, %v883
    %v885 = vrot.slane %v871, %v884
    %v886 = vcombine.low %v862, %v878
    %v887 = vcombine.high %v862, %v878
    %v889 = vunpack.c.l.s4 1934713408
    %v890 = vunpack.c.0.s8 %v889
    %v891 = vlaneseq
    %v892 = vshrl.u32 %v891, 7
    %v893 = vsub.s32 %v890, %v892
    %v894 = vrot.slane %v886, %v893
    %v896 = vunpack.c.l.s4 1934713408
    %v897 = vunpack.c.0.s8 %v896
    %v898 = vlaneseq
    %v899 = vshrl.u32 %v898, 7
    %v900 = vsub.s32 %v897, %v899
    %v901 = vrot.slane %v887, %v900
    %v902 = vcombine.low %v869, %v885
    %v903 = vcombine.high %v869, %v885
    %v905 = vunpack.c.l.s4 1934713408
    %v906 = vunpack.c.0.s8 %v905
    %v907 = vlaneseq
    %v908 = vshrl.u32 %v907, 7
    %v909 = vsub.s32 %v906, %v908
    %v910 = vrot.slane %v902, %v909
    %v912 = vunpack.c.l.s4 1934713408
    %v913 = vunpack.c.0.s8 %v912
    %v914 = vlaneseq
    %v915 = vshrl.u32 %v914, 7
    %v916 = vsub.s32 %v913, %v915
    %v917 = vrot.slane %v903, %v916
    %v918 = vcombine.high %v894, 0.0
    %v919 = vcombine.high %v901, 0.0
    %v920 = vcombine.high %v910, 0.0
    %v921 = vcombine.high %v917, 0.0
    %v922 = vcombine.low %v833, %v841
    %v923 = vcombine.high %v833, %v841
    %v925 = vunpack.c.l.s4 1983009808
    %v926 = vunpack.c.0.s8 %v925
    %v927 = vlaneseq
    %v928 = vshrl.u32 %v927, 7
    %v929 = vsub.s32 %v926, %v928
    %v930 = vrot.slane %v922, %v929
    %v932 = vunpack.c.l.s4 1983009808
    %v933 = vunpack.c.0.s8 %v932
    %v934 = vlaneseq
    %v935 = vshrl.u32 %v934, 7
    %v936 = vsub.s32 %v933, %v935
    %v937 = vrot.slane %v923, %v936
    %v938 = vcombine.low %v837, %v845
    %v939 = vcombine.high %v837, %v845
    %v941 = vunpack.c.l.s4 1983009808
    %v942 = vunpack.c.0.s8 %v941
    %v943 = vlaneseq
    %v944 = vshrl.u32 %v943, 7
    %v945 = vsub.s32 %v942, %v944
    %v946 = vrot.slane %v938, %v945
    %v948 = vunpack.c.l.s4 1983009808
    %v949 = vunpack.c.0.s8 %v948
    %v950 = vlaneseq
    %v951 = vshrl.u32 %v950, 7
    %v952 = vsub.s32 %v949, %v951
    %v953 = vrot.slane %v939, %v952
    %v954 = vcombine.low %v930, %v946
    %v955 = vcombine.high %v930, %v946
    %v957 = vunpack.c.l.s4 1934713408
    %v958 = vunpack.c.0.s8 %v957
    %v959 = vlaneseq
    %v960 = vshrl.u32 %v959, 7
    %v961 = vsub.s32 %v958, %v960
    %v962 = vrot.slane %v954, %v961
    %v964 = vunpack.c.l.s4 1934713408
    %v965 = vunpack.c.0.s8 %v964
    %v966 = vlaneseq
    %v967 = vshrl.u32 %v966, 7
    %v968 = vsub.s32 %v965, %v967
    %v969 = vrot.slane %v955, %v968
    %v970 = vcombine.low %v937, %v953
    %v971 = vcombine.high %v937, %v953
    %v973 = vunpack.c.l.s4 1934713408
    %v974 = vunpack.c.0.s8 %v973
    %v975 = vlaneseq
    %v976 = vshrl.u32 %v975, 7
    %v977 = vsub.s32 %v974, %v976
    %v978 = vrot.slane %v970, %v977
    %v980 = vunpack.c.l.s4 1934713408
    %v981 = vunpack.c.0.s8 %v980
    %v982 = vlaneseq
    %v983 = vshrl.u32 %v982, 7
    %v984 = vsub.s32 %v981, %v983
    %v985 = vrot.slane %v971, %v984
    %v986 = vcombine.high %v962, 0.0
    %v987 = vcombine.high %v969, 0.0
    %v988 = vcombine.high %v978, 0.0
    %v989 = vcombine.high %v985, 0.0
    %v990 = vcombine.low %v894, %v901
    %v992 = vunpack.c.l.s4 1983009808
    %v993 = vunpack.c.0.s8 %v992
    %v994 = vlaneseq
    %v995 = vshrl.u32 %v994, 7
    %v996 = vsub.s32 %v993, %v995
    %v997 = vrot.slane %v990, %v996
    %v998 = vcombine.low %v918, %v919
    %v1000 = vunpack.c.l.s4 1983009808
    %v1001 = vunpack.c.0.s8 %v1000
    %v1002 = vlaneseq
    %v1003 = vshrl.u32 %v1002, 7
    %v1004 = vsub.s32 %v1001, %v1003
    %v1005 = vrot.slane %v998, %v1004
    %v1006 = vcombine.low %v910, %v917
    %v1008 = vunpack.c.l.s4 1983009808
    %v1009 = vunpack.c.0.s8 %v1008
    %v1010 = vlaneseq
    %v1011 = vshrl.u32 %v1010, 7
    %v1012 = vsub.s32 %v1009, %v1011
    %v1013 = vrot.slane %v1006, %v1012
    %v1014 = vcombine.low %v920, %v921
    %v1016 = vunpack.c.l.s4 1983009808
    %v1017 = vunpack.c.0.s8 %v1016
    %v1018 = vlaneseq
    %v1019 = vshrl.u32 %v1018, 7
    %v1020 = vsub.s32 %v1017, %v1019
    %v1021 = vrot.slane %v1014, %v1020
    %v1022 = vcombine.low %v997, %v1005
    %v1023 = vcombine.high %v997, %v1005
    %v1025 = vunpack.c.l.s4 1934713408
    %v1026 = vunpack.c.0.s8 %v1025
    %v1027 = vlaneseq
    %v1028 = vshrl.u32 %v1027, 7
    %v1029 = vsub.s32 %v1026, %v1028
    %v1030 = vrot.slane %v1022, %v1029
    %v1032 = vunpack.c.l.s4 1934713408
    %v1033 = vunpack.c.0.s8 %v1032
    %v1034 = vlaneseq
    %v1035 = vshrl.u32 %v1034, 7
    %v1036 = vsub.s32 %v1033, %v1035
    %v1037 = vrot.slane %v1023, %v1036
    %v1038 = vcombine.low %v1013, %v1021
    %v1039 = vcombine.high %v1013, %v1021
    %v1041 = vunpack.c.l.s4 1934713408
    %v1042 = vunpack.c.0.s8 %v1041
    %v1043 = vlaneseq
    %v1044 = vshrl.u32 %v1043, 7
    %v1045 = vsub.s32 %v1042, %v1044
    %v1046 = vrot.slane %v1038, %v1045
    %v1048 = vunpack.c.l.s4 1934713408
    %v1049 = vunpack.c.0.s8 %v1048
    %v1050 = vlaneseq
    %v1051 = vshrl.u32 %v1050, 7
    %v1052 = vsub.s32 %v1049, %v1051
    %v1053 = vrot.slane %v1039, %v1052
    %v1054 = vcombine.low %v1030, %v1046
    %v1055 = vcombine.high %v1030, %v1046
    %v1056 = vcombine.low %v1037, %v1053
    %v1057 = vcombine.high %v1037, %v1053
    %v1058 = vcombine.low %v962, %v969
    %v1060 = vunpack.c.l.s4 1983009808
    %v1061 = vunpack.c.0.s8 %v1060
    %v1062 = vlaneseq
    %v1063 = vshrl.u32 %v1062, 7
    %v1064 = vsub.s32 %v1061, %v1063
    %v1065 = vrot.slane %v1058, %v1064
    %v1066 = vcombine.low %v986, %v987
    %v1068 = vunpack.c.l.s4 1983009808
    %v1069 = vunpack.c.0.s8 %v1068
    %v1070 = vlaneseq
    %v1071 = vshrl.u32 %v1070, 7
    %v1072 = vsub.s32 %v1069, %v1071
    %v1073 = vrot.slane %v1066, %v1072
    %v1074 = vcombine.low %v978, %v985
    %v1076 = vunpack.c.l.s4 1983009808
    %v1077 = vunpack.c.0.s8 %v1076
    %v1078 = vlaneseq
    %v1079 = vshrl.u32 %v1078, 7
    %v1080 = vsub.s32 %v1077, %v1079
    %v1081 = vrot.slane %v1074, %v1080
    %v1082 = vcombine.low %v988, %v989
    %v1084 = vunpack.c.l.s4 1983009808
    %v1085 = vunpack.c.0.s8 %v1084
    %v1086 = vlaneseq
    %v1087 = vshrl.u32 %v1086, 7
    %v1088 = vsub.s32 %v1085, %v1087
    %v1089 = vrot.slane %v1082, %v1088
    %v1090 = vcombine.low %v1065, %v1073
    %v1091 = vcombine.high %v1065, %v1073
    %v1093 = vunpack.c.l.s4 1934713408
    %v1094 = vunpack.c.0.s8 %v1093
    %v1095 = vlaneseq
    %v1096 = vshrl.u32 %v1095, 7
    %v1097 = vsub.s32 %v1094, %v1096
    %v1098 = vrot.slane %v1090, %v1097
    %v1100 = vunpack.c.l.s4 1934713408
    %v1101 = vunpack.c.0.s8 %v1100
    %v1102 = vlaneseq
    %v1103 = vshrl.u32 %v1102, 7
    %v1104 = vsub.s32 %v1101, %v1103
    %v1105 = vrot.slane %v1091, %v1104
    %v1106 = vcombine.low %v1081, %v1089
    %v1107 = vcombine.high %v1081, %v1089
    %v1109 = vunpack.c.l.s4 1934713408
    %v1110 = vunpack.c.0.s8 %v1109
    %v1111 = vlaneseq
    %v1112 = vshrl.u32 %v1111, 7
    %v1113 = vsub.s32 %v1110, %v1112
    %v1114 = vrot.slane %v1106, %v1113
    %v1116 = vunpack.c.l.s4 1934713408
    %v1117 = vunpack.c.0.s8 %v1116
    %v1118 = vlaneseq
    %v1119 = vshrl.u32 %v1118, 7
    %v1120 = vsub.s32 %v1117, %v1119
    %v1121 = vrot.slane %v1107, %v1120
    %v1122 = vcombine.low %v1098, %v1114
    %v1123 = vcombine.high %v1098, %v1114
    %v1124 = vcombine.low %v1105, %v1121
    %v1125 = vcombine.high %v1105, %v1121
    %v1126 = vpack.c.bf16 %v1054, %v1054
    %v1127 = vpack.c.bf16 %v1055, %v1055
    %v1128 = vpack.c.bf16 %v1056, %v1056
    %v1129 = vpack.c.bf16 %v1057, %v1057
    %v1130 = vpack.c.bf16 %v1122, %v1122
    %v1131 = vpack.c.bf16 %v1123, %v1123
    %v1132 = vpack.c.bf16 %v1124, %v1124
    %v1133 = vpack.c.bf16 %v1125, %v1125
    %vm1134 = vcmask 64512
    %v1136 = vsel %vm1134, %v518, 0
    %v1139 = vsel %vm1134, %v822, 0
    %1141 = vmatprep.subr.bf16.mxu0 0
    %1142 = vmatpush1.bf16.xpose.msra.mxu0 %v1139
    %1143 = vmatprep.subr.bf16.mxu0 0
    %1144 = vmatpush1.bf16.xpose.msra.mxu0 0
    %1145 = vmatprep.subr.bf16.mxu0 0
    %1146 = vmatpush1.bf16.xpose.msra.mxu0 0
    %1147 = vmatprep.subr.bf16.mxu0 0
    %1148 = vmatpush1.bf16.xpose.msra.mxu0 0
    %1149 = vmatprep.subr.bf16.mxu0 0
    %1150 = vmatpush1.bf16.xpose.msra.mxu0 0
    %1151 = vmatprep.subr.bf16.mxu0 0
    %1152 = vmatpush1.bf16.xpose.msra.mxu0 0
    %1153 = vmatprep.subr.bf16.mxu0 0
    %1154 = vmatpush1.bf16.xpose.msra.mxu0 0
    %1155 = vmatprep.subr.bf16.mxu0 0
    %1156 = vmatpush1.bf16.xpose.msra.mxu0 0
    %1157 = vmatprep.subr.bf16.mxu0 0
    %1158 = vmatpush1.bf16.xpose.msra.mxu0 0
    %1159 = vmatprep.subr.bf16.mxu0 0
    %1160 = vmatpush1.bf16.xpose.msra.mxu0 0
    %1161 = vmatprep.subr.bf16.mxu0 0
    %1162 = vmatpush1.bf16.xpose.msra.mxu0 0
    %1163 = vmatprep.subr.bf16.mxu0 0
    %1164 = vmatpush1.bf16.xpose.msra.mxu0 0
    %1165 = vmatprep.subr.bf16.mxu0 0
    %1166 = vmatpush1.bf16.xpose.msra.mxu0 0
    %1167 = vmatprep.subr.bf16.mxu0 0
    %1168 = vmatpush1.bf16.xpose.msra.mxu0 0
    %1169 = vmatprep.subr.bf16.mxu0 0
    %1170 = vmatpush1.bf16.xpose.msra.mxu0 0
    %1171 = vmatprep.subr.bf16.mxu0 0
    %1172 = vmatpush1.bf16.xpose.msra.mxu0 0
    %1173 = vmatprep.mubr.bf16.mxu0 0
    %1174 = vmatmul.mubr.bf16.gmra.mrb[0].mxu0 %v1136
    %v1175 = vpop.f32.mrb[0].mxu0
    %v1176 = vadd.f32 0.0, %v1175
    %v1177 = vpop.f32.mrb[0].mxu0
    %v1178 = vpop.f32.mrb[0].mxu0
    %v1179 = vpop.f32.mrb[0].mxu0
    %1180 = vdwg.mxu0
    %v1182 = vsel %vm1134, %v519, 0
    %v1185 = vsel %vm1134, %v823, 0
    %1187 = vmatprep.subr.bf16.mxu0 0
    %1188 = vmatpush1.bf16.xpose.msra.mxu0 %v1185
    %1189 = vmatprep.subr.bf16.mxu0 0
    %1190 = vmatpush1.bf16.xpose.msra.mxu0 0
    %1191 = vmatprep.subr.bf16.mxu0 0
    %1192 = vmatpush1.bf16.xpose.msra.mxu0 0
    %1193 = vmatprep.subr.bf16.mxu0 0
    %1194 = vmatpush1.bf16.xpose.msra.mxu0 0
    %1195 = vmatprep.subr.bf16.mxu0 0
    %1196 = vmatpush1.bf16.xpose.msra.mxu0 0
    %1197 = vmatprep.subr.bf16.mxu0 0
    %1198 = vmatpush1.bf16.xpose.msra.mxu0 0
    %1199 = vmatprep.subr.bf16.mxu0 0
    %1200 = vmatpush1.bf16.xpose.msra.mxu0 0
    %1201 = vmatprep.subr.bf16.mxu0 0
    %1202 = vmatpush1.bf16.xpose.msra.mxu0 0
    %1203 = vmatprep.subr.bf16.mxu0 0
    %1204 = vmatpush1.bf16.xpose.msra.mxu0 0
    %1205 = vmatprep.subr.bf16.mxu0 0
    %1206 = vmatpush1.bf16.xpose.msra.mxu0 0
    %1207 = vmatprep.subr.bf16.mxu0 0
    %1208 = vmatpush1.bf16.xpose.msra.mxu0 0
    %1209 = vmatprep.subr.bf16.mxu0 0
    %1210 = vmatpush1.bf16.xpose.msra.mxu0 0
    %1211 = vmatprep.subr.bf16.mxu0 0
    %1212 = vmatpush1.bf16.xpose.msra.mxu0 0
    %1213 = vmatprep.subr.bf16.mxu0 0
    %1214 = vmatpush1.bf16.xpose.msra.mxu0 0
    %1215 = vmatprep.subr.bf16.mxu0 0
    %1216 = vmatpush1.bf16.xpose.msra.mxu0 0
    %1217 = vmatprep.subr.bf16.mxu0 0
    %1218 = vmatpush1.bf16.xpose.msra.mxu0 0
    %1219 = vmatprep.mubr.bf16.mxu0 0
    %1220 = vmatmul.mubr.bf16.gmra.mrb[0].mxu0 %v1182
    %v1221 = vpop.f32.mrb[0].mxu0
    %v1222 = vadd.f32 0.0, %v1221
    %v1223 = vpop.f32.mrb[0].mxu0
    %v1224 = vpop.f32.mrb[0].mxu0
    %v1225 = vpop.f32.mrb[0].mxu0
    %1226 = vdwg.mxu0
    %v1228 = vsel %vm1134, %v520, 0
    %v1231 = vsel %vm1134, %v824, 0
    %1233 = vmatprep.subr.bf16.mxu0 0
    %1234 = vmatpush1.bf16.xpose.msra.mxu0 %v1231
    %1235 = vmatprep.subr.bf16.mxu0 0
    %1236 = vmatpush1.bf16.xpose.msra.mxu0 0
    %1237 = vmatprep.subr.bf16.mxu0 0
    %1238 = vmatpush1.bf16.xpose.msra.mxu0 0
    %1239 = vmatprep.subr.bf16.mxu0 0
    %1240 = vmatpush1.bf16.xpose.msra.mxu0 0
    %1241 = vmatprep.subr.bf16.mxu0 0
    %1242 = vmatpush1.bf16.xpose.msra.mxu0 0
    %1243 = vmatprep.subr.bf16.mxu0 0
    %1244 = vmatpush1.bf16.xpose.msra.mxu0 0
    %1245 = vmatprep.subr.bf16.mxu0 0
    %1246 = vmatpush1.bf16.xpose.msra.mxu0 0
    %1247 = vmatprep.subr.bf16.mxu0 0
    %1248 = vmatpush1.bf16.xpose.msra.mxu0 0
    %1249 = vmatprep.subr.bf16.mxu0 0
    %1250 = vmatpush1.bf16.xpose.msra.mxu0 0
    %1251 = vmatprep.subr.bf16.mxu0 0
    %1252 = vmatpush1.bf16.xpose.msra.mxu0 0
    %1253 = vmatprep.subr.bf16.mxu0 0
    %1254 = vmatpush1.bf16.xpose.msra.mxu0 0
    %1255 = vmatprep.subr.bf16.mxu0 0
    %1256 = vmatpush1.bf16.xpose.msra.mxu0 0
    %1257 = vmatprep.subr.bf16.mxu0 0
    %1258 = vmatpush1.bf16.xpose.msra.mxu0 0
    %1259 = vmatprep.subr.bf16.mxu0 0
    %1260 = vmatpush1.bf16.xpose.msra.mxu0 0
    %1261 = vmatprep.subr.bf16.mxu0 0
    %1262 = vmatpush1.bf16.xpose.msra.mxu0 0
    %1263 = vmatprep.subr.bf16.mxu0 0
    %1264 = vmatpush1.bf16.xpose.msra.mxu0 0
    %1265 = vmatprep.mubr.bf16.mxu0 0
    %1266 = vmatmul.mubr.bf16.gmra.mrb[0].mxu0 %v1228
    %v1267 = vpop.f32.mrb[0].mxu0
    %v1268 = vadd.f32 0.0, %v1267
    %v1269 = vpop.f32.mrb[0].mxu0
    %v1270 = vpop.f32.mrb[0].mxu0
    %v1271 = vpop.f32.mrb[0].mxu0
    %1272 = vdwg.mxu0
    %v1274 = vsel %vm1134, %v521, 0
    %v1277 = vsel %vm1134, %v825, 0
    %1279 = vmatprep.subr.bf16.mxu0 0
    %1280 = vmatpush1.bf16.xpose.msra.mxu0 %v1277
    %1281 = vmatprep.subr.bf16.mxu0 0
    %1282 = vmatpush1.bf16.xpose.msra.mxu0 0
    %1283 = vmatprep.subr.bf16.mxu0 0
    %1284 = vmatpush1.bf16.xpose.msra.mxu0 0
    %1285 = vmatprep.subr.bf16.mxu0 0
    %1286 = vmatpush1.bf16.xpose.msra.mxu0 0
    %1287 = vmatprep.subr.bf16.mxu0 0
    %1288 = vmatpush1.bf16.xpose.msra.mxu0 0
    %1289 = vmatprep.subr.bf16.mxu0 0
    %1290 = vmatpush1.bf16.xpose.msra.mxu0 0
    %1291 = vmatprep.subr.bf16.mxu0 0
    %1292 = vmatpush1.bf16.xpose.msra.mxu0 0
    %1293 = vmatprep.subr.bf16.mxu0 0
    %1294 = vmatpush1.bf16.xpose.msra.mxu0 0
    %1295 = vmatprep.subr.bf16.mxu0 0
    %1296 = vmatpush1.bf16.xpose.msra.mxu0 0
    %1297 = vmatprep.subr.bf16.mxu0 0
    %1298 = vmatpush1.bf16.xpose.msra.mxu0 0
    %1299 = vmatprep.subr.bf16.mxu0 0
    %1300 = vmatpush1.bf16.xpose.msra.mxu0 0
    %1301 = vmatprep.subr.bf16.mxu0 0
    %1302 = vmatpush1.bf16.xpose.msra.mxu0 0
    %1303 = vmatprep.subr.bf16.mxu0 0
    %1304 = vmatpush1.bf16.xpose.msra.mxu0 0
    %1305 = vmatprep.subr.bf16.mxu0 0
    %1306 = vmatpush1.bf16.xpose.msra.mxu0 0
    %1307 = vmatprep.subr.bf16.mxu0 0
    %1308 = vmatpush1.bf16.xpose.msra.mxu0 0
    %1309 = vmatprep.subr.bf16.mxu0 0
    %1310 = vmatpush1.bf16.xpose.msra.mxu0 0
    %1311 = vmatprep.mubr.bf16.mxu0 0
    %1312 = vmatmul.mubr.bf16.gmra.mrb[0].mxu0 %v1274
    %v1313 = vpop.f32.mrb[0].mxu0
    %v1314 = vadd.f32 0.0, %v1313
    %v1315 = vpop.f32.mrb[0].mxu0
    %v1316 = vpop.f32.mrb[0].mxu0
    %v1317 = vpop.f32.mrb[0].mxu0
    %1318 = vdwg.mxu0
    %v1320 = vsel %vm1134, %v522, 0
    %v1323 = vsel %vm1134, %v826, 0
    %1325 = vmatprep.subr.bf16.mxu0 0
    %1326 = vmatpush1.bf16.xpose.msra.mxu0 %v1323
    %1327 = vmatprep.subr.bf16.mxu0 0
    %1328 = vmatpush1.bf16.xpose.msra.mxu0 0
    %1329 = vmatprep.subr.bf16.mxu0 0
    %1330 = vmatpush1.bf16.xpose.msra.mxu0 0
    %1331 = vmatprep.subr.bf16.mxu0 0
    %1332 = vmatpush1.bf16.xpose.msra.mxu0 0
    %1333 = vmatprep.subr.bf16.mxu0 0
    %1334 = vmatpush1.bf16.xpose.msra.mxu0 0
    %1335 = vmatprep.subr.bf16.mxu0 0
    %1336 = vmatpush1.bf16.xpose.msra.mxu0 0
    %1337 = vmatprep.subr.bf16.mxu0 0
    %1338 = vmatpush1.bf16.xpose.msra.mxu0 0
    %1339 = vmatprep.subr.bf16.mxu0 0
    %1340 = vmatpush1.bf16.xpose.msra.mxu0 0
    %1341 = vmatprep.subr.bf16.mxu0 0
    %1342 = vmatpush1.bf16.xpose.msra.mxu0 0
    %1343 = vmatprep.subr.bf16.mxu0 0
    %1344 = vmatpush1.bf16.xpose.msra.mxu0 0
    %1345 = vmatprep.subr.bf16.mxu0 0
    %1346 = vmatpush1.bf16.xpose.msra.mxu0 0
    %1347 = vmatprep.subr.bf16.mxu0 0
    %1348 = vmatpush1.bf16.xpose.msra.mxu0 0
    %1349 = vmatprep.subr.bf16.mxu0 0
    %1350 = vmatpush1.bf16.xpose.msra.mxu0 0
    %1351 = vmatprep.subr.bf16.mxu0 0
    %1352 = vmatpush1.bf16.xpose.msra.mxu0 0
    %1353 = vmatprep.subr.bf16.mxu0 0
    %1354 = vmatpush1.bf16.xpose.msra.mxu0 0
    %1355 = vmatprep.subr.bf16.mxu0 0
    %1356 = vmatpush1.bf16.xpose.msra.mxu0 0
    %1357 = vmatprep.mubr.bf16.mxu0 0
    %1358 = vmatmul.mubr.bf16.gmra.mrb[0].mxu0 %v1320
    %v1359 = vpop.f32.mrb[0].mxu0
    %v1360 = vadd.f32 0.0, %v1359
    %v1361 = vpop.f32.mrb[0].mxu0
    %v1362 = vpop.f32.mrb[0].mxu0
    %v1363 = vpop.f32.mrb[0].mxu0
    %1364 = vdwg.mxu0
    %v1366 = vsel %vm1134, %v523, 0
    %v1369 = vsel %vm1134, %v827, 0
    %1371 = vmatprep.subr.bf16.mxu0 0
    %1372 = vmatpush1.bf16.xpose.msra.mxu0 %v1369
    %1373 = vmatprep.subr.bf16.mxu0 0
    %1374 = vmatpush1.bf16.xpose.msra.mxu0 0
    %1375 = vmatprep.subr.bf16.mxu0 0
    %1376 = vmatpush1.bf16.xpose.msra.mxu0 0
    %1377 = vmatprep.subr.bf16.mxu0 0
    %1378 = vmatpush1.bf16.xpose.msra.mxu0 0
    %1379 = vmatprep.subr.bf16.mxu0 0
    %1380 = vmatpush1.bf16.xpose.msra.mxu0 0
    %1381 = vmatprep.subr.bf16.mxu0 0
    %1382 = vmatpush1.bf16.xpose.msra.mxu0 0
    %1383 = vmatprep.subr.bf16.mxu0 0
    %1384 = vmatpush1.bf16.xpose.msra.mxu0 0
    %1385 = vmatprep.subr.bf16.mxu0 0
    %1386 = vmatpush1.bf16.xpose.msra.mxu0 0
    %1387 = vmatprep.subr.bf16.mxu0 0
    %1388 = vmatpush1.bf16.xpose.msra.mxu0 0
    %1389 = vmatprep.subr.bf16.mxu0 0
    %1390 = vmatpush1.bf16.xpose.msra.mxu0 0
    %1391 = vmatprep.subr.bf16.mxu0 0
    %1392 = vmatpush1.bf16.xpose.msra.mxu0 0
    %1393 = vmatprep.subr.bf16.mxu0 0
    %1394 = vmatpush1.bf16.xpose.msra.mxu0 0
    %1395 = vmatprep.subr.bf16.mxu0 0
    %1396 = vmatpush1.bf16.xpose.msra.mxu0 0
    %1397 = vmatprep.subr.bf16.mxu0 0
    %1398 = vmatpush1.bf16.xpose.msra.mxu0 0
    %1399 = vmatprep.subr.bf16.mxu0 0
    %1400 = vmatpush1.bf16.xpose.msra.mxu0 0
    %1401 = vmatprep.subr.bf16.mxu0 0
    %1402 = vmatpush1.bf16.xpose.msra.mxu0 0
    %1403 = vmatprep.mubr.bf16.mxu0 0
    %1404 = vmatmul.mubr.bf16.gmra.mrb[0].mxu0 %v1366
    %v1405 = vpop.f32.mrb[0].mxu0
    %v1406 = vadd.f32 0.0, %v1405
    %v1407 = vpop.f32.mrb[0].mxu0
    %v1408 = vpop.f32.mrb[0].mxu0
    %v1409 = vpop.f32.mrb[0].mxu0
    %1410 = vdwg.mxu0
    %v1412 = vsel %vm1134, %v524, 0
    %v1415 = vsel %vm1134, %v828, 0
    %1417 = vmatprep.subr.bf16.mxu0 0
    %1418 = vmatpush1.bf16.xpose.msra.mxu0 %v1415
    %1419 = vmatprep.subr.bf16.mxu0 0
    %1420 = vmatpush1.bf16.xpose.msra.mxu0 0
    %1421 = vmatprep.subr.bf16.mxu0 0
    %1422 = vmatpush1.bf16.xpose.msra.mxu0 0
    %1423 = vmatprep.subr.bf16.mxu0 0
    %1424 = vmatpush1.bf16.xpose.msra.mxu0 0
    %1425 = vmatprep.subr.bf16.mxu0 0
    %1426 = vmatpush1.bf16.xpose.msra.mxu0 0
    %1427 = vmatprep.subr.bf16.mxu0 0
    %1428 = vmatpush1.bf16.xpose.msra.mxu0 0
    %1429 = vmatprep.subr.bf16.mxu0 0
    %1430 = vmatpush1.bf16.xpose.msra.mxu0 0
    %1431 = vmatprep.subr.bf16.mxu0 0
    %1432 = vmatpush1.bf16.xpose.msra.mxu0 0
    %1433 = vmatprep.subr.bf16.mxu0 0
    %1434 = vmatpush1.bf16.xpose.msra.mxu0 0
    %1435 = vmatprep.subr.bf16.mxu0 0
    %1436 = vmatpush1.bf16.xpose.msra.mxu0 0
    %1437 = vmatprep.subr.bf16.mxu0 0
    %1438 = vmatpush1.bf16.xpose.msra.mxu0 0
    %1439 = vmatprep.subr.bf16.mxu0 0
    %1440 = vmatpush1.bf16.xpose.msra.mxu0 0
    %1441 = vmatprep.subr.bf16.mxu0 0
    %1442 = vmatpush1.bf16.xpose.msra.mxu0 0
    %1443 = vmatprep.subr.bf16.mxu0 0
    %1444 = vmatpush1.bf16.xpose.msra.mxu0 0
    %1445 = vmatprep.subr.bf16.mxu0 0
    %1446 = vmatpush1.bf16.xpose.msra.mxu0 0
    %1447 = vmatprep.subr.bf16.mxu0 0
    %1448 = vmatpush1.bf16.xpose.msra.mxu0 0
    %1449 = vmatprep.mubr.bf16.mxu0 0
    %1450 = vmatmul.mubr.bf16.gmra.mrb[0].mxu0 %v1412
    %v1451 = vpop.f32.mrb[0].mxu0
    %v1452 = vadd.f32 0.0, %v1451
    %v1453 = vpop.f32.mrb[0].mxu0
    %v1454 = vpop.f32.mrb[0].mxu0
    %v1455 = vpop.f32.mrb[0].mxu0
    %1456 = vdwg.mxu0
    %v1458 = vsel %vm1134, %v525, 0
    %v1461 = vsel %vm1134, %v829, 0
    %1463 = vmatprep.subr.bf16.mxu0 0
    %1464 = vmatpush1.bf16.xpose.msra.mxu0 %v1461
    %1465 = vmatprep.subr.bf16.mxu0 0
    %1466 = vmatpush1.bf16.xpose.msra.mxu0 0
    %1467 = vmatprep.subr.bf16.mxu0 0
    %1468 = vmatpush1.bf16.xpose.msra.mxu0 0
    %1469 = vmatprep.subr.bf16.mxu0 0
    %1470 = vmatpush1.bf16.xpose.msra.mxu0 0
    %1471 = vmatprep.subr.bf16.mxu0 0
    %1472 = vmatpush1.bf16.xpose.msra.mxu0 0
    %1473 = vmatprep.subr.bf16.mxu0 0
    %1474 = vmatpush1.bf16.xpose.msra.mxu0 0
    %1475 = vmatprep.subr.bf16.mxu0 0
    %1476 = vmatpush1.bf16.xpose.msra.mxu0 0
    %1477 = vmatprep.subr.bf16.mxu0 0
    %1478 = vmatpush1.bf16.xpose.msra.mxu0 0
    %1479 = vmatprep.subr.bf16.mxu0 0
    %1480 = vmatpush1.bf16.xpose.msra.mxu0 0
    %1481 = vmatprep.subr.bf16.mxu0 0
    %1482 = vmatpush1.bf16.xpose.msra.mxu0 0
    %1483 = vmatprep.subr.bf16.mxu0 0
    %1484 = vmatpush1.bf16.xpose.msra.mxu0 0
    %1485 = vmatprep.subr.bf16.mxu0 0
    %1486 = vmatpush1.bf16.xpose.msra.mxu0 0
    %1487 = vmatprep.subr.bf16.mxu0 0
    %1488 = vmatpush1.bf16.xpose.msra.mxu0 0
    %1489 = vmatprep.subr.bf16.mxu0 0
    %1490 = vmatpush1.bf16.xpose.msra.mxu0 0
    %1491 = vmatprep.subr.bf16.mxu0 0
    %1492 = vmatpush1.bf16.xpose.msra.mxu0 0
    %1493 = vmatprep.subr.bf16.mxu0 0
    %1494 = vmatpush1.bf16.xpose.msra.mxu0 0
    %1495 = vmatprep.mubr.bf16.mxu0 0
    %1496 = vmatmul.mubr.bf16.gmra.mrb[0].mxu0 %v1458
    %v1497 = vpop.f32.mrb[0].mxu0
    %v1498 = vadd.f32 0.0, %v1497
    %v1499 = vpop.f32.mrb[0].mxu0
    %v1500 = vpop.f32.mrb[0].mxu0
    %v1501 = vpop.f32.mrb[0].mxu0
    %1502 = vdwg.mxu0
    %v1503 = vsel %vm1134, %v1176, -inf
    %1504 = vmax.xlane.f32.xlu0 %v1503
    %v1505 = vpop.xlane.xlu0 %1504
    %v1506 = vsel %vm1134, %v1222, -inf
    %1507 = vmax.xlane.f32.xlu0 %v1506
    %v1508 = vpop.xlane.xlu0 %1507
    %v1509 = vsel %vm1134, %v1268, -inf
    %1510 = vmax.xlane.f32.xlu0 %v1509
    %v1511 = vpop.xlane.xlu0 %1510
    %v1512 = vsel %vm1134, %v1314, -inf
    %1513 = vmax.xlane.f32.xlu0 %v1512
    %v1514 = vpop.xlane.xlu0 %1513
    %v1515 = vsel %vm1134, %v1360, -inf
    %1516 = vmax.xlane.f32.xlu0 %v1515
    %v1517 = vpop.xlane.xlu0 %1516
    %v1518 = vsel %vm1134, %v1406, -inf
    %1519 = vmax.xlane.f32.xlu0 %v1518
    %v1520 = vpop.xlane.xlu0 %1519
    %v1521 = vsel %vm1134, %v1452, -inf
    %1522 = vmax.xlane.f32.xlu0 %v1521
    %v1523 = vpop.xlane.xlu0 %1522
    %v1524 = vsel %vm1134, %v1498, -inf
    %1525 = vmax.xlane.f32.xlu0 %v1524
    %v1526 = vpop.xlane.xlu0 %1525
    %v1527 = vsub.f32 -inf, %v1505
    %v1528 = vsub.f32 -inf, %v1508
    %v1529 = vsub.f32 -inf, %v1511
    %v1530 = vsub.f32 -inf, %v1514
    %v1531 = vsub.f32 -inf, %v1517
    %v1532 = vsub.f32 -inf, %v1520
    %v1533 = vsub.f32 -inf, %v1523
    %v1534 = vsub.f32 -inf, %v1526
    %v1535 = vmul.f32 %v1527, 1.442695
    %v1536 = vpow.pop %v1535
    %v1537 = vmul.f32 %v1528, 1.442695
    %v1538 = vpow.pop %v1537
    %v1539 = vmul.f32 %v1529, 1.442695
    %v1540 = vpow.pop %v1539
    %v1541 = vmul.f32 %v1530, 1.442695
    %v1542 = vpow.pop %v1541
    %v1543 = vmul.f32 %v1531, 1.442695
    %v1544 = vpow.pop %v1543
    %v1545 = vmul.f32 %v1532, 1.442695
    %v1546 = vpow.pop %v1545
    %v1547 = vmul.f32 %v1533, 1.442695
    %v1548 = vpow.pop %v1547
    %v1549 = vmul.f32 %v1534, 1.442695
    %v1550 = vpow.pop %v1549
    %v1551 = vsub.f32 %v1176, %v1505
    %v1552 = vsub.f32 %v1222, %v1508
    %v1553 = vsub.f32 %v1268, %v1511
    %v1554 = vsub.f32 %v1314, %v1514
    %v1555 = vsub.f32 %v1360, %v1517
    %v1556 = vsub.f32 %v1406, %v1520
    %v1557 = vsub.f32 %v1452, %v1523
    %v1558 = vsub.f32 %v1498, %v1526
    %v1559 = vmul.f32 %v1551, 1.442695
    %v1560 = vpow.pop %v1559
    %v1561 = vmul.f32 %v1552, 1.442695
    %v1562 = vpow.pop %v1561
    %v1563 = vmul.f32 %v1553, 1.442695
    %v1564 = vpow.pop %v1563
    %v1565 = vmul.f32 %v1554, 1.442695
    %v1566 = vpow.pop %v1565
    %v1567 = vmul.f32 %v1555, 1.442695
    %v1568 = vpow.pop %v1567
    %v1569 = vmul.f32 %v1556, 1.442695
    %v1570 = vpow.pop %v1569
    %v1571 = vmul.f32 %v1557, 1.442695
    %v1572 = vpow.pop %v1571
    %v1573 = vmul.f32 %v1558, 1.442695
    %v1574 = vpow.pop %v1573
    %v1575 = vmul.f32 %v1536, 0.0
    %v1576 = vmul.f32 %v1538, 0.0
    %v1577 = vmul.f32 %v1540, 0.0
    %v1578 = vmul.f32 %v1542, 0.0
    %v1579 = vmul.f32 %v1544, 0.0
    %v1580 = vmul.f32 %v1546, 0.0
    %v1581 = vmul.f32 %v1548, 0.0
    %v1582 = vmul.f32 %v1550, 0.0
    %v1583 = vsel %vm1134, %v1560, 0.0
    %1584 = vadd.xlane.f32.xlu0 %v1583
    %v1585 = vpop.xlane.xlu0 %1584
    %v1586 = vsel %vm1134, %v1562, 0.0
    %1587 = vadd.xlane.f32.xlu0 %v1586
    %v1588 = vpop.xlane.xlu0 %1587
    %v1589 = vsel %vm1134, %v1564, 0.0
    %1590 = vadd.xlane.f32.xlu0 %v1589
    %v1591 = vpop.xlane.xlu0 %1590
    %v1592 = vsel %vm1134, %v1566, 0.0
    %1593 = vadd.xlane.f32.xlu0 %v1592
    %v1594 = vpop.xlane.xlu0 %1593
    %v1595 = vsel %vm1134, %v1568, 0.0
    %1596 = vadd.xlane.f32.xlu0 %v1595
    %v1597 = vpop.xlane.xlu0 %1596
    %v1598 = vsel %vm1134, %v1570, 0.0
    %1599 = vadd.xlane.f32.xlu0 %v1598
    %v1600 = vpop.xlane.xlu0 %1599
    %v1601 = vsel %vm1134, %v1572, 0.0
    %1602 = vadd.xlane.f32.xlu0 %v1601
    %v1603 = vpop.xlane.xlu0 %1602
    %v1604 = vsel %vm1134, %v1574, 0.0
    %1605 = vadd.xlane.f32.xlu0 %v1604
    %v1606 = vpop.xlane.xlu0 %1605
    %v1607 = vadd.f32 %v1575, %v1585
    %v1608 = vadd.f32 %v1576, %v1588
    %v1609 = vadd.f32 %v1577, %v1591
    %v1610 = vadd.f32 %v1578, %v1594
    %v1611 = vadd.f32 %v1579, %v1597
    %v1612 = vadd.f32 %v1580, %v1600
    %v1613 = vadd.f32 %v1581, %v1603
    %v1614 = vadd.f32 %v1582, %v1606
    %v1615 = vpack.c.bf16 %v1560, %v1560
    %v1616 = vpack.c.bf16 %v1562, %v1562
    %v1617 = vpack.c.bf16 %v1564, %v1564
    %v1618 = vpack.c.bf16 %v1566, %v1566
    %v1619 = vpack.c.bf16 %v1568, %v1568
    %v1620 = vpack.c.bf16 %v1570, %v1570
    %v1621 = vpack.c.bf16 %v1572, %v1572
    %v1622 = vpack.c.bf16 %v1574, %v1574
    %v1624 = vsel %vm1134, %v1615, 0
    %vm1626 = vcmask 1043456
    %v1628 = vsel %vm1626, %v1126, 0
    %1630 = vmatprep.subr.bf16.mxu0 0
    %1631 = vmatpush1.bf16.msra.mxu0 %v1628
    %1632 = vmatprep.subr.bf16.mxu0 0
    %1633 = vmatpush1.bf16.msra.mxu0 0
    %1634 = vmatprep.subr.bf16.mxu0 0
    %1635 = vmatpush1.bf16.msra.mxu0 0
    %1636 = vmatprep.subr.bf16.mxu0 0
    %1637 = vmatpush1.bf16.msra.mxu0 0
    %1638 = vmatprep.subr.bf16.mxu0 0
    %1639 = vmatpush1.bf16.msra.mxu0 0
    %1640 = vmatprep.subr.bf16.mxu0 0
    %1641 = vmatpush1.bf16.msra.mxu0 0
    %1642 = vmatprep.subr.bf16.mxu0 0
    %1643 = vmatpush1.bf16.msra.mxu0 0
    %1644 = vmatprep.subr.bf16.mxu0 0
    %1645 = vmatpush1.bf16.msra.mxu0 0
    %1646 = vmatprep.subr.bf16.mxu0 0
    %1647 = vmatpush1.bf16.msra.mxu0 0
    %1648 = vmatprep.subr.bf16.mxu0 0
    %1649 = vmatpush1.bf16.msra.mxu0 0
    %1650 = vmatprep.subr.bf16.mxu0 0
    %1651 = vmatpush1.bf16.msra.mxu0 0
    %1652 = vmatprep.subr.bf16.mxu0 0
    %1653 = vmatpush1.bf16.msra.mxu0 0
    %1654 = vmatprep.subr.bf16.mxu0 0
    %1655 = vmatpush1.bf16.msra.mxu0 0
    %1656 = vmatprep.subr.bf16.mxu0 0
    %1657 = vmatpush1.bf16.msra.mxu0 0
    %1658 = vmatprep.subr.bf16.mxu0 0
    %1659 = vmatpush1.bf16.msra.mxu0 0
    %1660 = vmatprep.subr.bf16.mxu0 0
    %1661 = vmatpush1.bf16.msra.mxu0 0
    %1662 = vmatprep.mubr.bf16.mxu0 0
    %1663 = vmatmul.mubr.bf16.gmra.mrb[0].mxu0 %v1624
    %v1664 = vpop.f32.mrb[0].mxu0
    %v1665 = vadd.f32 0.0, %v1664
    %v1666 = vpop.f32.mrb[0].mxu0
    %v1667 = vpop.f32.mrb[0].mxu0
    %v1668 = vpop.f32.mrb[0].mxu0
    %1669 = vdwg.mxu0
    %v1671 = vsel %vm1134, %v1616, 0
    %v1674 = vsel %vm1626, %v1127, 0
    %1676 = vmatprep.subr.bf16.mxu0 0
    %1677 = vmatpush1.bf16.msra.mxu0 %v1674
    %1678 = vmatprep.subr.bf16.mxu0 0
    %1679 = vmatpush1.bf16.msra.mxu0 0
    %1680 = vmatprep.subr.bf16.mxu0 0
    %1681 = vmatpush1.bf16.msra.mxu0 0
    %1682 = vmatprep.subr.bf16.mxu0 0
    %1683 = vmatpush1.bf16.msra.mxu0 0
    %1684 = vmatprep.subr.bf16.mxu0 0
    %1685 = vmatpush1.bf16.msra.mxu0 0
    %1686 = vmatprep.subr.bf16.mxu0 0
    %1687 = vmatpush1.bf16.msra.mxu0 0
    %1688 = vmatprep.subr.bf16.mxu0 0
    %1689 = vmatpush1.bf16.msra.mxu0 0
    %1690 = vmatprep.subr.bf16.mxu0 0
    %1691 = vmatpush1.bf16.msra.mxu0 0
    %1692 = vmatprep.subr.bf16.mxu0 0
    %1693 = vmatpush1.bf16.msra.mxu0 0
    %1694 = vmatprep.subr.bf16.mxu0 0
    %1695 = vmatpush1.bf16.msra.mxu0 0
    %1696 = vmatprep.subr.bf16.mxu0 0
    %1697 = vmatpush1.bf16.msra.mxu0 0
    %1698 = vmatprep.subr.bf16.mxu0 0
    %1699 = vmatpush1.bf16.msra.mxu0 0
    %1700 = vmatprep.subr.bf16.mxu0 0
    %1701 = vmatpush1.bf16.msra.mxu0 0
    %1702 = vmatprep.subr.bf16.mxu0 0
    %1703 = vmatpush1.bf16.msra.mxu0 0
    %1704 = vmatprep.subr.bf16.mxu0 0
    %1705 = vmatpush1.bf16.msra.mxu0 0
    %1706 = vmatprep.subr.bf16.mxu0 0
    %1707 = vmatpush1.bf16.msra.mxu0 0
    %1708 = vmatprep.mubr.bf16.mxu0 0
    %1709 = vmatmul.mubr.bf16.gmra.mrb[0].mxu0 %v1671
    %v1710 = vpop.f32.mrb[0].mxu0
    %v1711 = vadd.f32 0.0, %v1710
    %v1712 = vpop.f32.mrb[0].mxu0
    %v1713 = vpop.f32.mrb[0].mxu0
    %v1714 = vpop.f32.mrb[0].mxu0
    %1715 = vdwg.mxu0
    %v1717 = vsel %vm1134, %v1617, 0
    %v1720 = vsel %vm1626, %v1128, 0
    %1722 = vmatprep.subr.bf16.mxu0 0
    %1723 = vmatpush1.bf16.msra.mxu0 %v1720
    %1724 = vmatprep.subr.bf16.mxu0 0
    %1725 = vmatpush1.bf16.msra.mxu0 0
    %1726 = vmatprep.subr.bf16.mxu0 0
    %1727 = vmatpush1.bf16.msra.mxu0 0
    %1728 = vmatprep.subr.bf16.mxu0 0
    %1729 = vmatpush1.bf16.msra.mxu0 0
    %1730 = vmatprep.subr.bf16.mxu0 0
    %1731 = vmatpush1.bf16.msra.mxu0 0
    %1732 = vmatprep.subr.bf16.mxu0 0
    %1733 = vmatpush1.bf16.msra.mxu0 0
    %1734 = vmatprep.subr.bf16.mxu0 0
    %1735 = vmatpush1.bf16.msra.mxu0 0
    %1736 = vmatprep.subr.bf16.mxu0 0
    %1737 = vmatpush1.bf16.msra.mxu0 0
    %1738 = vmatprep.subr.bf16.mxu0 0
    %1739 = vmatpush1.bf16.msra.mxu0 0
    %1740 = vmatprep.subr.bf16.mxu0 0
    %1741 = vmatpush1.bf16.msra.mxu0 0
    %1742 = vmatprep.subr.bf16.mxu0 0
    %1743 = vmatpush1.bf16.msra.mxu0 0
    %1744 = vmatprep.subr.bf16.mxu0 0
    %1745 = vmatpush1.bf16.msra.mxu0 0
    %1746 = vmatprep.subr.bf16.mxu0 0
    %1747 = vmatpush1.bf16.msra.mxu0 0
    %1748 = vmatprep.subr.bf16.mxu0 0
    %1749 = vmatpush1.bf16.msra.mxu0 0
    %1750 = vmatprep.subr.bf16.mxu0 0
    %1751 = vmatpush1.bf16.msra.mxu0 0
    %1752 = vmatprep.subr.bf16.mxu0 0
    %1753 = vmatpush1.bf16.msra.mxu0 0
    %1754 = vmatprep.mubr.bf16.mxu0 0
    %1755 = vmatmul.mubr.bf16.gmra.mrb[0].mxu0 %v1717
    %v1756 = vpop.f32.mrb[0].mxu0
    %v1757 = vadd.f32 0.0, %v1756
    %v1758 = vpop.f32.mrb[0].mxu0
    %v1759 = vpop.f32.mrb[0].mxu0
    %v1760 = vpop.f32.mrb[0].mxu0
    %1761 = vdwg.mxu0
    %v1763 = vsel %vm1134, %v1618, 0
    %v1766 = vsel %vm1626, %v1129, 0
    %1768 = vmatprep.subr.bf16.mxu0 0
    %1769 = vmatpush1.bf16.msra.mxu0 %v1766
    %1770 = vmatprep.subr.bf16.mxu0 0
    %1771 = vmatpush1.bf16.msra.mxu0 0
    %1772 = vmatprep.subr.bf16.mxu0 0
    %1773 = vmatpush1.bf16.msra.mxu0 0
    %1774 = vmatprep.subr.bf16.mxu0 0
    %1775 = vmatpush1.bf16.msra.mxu0 0
    %1776 = vmatprep.subr.bf16.mxu0 0
    %1777 = vmatpush1.bf16.msra.mxu0 0
    %1778 = vmatprep.subr.bf16.mxu0 0
    %1779 = vmatpush1.bf16.msra.mxu0 0
    %1780 = vmatprep.subr.bf16.mxu0 0
    %1781 = vmatpush1.bf16.msra.mxu0 0
    %1782 = vmatprep.subr.bf16.mxu0 0
    %1783 = vmatpush1.bf16.msra.mxu0 0
    %1784 = vmatprep.subr.bf16.mxu0 0
    %1785 = vmatpush1.bf16.msra.mxu0 0
    %1786 = vmatprep.subr.bf16.mxu0 0
    %1787 = vmatpush1.bf16.msra.mxu0 0
    %1788 = vmatprep.subr.bf16.mxu0 0
    %1789 = vmatpush1.bf16.msra.mxu0 0
    %1790 = vmatprep.subr.bf16.mxu0 0
    %1791 = vmatpush1.bf16.msra.mxu0 0
    %1792 = vmatprep.subr.bf16.mxu0 0
    %1793 = vmatpush1.bf16.msra.mxu0 0
    %1794 = vmatprep.subr.bf16.mxu0 0
    %1795 = vmatpush1.bf16.msra.mxu0 0
    %1796 = vmatprep.subr.bf16.mxu0 0
    %1797 = vmatpush1.bf16.msra.mxu0 0
    %1798 = vmatprep.subr.bf16.mxu0 0
    %1799 = vmatpush1.bf16.msra.mxu0 0
    %1800 = vmatprep.mubr.bf16.mxu0 0
    %1801 = vmatmul.mubr.bf16.gmra.mrb[0].mxu0 %v1763
    %v1802 = vpop.f32.mrb[0].mxu0
    %v1803 = vadd.f32 0.0, %v1802
    %v1804 = vpop.f32.mrb[0].mxu0
    %v1805 = vpop.f32.mrb[0].mxu0
    %v1806 = vpop.f32.mrb[0].mxu0
    %1807 = vdwg.mxu0
    %v1809 = vsel %vm1134, %v1619, 0
    %v1812 = vsel %vm1626, %v1130, 0
    %1814 = vmatprep.subr.bf16.mxu0 0
    %1815 = vmatpush1.bf16.msra.mxu0 %v1812
    %1816 = vmatprep.subr.bf16.mxu0 0
    %1817 = vmatpush1.bf16.msra.mxu0 0
    %1818 = vmatprep.subr.bf16.mxu0 0
    %1819 = vmatpush1.bf16.msra.mxu0 0
    %1820 = vmatprep.subr.bf16.mxu0 0
    %1821 = vmatpush1.bf16.msra.mxu0 0
    %1822 = vmatprep.subr.bf16.mxu0 0
    %1823 = vmatpush1.bf16.msra.mxu0 0
    %1824 = vmatprep.subr.bf16.mxu0 0
    %1825 = vmatpush1.bf16.msra.mxu0 0
    %1826 = vmatprep.subr.bf16.mxu0 0
    %1827 = vmatpush1.bf16.msra.mxu0 0
    %1828 = vmatprep.subr.bf16.mxu0 0
    %1829 = vmatpush1.bf16.msra.mxu0 0
    %1830 = vmatprep.subr.bf16.mxu0 0
    %1831 = vmatpush1.bf16.msra.mxu0 0
    %1832 = vmatprep.subr.bf16.mxu0 0
    %1833 = vmatpush1.bf16.msra.mxu0 0
    %1834 = vmatprep.subr.bf16.mxu0 0
    %1835 = vmatpush1.bf16.msra.mxu0 0
    %1836 = vmatprep.subr.bf16.mxu0 0
    %1837 = vmatpush1.bf16.msra.mxu0 0
    %1838 = vmatprep.subr.bf16.mxu0 0
    %1839 = vmatpush1.bf16.msra.mxu0 0
    %1840 = vmatprep.subr.bf16.mxu0 0
    %1841 = vmatpush1.bf16.msra.mxu0 0
    %1842 = vmatprep.subr.bf16.mxu0 0
    %1843 = vmatpush1.bf16.msra.mxu0 0
    %1844 = vmatprep.subr.bf16.mxu0 0
    %1845 = vmatpush1.bf16.msra.mxu0 0
    %1846 = vmatprep.mubr.bf16.mxu0 0
    %1847 = vmatmul.mubr.bf16.gmra.mrb[0].mxu0 %v1809
    %v1848 = vpop.f32.mrb[0].mxu0
    %v1849 = vadd.f32 0.0, %v1848
    %v1850 = vpop.f32.mrb[0].mxu0
    %v1851 = vpop.f32.mrb[0].mxu0
    %v1852 = vpop.f32.mrb[0].mxu0
    %1853 = vdwg.mxu0
    %v1855 = vsel %vm1134, %v1620, 0
    %v1858 = vsel %vm1626, %v1131, 0
    %1860 = vmatprep.subr.bf16.mxu0 0
    %1861 = vmatpush1.bf16.msra.mxu0 %v1858
    %1862 = vmatprep.subr.bf16.mxu0 0
    %1863 = vmatpush1.bf16.msra.mxu0 0
    %1864 = vmatprep.subr.bf16.mxu0 0
    %1865 = vmatpush1.bf16.msra.mxu0 0
    %1866 = vmatprep.subr.bf16.mxu0 0
    %1867 = vmatpush1.bf16.msra.mxu0 0
    %1868 = vmatprep.subr.bf16.mxu0 0
    %1869 = vmatpush1.bf16.msra.mxu0 0
    %1870 = vmatprep.subr.bf16.mxu0 0
    %1871 = vmatpush1.bf16.msra.mxu0 0
    %1872 = vmatprep.subr.bf16.mxu0 0
    %1873 = vmatpush1.bf16.msra.mxu0 0
    %1874 = vmatprep.subr.bf16.mxu0 0
    %1875 = vmatpush1.bf16.msra.mxu0 0
    %1876 = vmatprep.subr.bf16.mxu0 0
    %1877 = vmatpush1.bf16.msra.mxu0 0
    %1878 = vmatprep.subr.bf16.mxu0 0
    %1879 = vmatpush1.bf16.msra.mxu0 0
    %1880 = vmatprep.subr.bf16.mxu0 0
    %1881 = vmatpush1.bf16.msra.mxu0 0
    %1882 = vmatprep.subr.bf16.mxu0 0
    %1883 = vmatpush1.bf16.msra.mxu0 0
    %1884 = vmatprep.subr.bf16.mxu0 0
    %1885 = vmatpush1.bf16.msra.mxu0 0
    %1886 = vmatprep.subr.bf16.mxu0 0
    %1887 = vmatpush1.bf16.msra.mxu0 0
    %1888 = vmatprep.subr.bf16.mxu0 0
    %1889 = vmatpush1.bf16.msra.mxu0 0
    %1890 = vmatprep.subr.bf16.mxu0 0
    %1891 = vmatpush1.bf16.msra.mxu0 0
    %1892 = vmatprep.mubr.bf16.mxu0 0
    %1893 = vmatmul.mubr.bf16.gmra.mrb[0].mxu0 %v1855
    %v1894 = vpop.f32.mrb[0].mxu0
    %v1895 = vadd.f32 0.0, %v1894
    %v1896 = vpop.f32.mrb[0].mxu0
    %v1897 = vpop.f32.mrb[0].mxu0
    %v1898 = vpop.f32.mrb[0].mxu0
    %1899 = vdwg.mxu0
    %v1901 = vsel %vm1134, %v1621, 0
    %v1904 = vsel %vm1626, %v1132, 0
    %1906 = vmatprep.subr.bf16.mxu0 0
    %1907 = vmatpush1.bf16.msra.mxu0 %v1904
    %1908 = vmatprep.subr.bf16.mxu0 0
    %1909 = vmatpush1.bf16.msra.mxu0 0
    %1910 = vmatprep.subr.bf16.mxu0 0
    %1911 = vmatpush1.bf16.msra.mxu0 0
    %1912 = vmatprep.subr.bf16.mxu0 0
    %1913 = vmatpush1.bf16.msra.mxu0 0
    %1914 = vmatprep.subr.bf16.mxu0 0
    %1915 = vmatpush1.bf16.msra.mxu0 0
    %1916 = vmatprep.subr.bf16.mxu0 0
    %1917 = vmatpush1.bf16.msra.mxu0 0
    %1918 = vmatprep.subr.bf16.mxu0 0
    %1919 = vmatpush1.bf16.msra.mxu0 0
    %1920 = vmatprep.subr.bf16.mxu0 0
    %1921 = vmatpush1.bf16.msra.mxu0 0
    %1922 = vmatprep.subr.bf16.mxu0 0
    %1923 = vmatpush1.bf16.msra.mxu0 0
    %1924 = vmatprep.subr.bf16.mxu0 0
    %1925 = vmatpush1.bf16.msra.mxu0 0
    %1926 = vmatprep.subr.bf16.mxu0 0
    %1927 = vmatpush1.bf16.msra.mxu0 0
    %1928 = vmatprep.subr.bf16.mxu0 0
    %1929 = vmatpush1.bf16.msra.mxu0 0
    %1930 = vmatprep.subr.bf16.mxu0 0
    %1931 = vmatpush1.bf16.msra.mxu0 0
    %1932 = vmatprep.subr.bf16.mxu0 0
    %1933 = vmatpush1.bf16.msra.mxu0 0
    %1934 = vmatprep.subr.bf16.mxu0 0
    %1935 = vmatpush1.bf16.msra.mxu0 0
    %1936 = vmatprep.subr.bf16.mxu0 0
    %1937 = vmatpush1.bf16.msra.mxu0 0
    %1938 = vmatprep.mubr.bf16.mxu0 0
    %1939 = vmatmul.mubr.bf16.gmra.mrb[0].mxu0 %v1901
    %v1940 = vpop.f32.mrb[0].mxu0
    %v1941 = vadd.f32 0.0, %v1940
    %v1942 = vpop.f32.mrb[0].mxu0
    %v1943 = vpop.f32.mrb[0].mxu0
    %v1944 = vpop.f32.mrb[0].mxu0
    %1945 = vdwg.mxu0
    %v1947 = vsel %vm1134, %v1622, 0
    %v1950 = vsel %vm1626, %v1133, 0
    %1952 = vmatprep.subr.bf16.mxu0 0
    %1953 = vmatpush1.bf16.msra.mxu0 %v1950
    %1954 = vmatprep.subr.bf16.mxu0 0
    %1955 = vmatpush1.bf16.msra.mxu0 0
    %1956 = vmatprep.subr.bf16.mxu0 0
    %1957 = vmatpush1.bf16.msra.mxu0 0
    %1958 = vmatprep.subr.bf16.mxu0 0
    %1959 = vmatpush1.bf16.msra.mxu0 0
    %1960 = vmatprep.subr.bf16.mxu0 0
    %1961 = vmatpush1.bf16.msra.mxu0 0
    %1962 = vmatprep.subr.bf16.mxu0 0
    %1963 = vmatpush1.bf16.msra.mxu0 0
    %1964 = vmatprep.subr.bf16.mxu0 0
    %1965 = vmatpush1.bf16.msra.mxu0 0
    %1966 = vmatprep.subr.bf16.mxu0 0
    %1967 = vmatpush1.bf16.msra.mxu0 0
    %1968 = vmatprep.subr.bf16.mxu0 0
    %1969 = vmatpush1.bf16.msra.mxu0 0
    %1970 = vmatprep.subr.bf16.mxu0 0
    %1971 = vmatpush1.bf16.msra.mxu0 0
    %1972 = vmatprep.subr.bf16.mxu0 0
    %1973 = vmatpush1.bf16.msra.mxu0 0
    %1974 = vmatprep.subr.bf16.mxu0 0
    %1975 = vmatpush1.bf16.msra.mxu0 0
    %1976 = vmatprep.subr.bf16.mxu0 0
    %1977 = vmatpush1.bf16.msra.mxu0 0
    %1978 = vmatprep.subr.bf16.mxu0 0
    %1979 = vmatpush1.bf16.msra.mxu0 0
    %1980 = vmatprep.subr.bf16.mxu0 0
    %1981 = vmatpush1.bf16.msra.mxu0 0
    %1982 = vmatprep.subr.bf16.mxu0 0
    %1983 = vmatpush1.bf16.msra.mxu0 0
    %1984 = vmatprep.mubr.bf16.mxu0 0
    %1985 = vmatmul.mubr.bf16.gmra.mrb[0].mxu0 %v1947
    %v1986 = vpop.f32.mrb[0].mxu0
    %v1987 = vadd.f32 0.0, %v1986
    %v1988 = vpop.f32.mrb[0].mxu0
    %v1989 = vpop.f32.mrb[0].mxu0
    %v1990 = vpop.f32.mrb[0].mxu0
    %1991 = vdwg.mxu0
    %v1992 = vadd.f32 %v1575, %v1665
    %v1993 = vadd.f32 %v1576, %v1711
    %v1994 = vadd.f32 %v1577, %v1757
    %v1995 = vadd.f32 %v1578, %v1803
    %v1996 = vadd.f32 %v1579, %v1849
    %v1997 = vadd.f32 %v1580, %v1895
    %v1998 = vadd.f32 %v1581, %v1941
    %v1999 = vadd.f32 %v1582, %v1987
    %v2000 = vrcp.pop %v1607
    %v2001 = vrcp.pop %v1608
    %v2002 = vrcp.pop %v1609
    %v2003 = vrcp.pop %v1610
    %v2004 = vrcp.pop %v1611
    %v2005 = vrcp.pop %v1612
    %v2006 = vrcp.pop %v1613
    %v2007 = vrcp.pop %v1614
    %v2008 = vmul.f32 %v1992, %v2000
    %v2009 = vmul.f32 %v1993, %v2001
    %v2010 = vmul.f32 %v1994, %v2002
    %v2011 = vmul.f32 %v1995, %v2003
    %v2012 = vmul.f32 %v1996, %v2004
    %v2013 = vmul.f32 %v1997, %v2005
    %v2014 = vmul.f32 %v1998, %v2006
    %v2015 = vmul.f32 %v1999, %v2007
    %v2016 = vcombine.low %v2008, %v2010
    %v2017 = vcombine.high %v2008, %v2010
    %v2019 = vunpack.c.l.s4 1983009808
    %v2020 = vunpack.c.0.s8 %v2019
    %v2021 = vlaneseq
    %v2022 = vshrl.u32 %v2021, 7
    %v2023 = vsub.s32 %v2020, %v2022
    %v2024 = vrot.slane %v2016, %v2023
    %v2026 = vunpack.c.l.s4 1983009808
    %v2027 = vunpack.c.0.s8 %v2026
    %v2028 = vlaneseq
    %v2029 = vshrl.u32 %v2028, 7
    %v2030 = vsub.s32 %v2027, %v2029
    %v2031 = vrot.slane %v2017, %v2030
    %v2032 = vcombine.low %v2009, %v2011
    %v2033 = vcombine.high %v2009, %v2011
    %v2035 = vunpack.c.l.s4 1983009808
    %v2036 = vunpack.c.0.s8 %v2035
    %v2037 = vlaneseq
    %v2038 = vshrl.u32 %v2037, 7
    %v2039 = vsub.s32 %v2036, %v2038
    %v2040 = vrot.slane %v2032, %v2039
    %v2042 = vunpack.c.l.s4 1983009808
    %v2043 = vunpack.c.0.s8 %v2042
    %v2044 = vlaneseq
    %v2045 = vshrl.u32 %v2044, 7
    %v2046 = vsub.s32 %v2043, %v2045
    %v2047 = vrot.slane %v2033, %v2046
    %v2048 = vcombine.low %v2024, %v2040
    %v2049 = vcombine.high %v2024, %v2040
    %v2051 = vunpack.c.l.s4 1934713408
    %v2052 = vunpack.c.0.s8 %v2051
    %v2053 = vlaneseq
    %v2054 = vshrl.u32 %v2053, 7
    %v2055 = vsub.s32 %v2052, %v2054
    %v2056 = vrot.slane %v2048, %v2055
    %v2058 = vunpack.c.l.s4 1934713408
    %v2059 = vunpack.c.0.s8 %v2058
    %v2060 = vlaneseq
    %v2061 = vshrl.u32 %v2060, 7
    %v2062 = vsub.s32 %v2059, %v2061
    %v2063 = vrot.slane %v2049, %v2062
    %v2064 = vcombine.low %v2031, %v2047
    %v2065 = vcombine.high %v2031, %v2047
    %v2067 = vunpack.c.l.s4 1934713408
    %v2068 = vunpack.c.0.s8 %v2067
    %v2069 = vlaneseq
    %v2070 = vshrl.u32 %v2069, 7
    %v2071 = vsub.s32 %v2068, %v2070
    %v2072 = vrot.slane %v2064, %v2071
    %v2074 = vunpack.c.l.s4 1934713408
    %v2075 = vunpack.c.0.s8 %v2074
    %v2076 = vlaneseq
    %v2077 = vshrl.u32 %v2076, 7
    %v2078 = vsub.s32 %v2075, %v2077
    %v2079 = vrot.slane %v2065, %v2078
    %v2080 = vcombine.high %v2056, 0.0
    %v2081 = vcombine.high %v2063, 0.0
    %v2082 = vcombine.high %v2072, 0.0
    %v2083 = vcombine.high %v2079, 0.0
    %v2084 = vcombine.low %v2012, %v2014
    %v2085 = vcombine.high %v2012, %v2014
    %v2087 = vunpack.c.l.s4 1983009808
    %v2088 = vunpack.c.0.s8 %v2087
    %v2089 = vlaneseq
    %v2090 = vshrl.u32 %v2089, 7
    %v2091 = vsub.s32 %v2088, %v2090
    %v2092 = vrot.slane %v2084, %v2091
    %v2094 = vunpack.c.l.s4 1983009808
    %v2095 = vunpack.c.0.s8 %v2094
    %v2096 = vlaneseq
    %v2097 = vshrl.u32 %v2096, 7
    %v2098 = vsub.s32 %v2095, %v2097
    %v2099 = vrot.slane %v2085, %v2098
    %v2100 = vcombine.low %v2013, %v2015
    %v2101 = vcombine.high %v2013, %v2015
    %v2103 = vunpack.c.l.s4 1983009808
    %v2104 = vunpack.c.0.s8 %v2103
    %v2105 = vlaneseq
    %v2106 = vshrl.u32 %v2105, 7
    %v2107 = vsub.s32 %v2104, %v2106
    %v2108 = vrot.slane %v2100, %v2107
    %v2110 = vunpack.c.l.s4 1983009808
    %v2111 = vunpack.c.0.s8 %v2110
    %v2112 = vlaneseq
    %v2113 = vshrl.u32 %v2112, 7
    %v2114 = vsub.s32 %v2111, %v2113
    %v2115 = vrot.slane %v2101, %v2114
    %v2116 = vcombine.low %v2092, %v2108
    %v2117 = vcombine.high %v2092, %v2108
    %v2119 = vunpack.c.l.s4 1934713408
    %v2120 = vunpack.c.0.s8 %v2119
    %v2121 = vlaneseq
    %v2122 = vshrl.u32 %v2121, 7
    %v2123 = vsub.s32 %v2120, %v2122
    %v2124 = vrot.slane %v2116, %v2123
    %v2126 = vunpack.c.l.s4 1934713408
    %v2127 = vunpack.c.0.s8 %v2126
    %v2128 = vlaneseq
    %v2129 = vshrl.u32 %v2128, 7
    %v2130 = vsub.s32 %v2127, %v2129
    %v2131 = vrot.slane %v2117, %v2130
    %v2132 = vcombine.low %v2099, %v2115
    %v2133 = vcombine.high %v2099, %v2115
    %v2135 = vunpack.c.l.s4 1934713408
    %v2136 = vunpack.c.0.s8 %v2135
    %v2137 = vlaneseq
    %v2138 = vshrl.u32 %v2137, 7
    %v2139 = vsub.s32 %v2136, %v2138
    %v2140 = vrot.slane %v2132, %v2139
    %v2142 = vunpack.c.l.s4 1934713408
    %v2143 = vunpack.c.0.s8 %v2142
    %v2144 = vlaneseq
    %v2145 = vshrl.u32 %v2144, 7
    %v2146 = vsub.s32 %v2143, %v2145
    %v2147 = vrot.slane %v2133, %v2146
    %v2148 = vcombine.high %v2124, 0.0
    %v2149 = vcombine.high %v2131, 0.0
    %v2150 = vcombine.high %v2140, 0.0
    %v2151 = vcombine.high %v2147, 0.0
    %v2152 = vcombine.low %v2056, %v2063
    %v2154 = vunpack.c.l.s4 1983009808
    %v2155 = vunpack.c.0.s8 %v2154
    %v2156 = vlaneseq
    %v2157 = vshrl.u32 %v2156, 7
    %v2158 = vsub.s32 %v2155, %v2157
    %v2159 = vrot.slane %v2152, %v2158
    %v2160 = vcombine.low %v2080, %v2081
    %v2162 = vunpack.c.l.s4 1983009808
    %v2163 = vunpack.c.0.s8 %v2162
    %v2164 = vlaneseq
    %v2165 = vshrl.u32 %v2164, 7
    %v2166 = vsub.s32 %v2163, %v2165
    %v2167 = vrot.slane %v2160, %v2166
    %v2168 = vcombine.low %v2072, %v2079
    %v2170 = vunpack.c.l.s4 1983009808
    %v2171 = vunpack.c.0.s8 %v2170
    %v2172 = vlaneseq
    %v2173 = vshrl.u32 %v2172, 7
    %v2174 = vsub.s32 %v2171, %v2173
    %v2175 = vrot.slane %v2168, %v2174
    %v2176 = vcombine.low %v2082, %v2083
    %v2178 = vunpack.c.l.s4 1983009808
    %v2179 = vunpack.c.0.s8 %v2178
    %v2180 = vlaneseq
    %v2181 = vshrl.u32 %v2180, 7
    %v2182 = vsub.s32 %v2179, %v2181
    %v2183 = vrot.slane %v2176, %v2182
    %v2184 = vcombine.low %v2159, %v2167
    %v2185 = vcombine.high %v2159, %v2167
    %v2187 = vunpack.c.l.s4 1934713408
    %v2188 = vunpack.c.0.s8 %v2187
    %v2189 = vlaneseq
    %v2190 = vshrl.u32 %v2189, 7
    %v2191 = vsub.s32 %v2188, %v2190
    %v2192 = vrot.slane %v2184, %v2191
    %v2194 = vunpack.c.l.s4 1934713408
    %v2195 = vunpack.c.0.s8 %v2194
    %v2196 = vlaneseq
    %v2197 = vshrl.u32 %v2196, 7
    %v2198 = vsub.s32 %v2195, %v2197
    %v2199 = vrot.slane %v2185, %v2198
    %v2200 = vcombine.low %v2175, %v2183
    %v2201 = vcombine.high %v2175, %v2183
    %v2203 = vunpack.c.l.s4 1934713408
    %v2204 = vunpack.c.0.s8 %v2203
    %v2205 = vlaneseq
    %v2206 = vshrl.u32 %v2205, 7
    %v2207 = vsub.s32 %v2204, %v2206
    %v2208 = vrot.slane %v2200, %v2207
    %v2210 = vunpack.c.l.s4 1934713408
    %v2211 = vunpack.c.0.s8 %v2210
    %v2212 = vlaneseq
    %v2213 = vshrl.u32 %v2212, 7
    %v2214 = vsub.s32 %v2211, %v2213
    %v2215 = vrot.slane %v2201, %v2214
    %v2216 = vcombine.low %v2192, %v2208
    %v2217 = vcombine.high %v2192, %v2208
    %v2218 = vcombine.low %v2199, %v2215
    %v2219 = vcombine.high %v2199, %v2215
    %v2220 = vcombine.low %v2124, %v2131
    %v2222 = vunpack.c.l.s4 1983009808
    %v2223 = vunpack.c.0.s8 %v2222
    %v2224 = vlaneseq
    %v2225 = vshrl.u32 %v2224, 7
    %v2226 = vsub.s32 %v2223, %v2225
    %v2227 = vrot.slane %v2220, %v2226
    %v2228 = vcombine.low %v2148, %v2149
    %v2230 = vunpack.c.l.s4 1983009808
    %v2231 = vunpack.c.0.s8 %v2230
    %v2232 = vlaneseq
    %v2233 = vshrl.u32 %v2232, 7
    %v2234 = vsub.s32 %v2231, %v2233
    %v2235 = vrot.slane %v2228, %v2234
    %v2236 = vcombine.low %v2140, %v2147
    %v2238 = vunpack.c.l.s4 1983009808
    %v2239 = vunpack.c.0.s8 %v2238
    %v2240 = vlaneseq
    %v2241 = vshrl.u32 %v2240, 7
    %v2242 = vsub.s32 %v2239, %v2241
    %v2243 = vrot.slane %v2236, %v2242
    %v2244 = vcombine.low %v2150, %v2151
    %v2246 = vunpack.c.l.s4 1983009808
    %v2247 = vunpack.c.0.s8 %v2246
    %v2248 = vlaneseq
    %v2249 = vshrl.u32 %v2248, 7
    %v2250 = vsub.s32 %v2247, %v2249
    %v2251 = vrot.slane %v2244, %v2250
    %v2252 = vcombine.low %v2227, %v2235
    %v2253 = vcombine.high %v2227, %v2235
    %v2255 = vunpack.c.l.s4 1934713408
    %v2256 = vunpack.c.0.s8 %v2255
    %v2257 = vlaneseq
    %v2258 = vshrl.u32 %v2257, 7
    %v2259 = vsub.s32 %v2256, %v2258
    %v2260 = vrot.slane %v2252, %v2259
    %v2262 = vunpack.c.l.s4 1934713408
    %v2263 = vunpack.c.0.s8 %v2262
    %v2264 = vlaneseq
    %v2265 = vshrl.u32 %v2264, 7
    %v2266 = vsub.s32 %v2263, %v2265
    %v2267 = vrot.slane %v2253, %v2266
    %v2268 = vcombine.low %v2243, %v2251
    %v2269 = vcombine.high %v2243, %v2251
    %v2271 = vunpack.c.l.s4 1934713408
    %v2272 = vunpack.c.0.s8 %v2271
    %v2273 = vlaneseq
    %v2274 = vshrl.u32 %v2273, 7
    %v2275 = vsub.s32 %v2272, %v2274
    %v2276 = vrot.slane %v2268, %v2275
    %v2278 = vunpack.c.l.s4 1934713408
    %v2279 = vunpack.c.0.s8 %v2278
    %v2280 = vlaneseq
    %v2281 = vshrl.u32 %v2280, 7
    %v2282 = vsub.s32 %v2279, %v2281
    %v2283 = vrot.slane %v2269, %v2282
    %v2284 = vcombine.low %v2260, %v2276
    %v2285 = vcombine.high %v2260, %v2276
    %v2286 = vcombine.low %v2267, %v2283
    %v2287 = vcombine.high %v2267, %v2283
    %2290 = vrot.lane.b32.xlu0 %v2217, 8
    %v2291 = vpop.permute.xlu0 %2290
    %2292 = vrot.lane.b32.xlu0 %v2285, 8
    %v2293 = vpop.permute.xlu0 %2292
    %2298 = vrot.lane.b32.xlu0 %v2218, 16
    %v2299 = vpop.permute.xlu0 %2298
    %2300 = vrot.lane.b32.xlu0 %v2286, 16
    %v2301 = vpop.permute.xlu0 %2300
    %2306 = vrot.lane.b32.xlu0 %v2219, 24
    %v2307 = vpop.permute.xlu0 %2306
    %2308 = vrot.lane.b32.xlu0 %v2287, 24
    %v2309 = vpop.permute.xlu0 %2308
    %v2312 = vsel %vm1134, %v2216, %v2291
    %v2313 = vsel %vm1134, %v2284, %v2293
    %vm2314 = vcmask 130048
    %v2315 = vsel %vm2314, %v2312, %v2299
    %v2316 = vsel %vm2314, %v2313, %v2301
    %vm2317 = vcmask 195584
    %v2318 = vsel %vm2317, %v2315, %v2307
    %v2319 = vsel %vm2317, %v2316, %v2309
    %v2320 = vpack.c.bf16 %v2319, %v2318
    %v2321 = vld [vmem:[%s5] sm:$0xf]
    %v2322 = vld [vmem:[%s5 + $0x4] sm:$0xf]
    %v2323 = vld [vmem:[%s5 + $0x8] sm:$0xf]
    %v2324 = vld [vmem:[%s5 + $0xc] sm:$0xf]
    %v2325 = vld [vmem:[%s6] sm:$0x1]
    %v2327 = vlaneseq
    %v2328 = vshrl.u32 %v2327, 7
    %v2329 = vsub.s32 0, %v2328
    %v2330 = vrot.slane %v2325, %v2329
    %v2336 = vunpack.c.l.b16 %v2321
    %v2337 = vunpack.c.l.b16 %v2322
    %v2338 = vunpack.c.l.b16 %v2323
    %v2339 = vunpack.c.l.b16 %v2324
    %v2340 = vpack.c.b16 %v2337, %v2336
    %v2341 = vpack.c.b16 %v2339, %v2338
    %v2345 = vsel %vm114, %v2320, 0
    %2347 = vmatprep.subr.bf16.mxu0 0
    %2348 = vmatpush1.bf16.msra.mxu0 %v2340
    %2349 = vmatprep.subr.bf16.mxu0 0
    %2350 = vmatpush1.bf16.msra.mxu0 %v2341
    %2351 = vmatprep.subr.bf16.mxu0 0
    %2352 = vmatpush1.bf16.msra.mxu0 0
    %2353 = vmatprep.subr.bf16.mxu0 0
    %2354 = vmatpush1.bf16.msra.mxu0 0
    %2355 = vmatprep.subr.bf16.mxu0 0
    %2356 = vmatpush1.bf16.msra.mxu0 0
    %2357 = vmatprep.subr.bf16.mxu0 0
    %2358 = vmatpush1.bf16.msra.mxu0 0
    %2359 = vmatprep.subr.bf16.mxu0 0
    %2360 = vmatpush1.bf16.msra.mxu0 0
    %2361 = vmatprep.subr.bf16.mxu0 0
    %2362 = vmatpush1.bf16.msra.mxu0 0
    %2363 = vmatprep.subr.bf16.mxu0 0
    %2364 = vmatpush1.bf16.msra.mxu0 0
    %2365 = vmatprep.subr.bf16.mxu0 0
    %2366 = vmatpush1.bf16.msra.mxu0 0
    %2367 = vmatprep.subr.bf16.mxu0 0
    %2368 = vmatpush1.bf16.msra.mxu0 0
    %2369 = vmatprep.subr.bf16.mxu0 0
    %2370 = vmatpush1.bf16.msra.mxu0 0
    %2371 = vmatprep.subr.bf16.mxu0 0
    %2372 = vmatpush1.bf16.msra.mxu0 0
    %2373 = vmatprep.subr.bf16.mxu0 0
    %2374 = vmatpush1.bf16.msra.mxu0 0
    %2375 = vmatprep.subr.bf16.mxu0 0
    %2376 = vmatpush1.bf16.msra.mxu0 0
    %2377 = vmatprep.subr.bf16.mxu0 0
    %2378 = vmatpush1.bf16.msra.mxu0 0
    %2379 = vmatprep.mubr.bf16.mxu0 0
    %2380 = vmatmul.mubr.bf16.gmra.mrb[0].mxu0 %v2345
    %v2381 = vpop.f32.mrb[0].mxu0
    %v2382 = vadd.f32 %v2330, %v2381
    %v2383 = vpop.f32.mrb[0].mxu0
    %v2384 = vpop.f32.mrb[0].mxu0
    %v2385 = vadd.f32 %v2330, %v2384
    %v2386 = vpop.f32.mrb[0].mxu0
    %2387 = vdwg.mxu0
    %v2388 = vadd.f32 %v2382, %v112
    %v2389 = vadd.f32 %v2385, %v113
    %v2390 = vsel %vm114, %v2388, 0.0
    %2391 = vadd.xlane.f32.xlu0 %v2390
    %v2392 = vpop.xlane.xlu0 %2391
    %v2393 = vsel %vm114, %v2389, 0.0
    %2394 = vadd.xlane.f32.xlu0 %v2393
    %v2395 = vpop.xlane.xlu0 %2394
    %v2396 = vmul.f32 %v2392, %v121
    %v2397 = vmul.f32 %v2395, %v121
    %v2398 = vsub.f32 %v2388, %v2396
    %v2399 = vsub.f32 %v2389, %v2397
    %v2400 = vmul.f32 %v2398, %v2398
    %v2401 = vmul.f32 %v2399, %v2399
    %v2402 = vsel %vm114, %v2400, 0.0
    %2403 = vadd.xlane.f32.xlu0 %v2402
    %v2404 = vpop.xlane.xlu0 %2403
    %v2405 = vsel %vm114, %v2401, 0.0
    %2406 = vadd.xlane.f32.xlu0 %v2405
    %v2407 = vpop.xlane.xlu0 %2406
    %v2408 = vmul.f32 %v2404, %v121
    %v2409 = vmul.f32 %v2407, %v121
    %v2410 = vadd.f32 %v2408, 1e-05
    %v2411 = vadd.f32 %v2409, 1e-05
    %v2412 = vrsqrt.pop %v2410
    %v2413 = vrsqrt.pop %v2411
    %v2414 = vmul.f32 %v2398, %v2412
    %v2415 = vmul.f32 %v2399, %v2413
    %v2416 = vmul.f32 %v2414, %v146
    %v2417 = vmul.f32 %v2415, %v146
    %v2418 = vadd.f32 %v2416, %v154
    %v2419 = vadd.f32 %v2417, %v154
    %v2420 = vpack.c.bf16 %v2419, %v2418
    %v2421 = vld [vmem:[#allocation2] sm:$0xf]
    %v2422 = vld [vmem:[#allocation2 + $0x4] sm:$0xf]
    %v2423 = vld [vmem:[#allocation2 + $0x8] sm:$0xf]
    %v2424 = vld [vmem:[#allocation2 + $0xc] sm:$0xf]
    %v2425 = vld [vmem:[%s8] sm:$0x1]
    %v2427 = vlaneseq
    %v2428 = vshrl.u32 %v2427, 7
    %v2429 = vsub.s32 0, %v2428
    %v2430 = vrot.slane %v2425, %v2429
    %v2436 = vunpack.c.l.b16 %v2421
    %v2437 = vunpack.c.l.b16 %v2422
    %v2438 = vunpack.c.l.b16 %v2423
    %v2439 = vunpack.c.l.b16 %v2424
    %v2440 = vpack.c.b16 %v2437, %v2436
    %v2441 = vpack.c.b16 %v2439, %v2438
    %v2445 = vsel %vm114, %v2420, 0
    %2447 = vmatprep.subr.bf16.mxu0 0
    %2448 = vmatpush1.bf16.msra.mxu0 %v2440
    %2449 = vmatprep.subr.bf16.mxu0 0
    %2450 = vmatpush1.bf16.msra.mxu0 %v2441
    %2451 = vmatprep.subr.bf16.mxu0 0
    %2452 = vmatpush1.bf16.msra.mxu0 0
    %2453 = vmatprep.subr.bf16.mxu0 0
    %2454 = vmatpush1.bf16.msra.mxu0 0
    %2455 = vmatprep.subr.bf16.mxu0 0
    %2456 = vmatpush1.bf16.msra.mxu0 0
    %2457 = vmatprep.subr.bf16.mxu0 0
    %2458 = vmatpush1.bf16.msra.mxu0 0
    %2459 = vmatprep.subr.bf16.mxu0 0
    %2460 = vmatpush1.bf16.msra.mxu0 0
    %2461 = vmatprep.subr.bf16.mxu0 0
    %2462 = vmatpush1.bf16.msra.mxu0 0
    %2463 = vmatprep.subr.bf16.mxu0 0
    %2464 = vmatpush1.bf16.msra.mxu0 0
    %2465 = vmatprep.subr.bf16.mxu0 0
    %2466 = vmatpush1.bf16.msra.mxu0 0
    %2467 = vmatprep.subr.bf16.mxu0 0
    %2468 = vmatpush1.bf16.msra.mxu0 0
    %2469 = vmatprep.subr.bf16.mxu0 0
    %2470 = vmatpush1.bf16.msra.mxu0 0
    %2471 = vmatprep.subr.bf16.mxu0 0
    %2472 = vmatpush1.bf16.msra.mxu0 0
    %2473 = vmatprep.subr.bf16.mxu0 0
    %2474 = vmatpush1.bf16.msra.mxu0 0
    %2475 = vmatprep.subr.bf16.mxu0 0
    %2476 = vmatpush1.bf16.msra.mxu0 0
    %2477 = vmatprep.subr.bf16.mxu0 0
    %2478 = vmatpush1.bf16.msra.mxu0 0
    %2479 = vmatprep.mubr.bf16.mxu0 0
    %2480 = vmatmul.mubr.bf16.gmra.mrb[0].mxu0 %v2445
    %v2481 = vpop.f32.mrb[0].mxu0
    %v2482 = vadd.f32 %v2430, %v2481
    %v2483 = vpop.f32.mrb[0].mxu0
    %v2484 = vpop.f32.mrb[0].mxu0
    %v2485 = vadd.f32 %v2430, %v2484
    %v2486 = vpop.f32.mrb[0].mxu0
    %2487 = vdwg.mxu0
    %v2488 = vmul.f32 %v2482, 0.5
    %v2489 = vmul.f32 %v2485, 0.5
    %v2490 = vmul.f32 %v2482, 0.70710677
    %v2491 = vmul.f32 %v2485, 0.70710677
    %v2492 = verf.f32.pop %v2490
    %v2493 = verf.f32.pop %v2491
    %v2494 = vadd.f32 %v2492, 1.0
    %v2495 = vadd.f32 %v2493, 1.0
    %v2496 = vmul.f32 %v2488, %v2494
    %v2497 = vmul.f32 %v2489, %v2495
    %v2498 = vpack.c.bf16 %v2497, %v2496
    %v2499 = vld [vmem:[%s9] sm:$0xf]
    %v2500 = vld [vmem:[%s9 + $0x4] sm:$0xf]
    %v2501 = vld [vmem:[%s9 + $0x8] sm:$0xf]
    %v2502 = vld [vmem:[%s9 + $0xc] sm:$0xf]
    %v2503 = vld [vmem:[%s9 + $0x10] sm:$0xf]
    %v2504 = vld [vmem:[%s9 + $0x14] sm:$0xf]
    %v2505 = vld [vmem:[%s9 + $0x18] sm:$0xf]
    %v2506 = vld [vmem:[%s9 + $0x1c] sm:$0xf]
    %v2507 = vld [vmem:[%s10] sm:$0x1]
    %v2509 = vlaneseq
    %v2510 = vshrl.u32 %v2509, 7
    %v2511 = vsub.s32 0, %v2510
    %v2512 = vrot.slane %v2507, %v2511
    %v2522 = vunpack.c.l.b16 %v2499
    %v2523 = vunpack.c.l.b16 %v2500
    %v2524 = vunpack.c.l.b16 %v2501
    %v2525 = vunpack.c.l.b16 %v2502
    %v2526 = vunpack.c.l.b16 %v2503
    %v2527 = vunpack.c.l.b16 %v2504
    %v2528 = vunpack.c.l.b16 %v2505
    %v2529 = vunpack.c.l.b16 %v2506
    %v2530 = vpack.c.b16 %v2523, %v2522
    %v2531 = vpack.c.b16 %v2525, %v2524
    %v2532 = vpack.c.b16 %v2527, %v2526
    %v2533 = vpack.c.b16 %v2529, %v2528
    %vm2538 = vcmask 523264
    %v2540 = vsel %vm2538, %v2498, 0
    %2542 = vmatprep.subr.bf16.mxu0 0
    %2543 = vmatpush1.bf16.msra.mxu0 %v2530
    %2544 = vmatprep.subr.bf16.mxu0 0
    %2545 = vmatpush1.bf16.msra.mxu0 %v2531
    %2546 = vmatprep.subr.bf16.mxu0 0
    %2547 = vmatpush1.bf16.msra.mxu0 %v2532
    %2548 = vmatprep.subr.bf16.mxu0 0
    %2549 = vmatpush1.bf16.msra.mxu0 %v2533
    %2550 = vmatprep.subr.bf16.mxu0 0
    %2551 = vmatpush1.bf16.msra.mxu0 0
    %2552 = vmatprep.subr.bf16.mxu0 0
    %2553 = vmatpush1.bf16.msra.mxu0 0
    %2554 = vmatprep.subr.bf16.mxu0 0
    %2555 = vmatpush1.bf16.msra.mxu0 0
    %2556 = vmatprep.subr.bf16.mxu0 0
    %2557 = vmatpush1.bf16.msra.mxu0 0
    %2558 = vmatprep.subr.bf16.mxu0 0
    %2559 = vmatpush1.bf16.msra.mxu0 0
    %2560 = vmatprep.subr.bf16.mxu0 0
    %2561 = vmatpush1.bf16.msra.mxu0 0
    %2562 = vmatprep.subr.bf16.mxu0 0
    %2563 = vmatpush1.bf16.msra.mxu0 0
    %2564 = vmatprep.subr.bf16.mxu0 0
    %2565 = vmatpush1.bf16.msra.mxu0 0
    %2566 = vmatprep.subr.bf16.mxu0 0
    %2567 = vmatpush1.bf16.msra.mxu0 0
    %2568 = vmatprep.subr.bf16.mxu0 0
    %2569 = vmatpush1.bf16.msra.mxu0 0
    %2570 = vmatprep.subr.bf16.mxu0 0
    %2571 = vmatpush1.bf16.msra.mxu0 0
    %2572 = vmatprep.subr.bf16.mxu0 0
    %2573 = vmatpush1.bf16.msra.mxu0 0
    %2574 = vmatprep.mubr.bf16.mxu0 0
    %2575 = vmatmul.mubr.bf16.gmra.mrb[0].mxu0 %v2540
    %v2576 = vpop.f32.mrb[0].mxu0
    %v2577 = vadd.f32 %v2512, %v2576
    %v2578 = vpop.f32.mrb[0].mxu0
    %v2579 = vpop.f32.mrb[0].mxu0
    %v2580 = vadd.f32 %v2512, %v2579
    %v2581 = vpop.f32.mrb[0].mxu0
    %2582 = vdwg.mxu0
    %v2583 = vmul.f32 %v2577, 0.5
    %v2584 = vmul.f32 %v2580, 0.5
    %v2585 = vmul.f32 %v2577, 0.70710677
    %v2586 = vmul.f32 %v2580, 0.70710677
    %v2587 = verf.f32.pop %v2585
    %v2588 = verf.f32.pop %v2586
    %v2589 = vadd.f32 %v2587, 1.0
    %v2590 = vadd.f32 %v2588, 1.0
    %v2591 = vmul.f32 %v2583, %v2589
    %v2592 = vmul.f32 %v2584, %v2590
    %v2593 = vadd.f32 %v2591, %v2388
    %v2594 = vadd.f32 %v2592, %v2389
    %v2595 = vcombine.high %v2593, 0.0
    %v2597 = vunpack.c.l.s4 1983009808
    %v2598 = vunpack.c.0.s8 %v2597
    %v2599 = vlaneseq
    %v2600 = vshrl.u32 %v2599, 7
    %v2601 = vsub.s32 %v2598, %v2600
    %v2602 = vrot.slane %v2593, %v2601
    %v2604 = vunpack.c.l.s4 1983009808
    %v2605 = vunpack.c.0.s8 %v2604
    %v2606 = vlaneseq
    %v2607 = vshrl.u32 %v2606, 7
    %v2608 = vsub.s32 %v2605, %v2607
    %v2609 = vrot.slane %v2595, %v2608
    %v2610 = vcombine.high %v2594, 0.0
    %v2612 = vunpack.c.l.s4 1983009808
    %v2613 = vunpack.c.0.s8 %v2612
    %v2614 = vlaneseq
    %v2615 = vshrl.u32 %v2614, 7
    %v2616 = vsub.s32 %v2613, %v2615
    %v2617 = vrot.slane %v2594, %v2616
    %v2619 = vunpack.c.l.s4 1983009808
    %v2620 = vunpack.c.0.s8 %v2619
    %v2621 = vlaneseq
    %v2622 = vshrl.u32 %v2621, 7
    %v2623 = vsub.s32 %v2620, %v2622
    %v2624 = vrot.slane %v2610, %v2623
    %v2625 = vcombine.low %v2602, %v2617
    %v2626 = vcombine.high %v2602, %v2617
    %v2628 = vunpack.c.l.s4 1934713408
    %v2629 = vunpack.c.0.s8 %v2628
    %v2630 = vlaneseq
    %v2631 = vshrl.u32 %v2630, 7
    %v2632 = vsub.s32 %v2629, %v2631
    %v2633 = vrot.slane %v2625, %v2632
    %v2635 = vunpack.c.l.s4 1934713408
    %v2636 = vunpack.c.0.s8 %v2635
    %v2637 = vlaneseq
    %v2638 = vshrl.u32 %v2637, 7
    %v2639 = vsub.s32 %v2636, %v2638
    %v2640 = vrot.slane %v2626, %v2639
    %v2641 = vcombine.low %v2609, %v2624
    %v2642 = vcombine.high %v2609, %v2624
    %v2644 = vunpack.c.l.s4 1934713408
    %v2645 = vunpack.c.0.s8 %v2644
    %v2646 = vlaneseq
    %v2647 = vshrl.u32 %v2646, 7
    %v2648 = vsub.s32 %v2645, %v2647
    %v2649 = vrot.slane %v2641, %v2648
    %v2651 = vunpack.c.l.s4 1934713408
    %v2652 = vunpack.c.0.s8 %v2651
    %v2653 = vlaneseq
    %v2654 = vshrl.u32 %v2653, 7
    %v2655 = vsub.s32 %v2652, %v2654
    %v2656 = vrot.slane %v2642, %v2655
    %v2657 = vcombine.high %v2633, 0.0
    %v2658 = vcombine.high %v2640, 0.0
    %v2659 = vcombine.high %v2649, 0.0
    %v2660 = vcombine.high %v2656, 0.0
    %vm2661 = vcmask 254976
    %2662 = vst.msk [vmem:[#allocation5] sm:$0x3] %vm2661, %v2633
    %2663 = vst.msk [vmem:[#allocation5 + $0x2] sm:$0x3] %vm2661, %v2657
    %2664 = vst.msk [vmem:[#allocation5 + $0x4] sm:$0x3] %vm2661, %v2640
    %2665 = vst.msk [vmem:[#allocation5 + $0x6] sm:$0x3] %vm2661, %v2658
    %2666 = vst.msk [vmem:[#allocation5 + $0x8] sm:$0x3] %vm2661, %v2649
    %2667 = vst.msk [vmem:[#allocation5 + $0xa] sm:$0x3] %vm2661, %v2659
    %2668 = vst.msk [vmem:[#allocation5 + $0xc] sm:$0x3] %vm2661, %v2656
    %2669 = vst.msk [vmem:[#allocation5 + $0xe] sm:$0x3] %vm2661, %v2660
    // Predicated region
    $region50: #{tpu_custom_call.1} parent=1 // pred_check
      _
    $region51: #{tpu_custom_call.1} parent=1 // pred_check_branch
      %2671 = sbr.rel (0) target = $region53
    $region52: #{tpu_custom_call.1} parent=1 // pred_region
      %s2673 = ssub.s32 256, 256
      %2674 = vsyncadd [#allocation4], %s2673
      %s2675 = sshll.u32 [#allocation5], 4
      %s2676 = int_to_ptr.vmem [resolvable:$true] %s2675
      %2681 = dma.vmem_to_hbm [thread:$0]  %s2676, 256, %s11, [#allocation4], 32, 32, 2
    $region53: #{tpu_custom_call.1} parent=1 // pred_fallthru
      _
    // Predicated region
    $region54: #{tpu_custom_call.1} parent=1 // pred_check
      _
    $region55: #{tpu_custom_call.1} parent=1 // pred_check_branch
      %2683 = sbr.rel (0) target = $region57
    $region56: #{tpu_custom_call.1} parent=1 // pred_region
      %2684 = dma.done [#allocation4], 256
    $region57: #{tpu_custom_call.1} parent=1 // pred_fallthru
      _
    %2685 = vsyncpa [#allocation3], 1
    %2686 = vsyncpa [#allocation4], 1

// kernel: tpu_custom_call.1
$region0: #{tpu_custom_call.1}
  #allocation0 [shape = 'u32[]', space=smem, size = 0x4, offset = 0x4, fixed_abs, tag = 'smem constant byte address 0x4 - core index']
  #allocation1 [shape = 'u32[144,128]{1,0:T(1,128)}', space=vmem, size = 0x12000, scoped, tag = 'internal scratch']
  %s0 = inlined_call_operand.vmem [shape: f32[8,2,32], index: 0, kind: input, shape index: {}]
  %s1 = inlined_call_operand.vmem [shape: f32[1,32], index: 1, kind: input, shape index: {}]
  %s2 = inlined_call_operand.vmem [shape: f32[1,32], index: 2, kind: input, shape index: {}]
  %s3 = inlined_call_operand.vmem [shape: bf16[32,96], index: 3, kind: input, shape index: {}]
  %s4 = inlined_call_operand.vmem [shape: f32[1,96], index: 4, kind: input, shape index: {}]
  %s5 = inlined_call_operand.vmem [shape: bf16[32,32], index: 5, kind: input, shape index: {}]
  %s6 = inlined_call_operand.vmem [shape: f32[1,32], index: 6, kind: input, shape index: {}]
  %s7 = inlined_call_operand.hbm [shape: bf16[32,64], index: 7, kind: input, shape index: {}]
  %s8 = inlined_call_operand.vmem [shape: f32[1,64], index: 8, kind: input, shape index: {}]
  %s9 = inlined_call_operand.vmem [shape: bf16[64,32], index: 9, kind: input, shape index: {}]
  %s10 = inlined_call_operand.vmem [shape: f32[1,32], index: 10, kind: input, shape index: {}]
  %s11 = inlined_call_operand.hbm [shape: f32[8,2,32], index: 11, kind: output, shape index: {}]
  %s12 = sld [smem:[#allocation0]]
  $region58: #{tpu_custom_call.1} parent=0
    _
  %s14 = ssub.s32 1, %s12
  %s15 = scalar_select 0, %s14, %s12
  $region1: #{tpu_custom_call.1} parent=0
    #allocation2 [shape = 'u8[8192]{0}', space=vmem, size = 0x2000, scoped, tag = 'input window, operand 7, single buffered']
    #allocation3 [shape = 's32[1]{0}', space=sflag, size = 0x4, scoped, tag = 'scoped memory for tpu_custom_call.1']
    #allocation4 [shape = 's32[1]{0}', space=sflag, size = 0x4, scoped, tag = 'scoped memory for tpu_custom_call.1']
    #allocation5 [shape = 'u8[8192]{0}', space=vmem, size = 0x2000, scoped, tag = 'output window, operand 0, single buffered']
    %16 = vsyncpa [#allocation3], 0
    %17 = vsyncpa [#allocation4], 0
    // Predicated region
    $region2: #{tpu_custom_call.1} parent=1 // pred_check
      _
    $region3: #{tpu_custom_call.1} parent=1 // pred_check_branch
      %19 = sbr.rel (0) target = $region5
    $region4: #{tpu_custom_call.1} parent=1 // pred_region
      _
    $region5: #{tpu_custom_call.1} parent=1 // pred_fallthru
      _
    // Predicated region
    $region6: #{tpu_custom_call.1} parent=1 // pred_check
      _
    $region7: #{tpu_custom_call.1} parent=1 // pred_check_branch
      %21 = sbr.rel (0) target = $region9
    $region8: #{tpu_custom_call.1} parent=1 // pred_region
      _
    $region9: #{tpu_custom_call.1} parent=1 // pred_fallthru
      _
    // Predicated region
    $region10: #{tpu_custom_call.1} parent=1 // pred_check
      _
    $region11: #{tpu_custom_call.1} parent=1 // pred_check_branch
      %23 = sbr.rel (0) target = $region13
    $region12: #{tpu_custom_call.1} parent=1 // pred_region
      _
    $region13: #{tpu_custom_call.1} parent=1 // pred_fallthru
      _
    // Predicated region
    $region14: #{tpu_custom_call.1} parent=1 // pred_check
      _
    $region15: #{tpu_custom_call.1} parent=1 // pred_check_branch
      %25 = sbr.rel (0) target = $region17
    $region16: #{tpu_custom_call.1} parent=1 // pred_region
      _
    $region17: #{tpu_custom_call.1} parent=1 // pred_fallthru
      _
    // Predicated region
    $region18: #{tpu_custom_call.1} parent=1 // pred_check
      _
    $region19: #{tpu_custom_call.1} parent=1 // pred_check_branch
      %27 = sbr.rel (0) target = $region21
    $region20: #{tpu_custom_call.1} parent=1 // pred_region
      _
    $region21: #{tpu_custom_call.1} parent=1 // pred_fallthru
      _
    // Predicated region
    $region22: #{tpu_custom_call.1} parent=1 // pred_check
      _
    $region23: #{tpu_custom_call.1} parent=1 // pred_check_branch
      %29 = sbr.rel (0) target = $region25
    $region24: #{tpu_custom_call.1} parent=1 // pred_region
      _
    $region25: #{tpu_custom_call.1} parent=1 // pred_fallthru
      _
    // Predicated region
    $region26: #{tpu_custom_call.1} parent=1 // pred_check
      _
    $region27: #{tpu_custom_call.1} parent=1 // pred_check_branch
      %31 = sbr.rel (0) target = $region29
    $region28: #{tpu_custom_call.1} parent=1 // pred_region
      _
    $region29: #{tpu_custom_call.1} parent=1 // pred_fallthru
      _
    // Predicated region
    $region30: #{tpu_custom_call.1} parent=1 // pred_check
      _
    $region31: #{tpu_custom_call.1} parent=1 // pred_check_branch
      %33 = sbr.rel (0) target = $region33
    $region32: #{tpu_custom_call.1} parent=1 // pred_region
      %s35 = ssub.s32 256, 256
      %36 = vsyncadd [#allocation3], %s35
      %s37 = sshll.u32 [#allocation2], 4
      %s38 = int_to_ptr.vmem [resolvable:$true] %s37
      %43 = dma.hbm_to_vmem [thread:$0]  %s7, 256, %s38, [#allocation3], 64, 64, 4
    $region33: #{tpu_custom_call.1} parent=1 // pred_fallthru
      _
    // Predicated region
    $region34: #{tpu_custom_call.1} parent=1 // pred_check
      _
    $region35: #{tpu_custom_call.1} parent=1 // pred_check_branch
      %45 = sbr.rel (0) target = $region37
    $region36: #{tpu_custom_call.1} parent=1 // pred_region
      _
    $region37: #{tpu_custom_call.1} parent=1 // pred_fallthru
      _
    // Predicated region
    $region38: #{tpu_custom_call.1} parent=1 // pred_check
      _
    $region39: #{tpu_custom_call.1} parent=1 // pred_check_branch
      %47 = sbr.rel (0) target = $region41
    $region40: #{tpu_custom_call.1} parent=1 // pred_region
      _
    $region41: #{tpu_custom_call.1} parent=1 // pred_fallthru
      _
    // Predicated region
    $region42: #{tpu_custom_call.1} parent=1 // pred_check
      _
    $region43: #{tpu_custom_call.1} parent=1 // pred_check_branch
      %49 = sbr.rel (0) target = $region45
    $region44: #{tpu_custom_call.1} parent=1 // pred_region
      _
    $region45: #{tpu_custom_call.1} parent=1 // pred_fallthru
      _
    // Predicated region
    $region46: #{tpu_custom_call.1} parent=1 // pred_check
      _
    $region47: #{tpu_custom_call.1} parent=1 // pred_check_branch
      %51 = sbr.rel (0) target = $region49
    $region48: #{tpu_custom_call.1} parent=1 // pred_region
      %52 = dma.done [#allocation3], 256
    $region49: #{tpu_custom_call.1} parent=1 // pred_fallthru
      _
    %v54 = vld [vmem:[%s1] sm:$0x1]
    %v55 = vld [vmem:[%s2] sm:$0x1]
    %v56 = vld [vmem:[%s0] sm:$0x3]
    %v57 = vld [vmem:[%s0 + $0x2] sm:$0x3]
    %v58 = vld [vmem:[%s0 + $0x4] sm:$0x3]
    %v59 = vld [vmem:[%s0 + $0x6] sm:$0x3]
    %v60 = vld [vmem:[%s0 + $0x8] sm:$0x3]
    %v61 = vld [vmem:[%s0 + $0xa] sm:$0x3]
    %v62 = vld [vmem:[%s0 + $0xc] sm:$0x3]
    %v63 = vld [vmem:[%s0 + $0xe] sm:$0x3]
    %v64 = vcombine.low %v56, %v58
    %v66 = vunpack.c.l.s4 1983009808
    %v67 = vunpack.c.0.s8 %v66
    %v68 = vlaneseq
    %v69 = vshrl.u32 %v68, 7
    %v70 = vsub.s32 %v67, %v69
    %v71 = vrot.slane %v64, %v70
    %v72 = vcombine.low %v57, %v59
    %v74 = vunpack.c.l.s4 1983009808
    %v75 = vunpack.c.0.s8 %v74
    %v76 = vlaneseq
    %v77 = vshrl.u32 %v76, 7
    %v78 = vsub.s32 %v75, %v77
    %v79 = vrot.slane %v72, %v78
    %v80 = vcombine.low %v60, %v62
    %v82 = vunpack.c.l.s4 1983009808
    %v83 = vunpack.c.0.s8 %v82
    %v84 = vlaneseq
    %v85 = vshrl.u32 %v84, 7
    %v86 = vsub.s32 %v83, %v85
    %v87 = vrot.slane %v80, %v86
    %v88 = vcombine.low %v61, %v63
    %v90 = vunpack.c.l.s4 1983009808
    %v91 = vunpack.c.0.s8 %v90
    %v92 = vlaneseq
    %v93 = vshrl.u32 %v92, 7
    %v94 = vsub.s32 %v91, %v93
    %v95 = vrot.slane %v88, %v94
    %v96 = vcombine.low %v71, %v79
    %v98 = vunpack.c.l.s4 1934713408
    %v99 = vunpack.c.0.s8 %v98
    %v100 = vlaneseq
    %v101 = vshrl.u32 %v100, 7
    %v102 = vsub.s32 %v99, %v101
    %v103 = vrot.slane %v96, %v102
    %v104 = vcombine.low %v87, %v95
    %v106 = vunpack.c.l.s4 1934713408
    %v107 = vunpack.c.0.s8 %v106
    %v108 = vlaneseq
    %v109 = vshrl.u32 %v108, 7
    %v110 = vsub.s32 %v107, %v109
    %v111 = vrot.slane %v104, %v110
    %v112 = vcombine.low %v103, %v111
    %v113 = vcombine.high %v103, %v111
    %vm114 = vcmask 261120
    %v115 = vsel %vm114, %v112, 0.0
    %116 = vadd.xlane.f32.xlu0 %v115
    %v117 = vpop.xlane.xlu0 %116
    %v118 = vsel %vm114, %v113, 0.0
    %119 = vadd.xlane.f32.xlu0 %v118
    %v120 = vpop.xlane.xlu0 %119
    %v121 = vrcp.pop 32.0
    %v122 = vmul.f32 %v117, %v121
    %v123 = vmul.f32 %v120, %v121
    %v124 = vsub.f32 %v112, %v122
    %v125 = vsub.f32 %v113, %v123
    %v126 = vmul.f32 %v124, %v124
    %v127 = vmul.f32 %v125, %v125
    %v128 = vsel %vm114, %v126, 0.0
    %129 = vadd.xlane.f32.xlu0 %v128
    %v130 = vpop.xlane.xlu0 %129
    %v131 = vsel %vm114, %v127, 0.0
    %132 = vadd.xlane.f32.xlu0 %v131
    %v133 = vpop.xlane.xlu0 %132
    %v134 = vmul.f32 %v130, %v121
    %v135 = vmul.f32 %v133, %v121
    %v136 = vadd.f32 %v134, 1e-05
    %v137 = vadd.f32 %v135, 1e-05
    %v138 = vrsqrt.pop %v136
    %v139 = vrsqrt.pop %v137
    %v140 = vmul.f32 %v124, %v138
    %v141 = vmul.f32 %v125, %v139
    %v143 = vlaneseq
    %v144 = vshrl.u32 %v143, 7
    %v145 = vsub.s32 0, %v144
    %v146 = vrot.slane %v54, %v145
    %v148 = vmul.f32 %v140, %v146
    %v149 = vmul.f32 %v141, %v146
    %v151 = vlaneseq
    %v152 = vshrl.u32 %v151, 7
    %v153 = vsub.s32 0, %v152
    %v154 = vrot.slane %v55, %v153
    %v156 = vadd.f32 %v148, %v154
    %v157 = vadd.f32 %v149, %v154
    %v158 = vpack.c.bf16 %v157, %v156
    %v159 = vld [vmem:[%s3] sm:$0xf]
    %v160 = vld [vmem:[%s3 + $0x4] sm:$0xf]
    %v161 = vld [vmem:[%s3 + $0x8] sm:$0xf]
    %v162 = vld [vmem:[%s3 + $0xc] sm:$0xf]
    %v163 = vld [vmem:[%s4] sm:$0x1]
    %v165 = vlaneseq
    %v166 = vshrl.u32 %v165, 7
    %v167 = vsub.s32 0, %v166
    %v168 = vrot.slane %v163, %v167
    %v174 = vunpack.c.l.b16 %v159
    %v175 = vunpack.c.l.b16 %v160
    %v176 = vunpack.c.l.b16 %v161
    %v177 = vunpack.c.l.b16 %v162
    %v178 = vpack.c.b16 %v175, %v174
    %v179 = vpack.c.b16 %v177, %v176
    %v183 = vsel %vm114, %v158, 0
    %185 = vmatprep.subr.bf16.mxu0 0
    %186 = vmatpush1.bf16.msra.mxu0 %v178
    %187 = vmatprep.subr.bf16.mxu0 0
    %188 = vmatpush1.bf16.msra.mxu0 %v179
    %189 = vmatprep.subr.bf16.mxu0 0
    %190 = vmatpush1.bf16.msra.mxu0 0
    %191 = vmatprep.subr.bf16.mxu0 0
    %192 = vmatpush1.bf16.msra.mxu0 0
    %193 = vmatprep.subr.bf16.mxu0 0
    %194 = vmatpush1.bf16.msra.mxu0 0
    %195 = vmatprep.subr.bf16.mxu0 0
    %196 = vmatpush1.bf16.msra.mxu0 0
    %197 = vmatprep.subr.bf16.mxu0 0
    %198 = vmatpush1.bf16.msra.mxu0 0
    %199 = vmatprep.subr.bf16.mxu0 0
    %200 = vmatpush1.bf16.msra.mxu0 0
    %201 = vmatprep.subr.bf16.mxu0 0
    %202 = vmatpush1.bf16.msra.mxu0 0
    %203 = vmatprep.subr.bf16.mxu0 0
    %204 = vmatpush1.bf16.msra.mxu0 0
    %205 = vmatprep.subr.bf16.mxu0 0
    %206 = vmatpush1.bf16.msra.mxu0 0
    %207 = vmatprep.subr.bf16.mxu0 0
    %208 = vmatpush1.bf16.msra.mxu0 0
    %209 = vmatprep.subr.bf16.mxu0 0
    %210 = vmatpush1.bf16.msra.mxu0 0
    %211 = vmatprep.subr.bf16.mxu0 0
    %212 = vmatpush1.bf16.msra.mxu0 0
    %213 = vmatprep.subr.bf16.mxu0 0
    %214 = vmatpush1.bf16.msra.mxu0 0
    %215 = vmatprep.subr.bf16.mxu0 0
    %216 = vmatpush1.bf16.msra.mxu0 0
    %217 = vmatprep.mubr.bf16.mxu0 0
    %218 = vmatmul.mubr.bf16.gmra.mrb[0].mxu0 %v183
    %v219 = vpop.f32.mrb[0].mxu0
    %v220 = vadd.f32 %v168, %v219
    %v221 = vpop.f32.mrb[0].mxu0
    %v222 = vpop.f32.mrb[0].mxu0
    %v223 = vadd.f32 %v168, %v222
    %v224 = vpop.f32.mrb[0].mxu0
    %225 = vdwg.mxu0
    %228 = vrot.lane.b32.xlu0 %v220, 120
    %v229 = vpop.permute.xlu0 %228
    %230 = vrot.lane.b32.xlu0 %v223, 120
    %v231 = vpop.permute.xlu0 %230
    %234 = vrot.lane.b32.xlu0 %v220, 112
    %v235 = vpop.permute.xlu0 %234
    %236 = vrot.lane.b32.xlu0 %v223, 112
    %v237 = vpop.permute.xlu0 %236
    %240 = vrot.lane.b32.xlu0 %v220, 104
    %v241 = vpop.permute.xlu0 %240
    %242 = vrot.lane.b32.xlu0 %v223, 104
    %v243 = vpop.permute.xlu0 %242
    %v246 = vcombine.low %v220, %v235
    %v247 = vcombine.high %v220, %v235
    %v249 = vunpack.c.l.s4 1983009808
    %v250 = vunpack.c.0.s8 %v249
    %v251 = vlaneseq
    %v252 = vshrl.u32 %v251, 7
    %v253 = vsub.s32 %v250, %v252
    %v254 = vrot.slane %v246, %v253
    %v256 = vunpack.c.l.s4 1983009808
    %v257 = vunpack.c.0.s8 %v256
    %v258 = vlaneseq
    %v259 = vshrl.u32 %v258, 7
    %v260 = vsub.s32 %v257, %v259
    %v261 = vrot.slane %v247, %v260
    %v262 = vcombine.low %v229, %v241
    %v263 = vcombine.high %v229, %v241
    %v265 = vunpack.c.l.s4 1983009808
    %v266 = vunpack.c.0.s8 %v265
    %v267 = vlaneseq
    %v268 = vshrl.u32 %v267, 7
    %v269 = vsub.s32 %v266, %v268
    %v270 = vrot.slane %v262, %v269
    %v272 = vunpack.c.l.s4 1983009808
    %v273 = vunpack.c.0.s8 %v272
    %v274 = vlaneseq
    %v275 = vshrl.u32 %v274, 7
    %v276 = vsub.s32 %v273, %v275
    %v277 = vrot.slane %v263, %v276
    %v278 = vcombine.low %v254, %v270
    %v279 = vcombine.high %v254, %v270
    %v281 = vunpack.c.l.s4 1934713408
    %v282 = vunpack.c.0.s8 %v281
    %v283 = vlaneseq
    %v284 = vshrl.u32 %v283, 7
    %v285 = vsub.s32 %v282, %v284
    %v286 = vrot.slane %v278, %v285
    %v288 = vunpack.c.l.s4 1934713408
    %v289 = vunpack.c.0.s8 %v288
    %v290 = vlaneseq
    %v291 = vshrl.u32 %v290, 7
    %v292 = vsub.s32 %v289, %v291
    %v293 = vrot.slane %v279, %v292
    %v294 = vcombine.low %v261, %v277
    %v295 = vcombine.high %v261, %v277
    %v297 = vunpack.c.l.s4 1934713408
    %v298 = vunpack.c.0.s8 %v297
    %v299 = vlaneseq
    %v300 = vshrl.u32 %v299, 7
    %v301 = vsub.s32 %v298, %v300
    %v302 = vrot.slane %v294, %v301
    %v304 = vunpack.c.l.s4 1934713408
    %v305 = vunpack.c.0.s8 %v304
    %v306 = vlaneseq
    %v307 = vshrl.u32 %v306, 7
    %v308 = vsub.s32 %v305, %v307
    %v309 = vrot.slane %v295, %v308
    %v310 = vcombine.high %v286, 0.0
    %v311 = vcombine.high %v293, 0.0
    %v312 = vcombine.high %v302, 0.0
    %v313 = vcombine.high %v309, 0.0
    %v314 = vcombine.low %v223, %v237
    %v315 = vcombine.high %v223, %v237
    %v317 = vunpack.c.l.s4 1983009808
    %v318 = vunpack.c.0.s8 %v317
    %v319 = vlaneseq
    %v320 = vshrl.u32 %v319, 7
    %v321 = vsub.s32 %v318, %v320
    %v322 = vrot.slane %v314, %v321
    %v324 = vunpack.c.l.s4 1983009808
    %v325 = vunpack.c.0.s8 %v324
    %v326 = vlaneseq
    %v327 = vshrl.u32 %v326, 7
    %v328 = vsub.s32 %v325, %v327
    %v329 = vrot.slane %v315, %v328
    %v330 = vcombine.low %v231, %v243
    %v331 = vcombine.high %v231, %v243
    %v333 = vunpack.c.l.s4 1983009808
    %v334 = vunpack.c.0.s8 %v333
    %v335 = vlaneseq
    %v336 = vshrl.u32 %v335, 7
    %v337 = vsub.s32 %v334, %v336
    %v338 = vrot.slane %v330, %v337
    %v340 = vunpack.c.l.s4 1983009808
    %v341 = vunpack.c.0.s8 %v340
    %v342 = vlaneseq
    %v343 = vshrl.u32 %v342, 7
    %v344 = vsub.s32 %v341, %v343
    %v345 = vrot.slane %v331, %v344
    %v346 = vcombine.low %v322, %v338
    %v347 = vcombine.high %v322, %v338
    %v349 = vunpack.c.l.s4 1934713408
    %v350 = vunpack.c.0.s8 %v349
    %v351 = vlaneseq
    %v352 = vshrl.u32 %v351, 7
    %v353 = vsub.s32 %v350, %v352
    %v354 = vrot.slane %v346, %v353
    %v356 = vunpack.c.l.s4 1934713408
    %v357 = vunpack.c.0.s8 %v356
    %v358 = vlaneseq
    %v359 = vshrl.u32 %v358, 7
    %v360 = vsub.s32 %v357, %v359
    %v361 = vrot.slane %v347, %v360
    %v362 = vcombine.low %v329, %v345
    %v363 = vcombine.high %v329, %v345
    %v365 = vunpack.c.l.s4 1934713408
    %v366 = vunpack.c.0.s8 %v365
    %v367 = vlaneseq
    %v368 = vshrl.u32 %v367, 7
    %v369 = vsub.s32 %v366, %v368
    %v370 = vrot.slane %v362, %v369
    %v372 = vunpack.c.l.s4 1934713408
    %v373 = vunpack.c.0.s8 %v372
    %v374 = vlaneseq
    %v375 = vshrl.u32 %v374, 7
    %v376 = vsub.s32 %v373, %v375
    %v377 = vrot.slane %v363, %v376
    %v378 = vcombine.high %v354, 0.0
    %v379 = vcombine.high %v361, 0.0
    %v380 = vcombine.high %v370, 0.0
    %v381 = vcombine.high %v377, 0.0
    %v382 = vcombine.low %v286, %v293
    %v384 = vunpack.c.l.s4 1983009808
    %v385 = vunpack.c.0.s8 %v384
    %v386 = vlaneseq
    %v387 = vshrl.u32 %v386, 7
    %v388 = vsub.s32 %v385, %v387
    %v389 = vrot.slane %v382, %v388
    %v390 = vcombine.low %v310, %v311
    %v392 = vunpack.c.l.s4 1983009808
    %v393 = vunpack.c.0.s8 %v392
    %v394 = vlaneseq
    %v395 = vshrl.u32 %v394, 7
    %v396 = vsub.s32 %v393, %v395
    %v397 = vrot.slane %v390, %v396
    %v398 = vcombine.low %v302, %v309
    %v400 = vunpack.c.l.s4 1983009808
    %v401 = vunpack.c.0.s8 %v400
    %v402 = vlaneseq
    %v403 = vshrl.u32 %v402, 7
    %v404 = vsub.s32 %v401, %v403
    %v405 = vrot.slane %v398, %v404
    %v406 = vcombine.low %v312, %v313
    %v408 = vunpack.c.l.s4 1983009808
    %v409 = vunpack.c.0.s8 %v408
    %v410 = vlaneseq
    %v411 = vshrl.u32 %v410, 7
    %v412 = vsub.s32 %v409, %v411
    %v413 = vrot.slane %v406, %v412
    %v414 = vcombine.low %v389, %v397
    %v415 = vcombine.high %v389, %v397
    %v417 = vunpack.c.l.s4 1934713408
    %v418 = vunpack.c.0.s8 %v417
    %v419 = vlaneseq
    %v420 = vshrl.u32 %v419, 7
    %v421 = vsub.s32 %v418, %v420
    %v422 = vrot.slane %v414, %v421
    %v424 = vunpack.c.l.s4 1934713408
    %v425 = vunpack.c.0.s8 %v424
    %v426 = vlaneseq
    %v427 = vshrl.u32 %v426, 7
    %v428 = vsub.s32 %v425, %v427
    %v429 = vrot.slane %v415, %v428
    %v430 = vcombine.low %v405, %v413
    %v431 = vcombine.high %v405, %v413
    %v433 = vunpack.c.l.s4 1934713408
    %v434 = vunpack.c.0.s8 %v433
    %v435 = vlaneseq
    %v436 = vshrl.u32 %v435, 7
    %v437 = vsub.s32 %v434, %v436
    %v438 = vrot.slane %v430, %v437
    %v440 = vunpack.c.l.s4 1934713408
    %v441 = vunpack.c.0.s8 %v440
    %v442 = vlaneseq
    %v443 = vshrl.u32 %v442, 7
    %v444 = vsub.s32 %v441, %v443
    %v445 = vrot.slane %v431, %v444
    %v446 = vcombine.low %v422, %v438
    %v447 = vcombine.high %v422, %v438
    %v448 = vcombine.low %v429, %v445
    %v449 = vcombine.high %v429, %v445
    %v450 = vcombine.low %v354, %v361
    %v452 = vunpack.c.l.s4 1983009808
    %v453 = vunpack.c.0.s8 %v452
    %v454 = vlaneseq
    %v455 = vshrl.u32 %v454, 7
    %v456 = vsub.s32 %v453, %v455
    %v457 = vrot.slane %v450, %v456
    %v458 = vcombine.low %v378, %v379
    %v460 = vunpack.c.l.s4 1983009808
    %v461 = vunpack.c.0.s8 %v460
    %v462 = vlaneseq
    %v463 = vshrl.u32 %v462, 7
    %v464 = vsub.s32 %v461, %v463
    %v465 = vrot.slane %v458, %v464
    %v466 = vcombine.low %v370, %v377
    %v468 = vunpack.c.l.s4 1983009808
    %v469 = vunpack.c.0.s8 %v468
    %v470 = vlaneseq
    %v471 = vshrl.u32 %v470, 7
    %v472 = vsub.s32 %v469, %v471
    %v473 = vrot.slane %v466, %v472
    %v474 = vcombine.low %v380, %v381
    %v476 = vunpack.c.l.s4 1983009808
    %v477 = vunpack.c.0.s8 %v476
    %v478 = vlaneseq
    %v479 = vshrl.u32 %v478, 7
    %v480 = vsub.s32 %v477, %v479
    %v481 = vrot.slane %v474, %v480
    %v482 = vcombine.low %v457, %v465
    %v483 = vcombine.high %v457, %v465
    %v485 = vunpack.c.l.s4 1934713408
    %v486 = vunpack.c.0.s8 %v485
    %v487 = vlaneseq
    %v488 = vshrl.u32 %v487, 7
    %v489 = vsub.s32 %v486, %v488
    %v490 = vrot.slane %v482, %v489
    %v492 = vunpack.c.l.s4 1934713408
    %v493 = vunpack.c.0.s8 %v492
    %v494 = vlaneseq
    %v495 = vshrl.u32 %v494, 7
    %v496 = vsub.s32 %v493, %v495
    %v497 = vrot.slane %v483, %v496
    %v498 = vcombine.low %v473, %v481
    %v499 = vcombine.high %v473, %v481
    %v501 = vunpack.c.l.s4 1934713408
    %v502 = vunpack.c.0.s8 %v501
    %v503 = vlaneseq
    %v504 = vshrl.u32 %v503, 7
    %v505 = vsub.s32 %v502, %v504
    %v506 = vrot.slane %v498, %v505
    %v508 = vunpack.c.l.s4 1934713408
    %v509 = vunpack.c.0.s8 %v508
    %v510 = vlaneseq
    %v511 = vshrl.u32 %v510, 7
    %v512 = vsub.s32 %v509, %v511
    %v513 = vrot.slane %v499, %v512
    %v514 = vcombine.low %v490, %v506
    %v515 = vcombine.high %v490, %v506
    %v516 = vcombine.low %v497, %v513
    %v517 = vcombine.high %v497, %v513
    %v518 = vpack.c.bf16 %v446, %v446
    %v519 = vpack.c.bf16 %v447, %v447
    %v520 = vpack.c.bf16 %v448, %v448
    %v521 = vpack.c.bf16 %v449, %v449
    %v522 = vpack.c.bf16 %v514, %v514
    %v523 = vpack.c.bf16 %v515, %v515
    %v524 = vpack.c.bf16 %v516, %v516
    %v525 = vpack.c.bf16 %v517, %v517
    %526 = vrot.lane.b32.xlu0 %v220, 96
    %v527 = vpop.permute.xlu0 %526
    %528 = vrot.lane.b32.xlu0 %v223, 96
    %v529 = vpop.permute.xlu0 %528
    %530 = vrot.lane.b32.xlu0 %v229, 96
    %v531 = vpop.permute.xlu0 %530
    %532 = vrot.lane.b32.xlu0 %v231, 96
    %v533 = vpop.permute.xlu0 %532
    %534 = vrot.lane.b32.xlu0 %v235, 96
    %v535 = vpop.permute.xlu0 %534
    %536 = vrot.lane.b32.xlu0 %v237, 96
    %v537 = vpop.permute.xlu0 %536
    %538 = vrot.lane.b32.xlu0 %v241, 96
    %v539 = vpop.permute.xlu0 %538
    %540 = vrot.lane.b32.xlu0 %v243, 96
    %v541 = vpop.permute.xlu0 %540
    %v550 = vcombine.low %v527, %v535
    %v551 = vcombine.high %v527, %v535
    %v553 = vunpack.c.l.s4 1983009808
    %v554 = vunpack.c.0.s8 %v553
    %v555 = vlaneseq
    %v556 = vshrl.u32 %v555, 7
    %v557 = vsub.s32 %v554, %v556
    %v558 = vrot.slane %v550, %v557
    %v560 = vunpack.c.l.s4 1983009808
    %v561 = vunpack.c.0.s8 %v560
    %v562 = vlaneseq
    %v563 = vshrl.u32 %v562, 7
    %v564 = vsub.s32 %v561, %v563
    %v565 = vrot.slane %v551, %v564
    %v566 = vcombine.low %v531, %v539
    %v567 = vcombine.high %v531, %v539
    %v569 = vunpack.c.l.s4 1983009808
    %v570 = vunpack.c.0.s8 %v569
    %v571 = vlaneseq
    %v572 = vshrl.u32 %v571, 7
    %v573 = vsub.s32 %v570, %v572
    %v574 = vrot.slane %v566, %v573
    %v576 = vunpack.c.l.s4 1983009808
    %v577 = vunpack.c.0.s8 %v576
    %v578 = vlaneseq
    %v579 = vshrl.u32 %v578, 7
    %v580 = vsub.s32 %v577, %v579
    %v581 = vrot.slane %v567, %v580
    %v582 = vcombine.low %v558, %v574
    %v583 = vcombine.high %v558, %v574
    %v585 = vunpack.c.l.s4 1934713408
    %v586 = vunpack.c.0.s8 %v585
    %v587 = vlaneseq
    %v588 = vshrl.u32 %v587, 7
    %v589 = vsub.s32 %v586, %v588
    %v590 = vrot.slane %v582, %v589
    %v592 = vunpack.c.l.s4 1934713408
    %v593 = vunpack.c.0.s8 %v592
    %v594 = vlaneseq
    %v595 = vshrl.u32 %v594, 7
    %v596 = vsub.s32 %v593, %v595
    %v597 = vrot.slane %v583, %v596
    %v598 = vcombine.low %v565, %v581
    %v599 = vcombine.high %v565, %v581
    %v601 = vunpack.c.l.s4 1934713408
    %v602 = vunpack.c.0.s8 %v601
    %v603 = vlaneseq
    %v604 = vshrl.u32 %v603, 7
    %v605 = vsub.s32 %v602, %v604
    %v606 = vrot.slane %v598, %v605
    %v608 = vunpack.c.l.s4 1934713408
    %v609 = vunpack.c.0.s8 %v608
    %v610 = vlaneseq
    %v611 = vshrl.u32 %v610, 7
    %v612 = vsub.s32 %v609, %v611
    %v613 = vrot.slane %v599, %v612
    %v614 = vcombine.high %v590, 0.0
    %v615 = vcombine.high %v597, 0.0
    %v616 = vcombine.high %v606, 0.0
    %v617 = vcombine.high %v613, 0.0
    %v618 = vcombine.low %v529, %v537
    %v619 = vcombine.high %v529, %v537
    %v621 = vunpack.c.l.s4 1983009808
    %v622 = vunpack.c.0.s8 %v621
    %v623 = vlaneseq
    %v624 = vshrl.u32 %v623, 7
    %v625 = vsub.s32 %v622, %v624
    %v626 = vrot.slane %v618, %v625
    %v628 = vunpack.c.l.s4 1983009808
    %v629 = vunpack.c.0.s8 %v628
    %v630 = vlaneseq
    %v631 = vshrl.u32 %v630, 7
    %v632 = vsub.s32 %v629, %v631
    %v633 = vrot.slane %v619, %v632
    %v634 = vcombine.low %v533, %v541
    %v635 = vcombine.high %v533, %v541
    %v637 = vunpack.c.l.s4 1983009808
    %v638 = vunpack.c.0.s8 %v637
    %v639 = vlaneseq
    %v640 = vshrl.u32 %v639, 7
    %v641 = vsub.s32 %v638, %v640
    %v642 = vrot.slane %v634, %v641
    %v644 = vunpack.c.l.s4 1983009808
    %v645 = vunpack.c.0.s8 %v644
    %v646 = vlaneseq
    %v647 = vshrl.u32 %v646, 7
    %v648 = vsub.s32 %v645, %v647
    %v649 = vrot.slane %v635, %v648
    %v650 = vcombine.low %v626, %v642
    %v651 = vcombine.high %v626, %v642
    %v653 = vunpack.c.l.s4 1934713408
    %v654 = vunpack.c.0.s8 %v653
    %v655 = vlaneseq
    %v656 = vshrl.u32 %v655, 7
    %v657 = vsub.s32 %v654, %v656
    %v658 = vrot.slane %v650, %v657
    %v660 = vunpack.c.l.s4 1934713408
    %v661 = vunpack.c.0.s8 %v660
    %v662 = vlaneseq
    %v663 = vshrl.u32 %v662, 7
    %v664 = vsub.s32 %v661, %v663
    %v665 = vrot.slane %v651, %v664
    %v666 = vcombine.low %v633, %v649
    %v667 = vcombine.high %v633, %v649
    %v669 = vunpack.c.l.s4 1934713408
    %v670 = vunpack.c.0.s8 %v669
    %v671 = vlaneseq
    %v672 = vshrl.u32 %v671, 7
    %v673 = vsub.s32 %v670, %v672
    %v674 = vrot.slane %v666, %v673
    %v676 = vunpack.c.l.s4 1934713408
    %v677 = vunpack.c.0.s8 %v676
    %v678 = vlaneseq
    %v679 = vshrl.u32 %v678, 7
    %v680 = vsub.s32 %v677, %v679
    %v681 = vrot.slane %v667, %v680
    %v682 = vcombine.high %v658, 0.0
    %v683 = vcombine.high %v665, 0.0
    %v684 = vcombine.high %v674, 0.0
    %v685 = vcombine.high %v681, 0.0
    %v686 = vcombine.low %v590, %v597
    %v688 = vunpack.c.l.s4 1983009808
    %v689 = vunpack.c.0.s8 %v688
    %v690 = vlaneseq
    %v691 = vshrl.u32 %v690, 7
    %v692 = vsub.s32 %v689, %v691
    %v693 = vrot.slane %v686, %v692
    %v694 = vcombine.low %v614, %v615
    %v696 = vunpack.c.l.s4 1983009808
    %v697 = vunpack.c.0.s8 %v696
    %v698 = vlaneseq
    %v699 = vshrl.u32 %v698, 7
    %v700 = vsub.s32 %v697, %v699
    %v701 = vrot.slane %v694, %v700
    %v702 = vcombine.low %v606, %v613
    %v704 = vunpack.c.l.s4 1983009808
    %v705 = vunpack.c.0.s8 %v704
    %v706 = vlaneseq
    %v707 = vshrl.u32 %v706, 7
    %v708 = vsub.s32 %v705, %v707
    %v709 = vrot.slane %v702, %v708
    %v710 = vcombine.low %v616, %v617
    %v712 = vunpack.c.l.s4 1983009808
    %v713 = vunpack.c.0.s8 %v712
    %v714 = vlaneseq
    %v715 = vshrl.u32 %v714, 7
    %v716 = vsub.s32 %v713, %v715
    %v717 = vrot.slane %v710, %v716
    %v718 = vcombine.low %v693, %v701
    %v719 = vcombine.high %v693, %v701
    %v721 = vunpack.c.l.s4 1934713408
    %v722 = vunpack.c.0.s8 %v721
    %v723 = vlaneseq
    %v724 = vshrl.u32 %v723, 7
    %v725 = vsub.s32 %v722, %v724
    %v726 = vrot.slane %v718, %v725
    %v728 = vunpack.c.l.s4 1934713408
    %v729 = vunpack.c.0.s8 %v728
    %v730 = vlaneseq
    %v731 = vshrl.u32 %v730, 7
    %v732 = vsub.s32 %v729, %v731
    %v733 = vrot.slane %v719, %v732
    %v734 = vcombine.low %v709, %v717
    %v735 = vcombine.high %v709, %v717
    %v737 = vunpack.c.l.s4 1934713408
    %v738 = vunpack.c.0.s8 %v737
    %v739 = vlaneseq
    %v740 = vshrl.u32 %v739, 7
    %v741 = vsub.s32 %v738, %v740
    %v742 = vrot.slane %v734, %v741
    %v744 = vunpack.c.l.s4 1934713408
    %v745 = vunpack.c.0.s8 %v744
    %v746 = vlaneseq
    %v747 = vshrl.u32 %v746, 7
    %v748 = vsub.s32 %v745, %v747
    %v749 = vrot.slane %v735, %v748
    %v750 = vcombine.low %v726, %v742
    %v751 = vcombine.high %v726, %v742
    %v752 = vcombine.low %v733, %v749
    %v753 = vcombine.high %v733, %v749
    %v754 = vcombine.low %v658, %v665
    %v756 = vunpack.c.l.s4 1983009808
    %v757 = vunpack.c.0.s8 %v756
    %v758 = vlaneseq
    %v759 = vshrl.u32 %v758, 7
    %v760 = vsub.s32 %v757, %v759
    %v761 = vrot.slane %v754, %v760
    %v762 = vcombine.low %v682, %v683
    %v764 = vunpack.c.l.s4 1983009808
    %v765 = vunpack.c.0.s8 %v764
    %v766 = vlaneseq
    %v767 = vshrl.u32 %v766, 7
    %v768 = vsub.s32 %v765, %v767
    %v769 = vrot.slane %v762, %v768
    %v770 = vcombine.low %v674, %v681
    %v772 = vunpack.c.l.s4 1983009808
    %v773 = vunpack.c.0.s8 %v772
    %v774 = vlaneseq
    %v775 = vshrl.u32 %v774, 7
    %v776 = vsub.s32 %v773, %v775
    %v777 = vrot.slane %v770, %v776
    %v778 = vcombine.low %v684, %v685
    %v780 = vunpack.c.l.s4 1983009808
    %v781 = vunpack.c.0.s8 %v780
    %v782 = vlaneseq
    %v783 = vshrl.u32 %v782, 7
    %v784 = vsub.s32 %v781, %v783
    %v785 = vrot.slane %v778, %v784
    %v786 = vcombine.low %v761, %v769
    %v787 = vcombine.high %v761, %v769
    %v789 = vunpack.c.l.s4 1934713408
    %v790 = vunpack.c.0.s8 %v789
    %v791 = vlaneseq
    %v792 = vshrl.u32 %v791, 7
    %v793 = vsub.s32 %v790, %v792
    %v794 = vrot.slane %v786, %v793
    %v796 = vunpack.c.l.s4 1934713408
    %v797 = vunpack.c.0.s8 %v796
    %v798 = vlaneseq
    %v799 = vshrl.u32 %v798, 7
    %v800 = vsub.s32 %v797, %v799
    %v801 = vrot.slane %v787, %v800
    %v802 = vcombine.low %v777, %v785
    %v803 = vcombine.high %v777, %v785
    %v805 = vunpack.c.l.s4 1934713408
    %v806 = vunpack.c.0.s8 %v805
    %v807 = vlaneseq
    %v808 = vshrl.u32 %v807, 7
    %v809 = vsub.s32 %v806, %v808
    %v810 = vrot.slane %v802, %v809
    %v812 = vunpack.c.l.s4 1934713408
    %v813 = vunpack.c.0.s8 %v812
    %v814 = vlaneseq
    %v815 = vshrl.u32 %v814, 7
    %v816 = vsub.s32 %v813, %v815
    %v817 = vrot.slane %v803, %v816
    %v818 = vcombine.low %v794, %v810
    %v819 = vcombine.high %v794, %v810
    %v820 = vcombine.low %v801, %v817
    %v821 = vcombine.high %v801, %v817
    %v822 = vpack.c.bf16 %v750, %v750
    %v823 = vpack.c.bf16 %v751, %v751
    %v824 = vpack.c.bf16 %v752, %v752
    %v825 = vpack.c.bf16 %v753, %v753
    %v826 = vpack.c.bf16 %v818, %v818
    %v827 = vpack.c.bf16 %v819, %v819
    %v828 = vpack.c.bf16 %v820, %v820
    %v829 = vpack.c.bf16 %v821, %v821
    %830 = vrot.lane.b32.xlu0 %v220, 64
    %v831 = vpop.permute.xlu0 %830
    %832 = vrot.lane.b32.xlu0 %v223, 64
    %v833 = vpop.permute.xlu0 %832
    %834 = vrot.lane.b32.xlu0 %v229, 64
    %v835 = vpop.permute.xlu0 %834
    %836 = vrot.lane.b32.xlu0 %v231, 64
    %v837 = vpop.permute.xlu0 %836
    %838 = vrot.lane.b32.xlu0 %v235, 64
    %v839 = vpop.permute.xlu0 %838
    %840 = vrot.lane.b32.xlu0 %v237, 64
    %v841 = vpop.permute.xlu0 %840
    %842 = vrot.lane.b32.xlu0 %v241, 64
    %v843 = vpop.permute.xlu0 %842
    %844 = vrot.lane.b32.xlu0 %v243, 64
    %v845 = vpop.permute.xlu0 %844
    %v854 = vcombine.low %v831, %v839
    %v855 = vcombine.high %v831, %v839
    %v857 = vunpack.c.l.s4 1983009808
    %v858 = vunpack.c.0.s8 %v857
    %v859 = vlaneseq
    %v860 = vshrl.u32 %v859, 7
    %v861 = vsub.s32 %v858, %v860
    %v862 = vrot.slane %v854, %v861
    %v864 = vunpack.c.l.s4 1983009808
    %v865 = vunpack.c.0.s8 %v864
    %v866 = vlaneseq
    %v867 = vshrl.u32 %v866, 7
    %v868 = vsub.s32 %v865, %v867
    %v869 = vrot.slane %v855, %v868
    %v870 = vcombine.low %v835, %v843
    %v871 = vcombine.high %v835, %v843
    %v873 = vunpack.c.l.s4 1983009808
    %v874 = vunpack.c.0.s8 %v873
    %v875 = vlaneseq
    %v876 = vshrl.u32 %v875, 7
    %v877 = vsub.s32 %v874, %v876
    %v878 = vrot.slane %v870, %v877
    %v880 = vunpack.c.l.s4 1983009808
    %v881 = vunpack.c.0.s8 %v880
    %v882 = vlaneseq
    %v883 = vshrl.u32 %v882, 7
    %v884 = vsub.s32 %v881, %v883
    %v885 = vrot.slane %v871, %v884
    %v886 = vcombine.low %v862, %v878
    %v887 = vcombine.high %v862, %v878
    %v889 = vunpack.c.l.s4 1934713408
    %v890 = vunpack.c.0.s8 %v889
    %v891 = vlaneseq
    %v892 = vshrl.u32 %v891, 7
    %v893 = vsub.s32 %v890, %v892
    %v894 = vrot.slane %v886, %v893
    %v896 = vunpack.c.l.s4 1934713408
    %v897 = vunpack.c.0.s8 %v896
    %v898 = vlaneseq
    %v899 = vshrl.u32 %v898, 7
    %v900 = vsub.s32 %v897, %v899
    %v901 = vrot.slane %v887, %v900
    %v902 = vcombine.low %v869, %v885
    %v903 = vcombine.high %v869, %v885
    %v905 = vunpack.c.l.s4 1934713408
    %v906 = vunpack.c.0.s8 %v905
    %v907 = vlaneseq
    %v908 = vshrl.u32 %v907, 7
    %v909 = vsub.s32 %v906, %v908
    %v910 = vrot.slane %v902, %v909
    %v912 = vunpack.c.l.s4 1934713408
    %v913 = vunpack.c.0.s8 %v912
    %v914 = vlaneseq
    %v915 = vshrl.u32 %v914, 7
    %v916 = vsub.s32 %v913, %v915
    %v917 = vrot.slane %v903, %v916
    %v918 = vcombine.high %v894, 0.0
    %v919 = vcombine.high %v901, 0.0
    %v920 = vcombine.high %v910, 0.0
    %v921 = vcombine.high %v917, 0.0
    %v922 = vcombine.low %v833, %v841
    %v923 = vcombine.high %v833, %v841
    %v925 = vunpack.c.l.s4 1983009808
    %v926 = vunpack.c.0.s8 %v925
    %v927 = vlaneseq
    %v928 = vshrl.u32 %v927, 7
    %v929 = vsub.s32 %v926, %v928
    %v930 = vrot.slane %v922, %v929
    %v932 = vunpack.c.l.s4 1983009808
    %v933 = vunpack.c.0.s8 %v932
    %v934 = vlaneseq
    %v935 = vshrl.u32 %v934, 7
    %v936 = vsub.s32 %v933, %v935
    %v937 = vrot.slane %v923, %v936
    %v938 = vcombine.low %v837, %v845
    %v939 = vcombine.high %v837, %v845
    %v941 = vunpack.c.l.s4 1983009808
    %v942 = vunpack.c.0.s8 %v941
    %v943 = vlaneseq
    %v944 = vshrl.u32 %v943, 7
    %v945 = vsub.s32 %v942, %v944
    %v946 = vrot.slane %v938, %v945
    %v948 = vunpack.c.l.s4 1983009808
    %v949 = vunpack.c.0.s8 %v948
    %v950 = vlaneseq
    %v951 = vshrl.u32 %v950, 7
    %v952 = vsub.s32 %v949, %v951
    %v953 = vrot.slane %v939, %v952
    %v954 = vcombine.low %v930, %v946
    %v955 = vcombine.high %v930, %v946
    %v957 = vunpack.c.l.s4 1934713408
    %v958 = vunpack.c.0.s8 %v957
    %v959 = vlaneseq
    %v960 = vshrl.u32 %v959, 7
    %v961 = vsub.s32 %v958, %v960
    %v962 = vrot.slane %v954, %v961
    %v964 = vunpack.c.l.s4 1934713408
    %v965 = vunpack.c.0.s8 %v964
    %v966 = vlaneseq
    %v967 = vshrl.u32 %v966, 7
    %v968 = vsub.s32 %v965, %v967
    %v969 = vrot.slane %v955, %v968
    %v970 = vcombine.low %v937, %v953
    %v971 = vcombine.high %v937, %v953
    %v973 = vunpack.c.l.s4 1934713408
    %v974 = vunpack.c.0.s8 %v973
    %v975 = vlaneseq
    %v976 = vshrl.u32 %v975, 7
    %v977 = vsub.s32 %v974, %v976
    %v978 = vrot.slane %v970, %v977
    %v980 = vunpack.c.l.s4 1934713408
    %v981 = vunpack.c.0.s8 %v980
    %v982 = vlaneseq
    %v983 = vshrl.u32 %v982, 7
    %v984 = vsub.s32 %v981, %v983
    %v985 = vrot.slane %v971, %v984
    %v986 = vcombine.high %v962, 0.0
    %v987 = vcombine.high %v969, 0.0
    %v988 = vcombine.high %v978, 0.0
    %v989 = vcombine.high %v985, 0.0
    %v990 = vcombine.low %v894, %v901
    %v992 = vunpack.c.l.s4 1983009808
    %v993 = vunpack.c.0.s8 %v992
    %v994 = vlaneseq
    %v995 = vshrl.u32 %v994, 7
    %v996 = vsub.s32 %v993, %v995
    %v997 = vrot.slane %v990, %v996
    %v998 = vcombine.low %v918, %v919
    %v1000 = vunpack.c.l.s4 1983009808
    %v1001 = vunpack.c.0.s8 %v1000
    %v1002 = vlaneseq
    %v1003 = vshrl.u32 %v1002, 7
    %v1004 = vsub.s32 %v1001, %v1003
    %v1005 = vrot.slane %v998, %v1004
    %v1006 = vcombine.low %v910, %v917
    %v1008 = vunpack.c.l.s4 1983009808
    %v1009 = vunpack.c.0.s8 %v1008
    %v1010 = vlaneseq
    %v1011 = vshrl.u32 %v1010, 7
    %v1012 = vsub.s32 %v1009, %v1011
    %v1013 = vrot.slane %v1006, %v1012
    %v1014 = vcombine.low %v920, %v921
    %v1016 = vunpack.c.l.s4 1983009808
    %v1017 = vunpack.c.0.s8 %v1016
    %v1018 = vlaneseq
    %v1019 = vshrl.u32 %v1018, 7
    %v1020 = vsub.s32 %v1017, %v1019
    %v1021 = vrot.slane %v1014, %v1020
    %v1022 = vcombine.low %v997, %v1005
    %v1023 = vcombine.high %v997, %v1005
    %v1025 = vunpack.c.l.s4 1934713408
    %v1026 = vunpack.c.0.s8 %v1025
    %v1027 = vlaneseq
    %v1028 = vshrl.u32 %v1027, 7
    %v1029 = vsub.s32 %v1026, %v1028
    %v1030 = vrot.slane %v1022, %v1029
    %v1032 = vunpack.c.l.s4 1934713408
    %v1033 = vunpack.c.0.s8 %v1032
    %v1034 = vlaneseq
    %v1035 = vshrl.u32 %v1034, 7
    %v1036 = vsub.s32 %v1033, %v1035
    %v1037 = vrot.slane %v1023, %v1036
    %v1038 = vcombine.low %v1013, %v1021
    %v1039 = vcombine.high %v1013, %v1021
    %v1041 = vunpack.c.l.s4 1934713408
    %v1042 = vunpack.c.0.s8 %v1041
    %v1043 = vlaneseq
    %v1044 = vshrl.u32 %v1043, 7
    %v1045 = vsub.s32 %v1042, %v1044
    %v1046 = vrot.slane %v1038, %v1045
    %v1048 = vunpack.c.l.s4 1934713408
    %v1049 = vunpack.c.0.s8 %v1048
    %v1050 = vlaneseq
    %v1051 = vshrl.u32 %v1050, 7
    %v1052 = vsub.s32 %v1049, %v1051
    %v1053 = vrot.slane %v1039, %v1052
    %v1054 = vcombine.low %v1030, %v1046
    %v1055 = vcombine.high %v1030, %v1046
    %v1056 = vcombine.low %v1037, %v1053
    %v1057 = vcombine.high %v1037, %v1053
    %v1058 = vcombine.low %v962, %v969
    %v1060 = vunpack.c.l.s4 1983009808
    %v1061 = vunpack.c.0.s8 %v1060
    %v1062 = vlaneseq
    %v1063 = vshrl.u32 %v1062, 7
    %v1064 = vsub.s32 %v1061, %v1063
    %v1065 = vrot.slane %v1058, %v1064
    %v1066 = vcombine.low %v986, %v987
    %v1068 = vunpack.c.l.s4 1983009808
    %v1069 = vunpack.c.0.s8 %v1068
    %v1070 = vlaneseq
    %v1071 = vshrl.u32 %v1070, 7
    %v1072 = vsub.s32 %v1069, %v1071
    %v1073 = vrot.slane %v1066, %v1072
    %v1074 = vcombine.low %v978, %v985
    %v1076 = vunpack.c.l.s4 1983009808
    %v1077 = vunpack.c.0.s8 %v1076
    %v1078 = vlaneseq
    %v1079 = vshrl.u32 %v1078, 7
    %v1080 = vsub.s32 %v1077, %v1079
    %v1081 = vrot.slane %v1074, %v1080
    %v1082 = vcombine.low %v988, %v989
    %v1084 = vunpack.c.l.s4 1983009808
    %v1085 = vunpack.c.0.s8 %v1084
    %v1086 = vlaneseq
    %v1087 = vshrl.u32 %v1086, 7
    %v1088 = vsub.s32 %v1085, %v1087
    %v1089 = vrot.slane %v1082, %v1088
    %v1090 = vcombine.low %v1065, %v1073
    %v1091 = vcombine.high %v1065, %v1073
    %v1093 = vunpack.c.l.s4 1934713408
    %v1094 = vunpack.c.0.s8 %v1093
    %v1095 = vlaneseq
    %v1096 = vshrl.u32 %v1095, 7
    %v1097 = vsub.s32 %v1094, %v1096
    %v1098 = vrot.slane %v1090, %v1097
    %v1100 = vunpack.c.l.s4 1934713408
    %v1101 = vunpack.c.0.s8 %v1100
    %v1102 = vlaneseq
    %v1103 = vshrl.u32 %v1102, 7
    %v1104 = vsub.s32 %v1101, %v1103
    %v1105 = vrot.slane %v1091, %v1104
    %v1106 = vcombine.low %v1081, %v1089
    %v1107 = vcombine.high %v1081, %v1089
    %v1109 = vunpack.c.l.s4 1934713408
    %v1110 = vunpack.c.0.s8 %v1109
    %v1111 = vlaneseq
    %v1112 = vshrl.u32 %v1111, 7
    %v1113 = vsub.s32 %v1110, %v1112
    %v1114 = vrot.slane %v1106, %v1113
    %v1116 = vunpack.c.l.s4 1934713408
    %v1117 = vunpack.c.0.s8 %v1116
    %v1118 = vlaneseq
    %v1119 = vshrl.u32 %v1118, 7
    %v1120 = vsub.s32 %v1117, %v1119
    %v1121 = vrot.slane %v1107, %v1120
    %v1122 = vcombine.low %v1098, %v1114
    %v1123 = vcombine.high %v1098, %v1114
    %v1124 = vcombine.low %v1105, %v1121
    %v1125 = vcombine.high %v1105, %v1121
    %v1126 = vpack.c.bf16 %v1054, %v1054
    %v1127 = vpack.c.bf16 %v1055, %v1055
    %v1128 = vpack.c.bf16 %v1056, %v1056
    %v1129 = vpack.c.bf16 %v1057, %v1057
    %v1130 = vpack.c.bf16 %v1122, %v1122
    %v1131 = vpack.c.bf16 %v1123, %v1123
    %v1132 = vpack.c.bf16 %v1124, %v1124
    %v1133 = vpack.c.bf16 %v1125, %v1125
    %vm1134 = vcmask 64512
    %v1136 = vsel %vm1134, %v518, 0
    %v1139 = vsel %vm1134, %v822, 0
    %1141 = vmatprep.subr.bf16.mxu0 0
    %1142 = vmatpush1.bf16.xpose.msra.mxu0 %v1139
    %1143 = vmatprep.subr.bf16.mxu0 0
    %1144 = vmatpush1.bf16.xpose.msra.mxu0 0
    %1145 = vmatprep.subr.bf16.mxu0 0
    %1146 = vmatpush1.bf16.xpose.msra.mxu0 0
    %1147 = vmatprep.subr.bf16.mxu0 0
    %1148 = vmatpush1.bf16.xpose.msra.mxu0 0
    %1149 = vmatprep.subr.bf16.mxu0 0
    %1150 = vmatpush1.bf16.xpose.msra.mxu0 0
    %1151 = vmatprep.subr.bf16.mxu0 0
    %1152 = vmatpush1.bf16.xpose.msra.mxu0 0
    %1153 = vmatprep.subr.bf16.mxu0 0
    %1154 = vmatpush1.bf16.xpose.msra.mxu0 0
    %1155 = vmatprep.subr.bf16.mxu0 0
    %1156 = vmatpush1.bf16.xpose.msra.mxu0 0
    %1157 = vmatprep.subr.bf16.mxu0 0
    %1158 = vmatpush1.bf16.xpose.msra.mxu0 0
    %1159 = vmatprep.subr.bf16.mxu0 0
    %1160 = vmatpush1.bf16.xpose.msra.mxu0 0
    %1161 = vmatprep.subr.bf16.mxu0 0
    %1162 = vmatpush1.bf16.xpose.msra.mxu0 0
    %1163 = vmatprep.subr.bf16.mxu0 0
    %1164 = vmatpush1.bf16.xpose.msra.mxu0 0
    %1165 = vmatprep.subr.bf16.mxu0 0
    %1166 = vmatpush1.bf16.xpose.msra.mxu0 0
    %1167 = vmatprep.subr.bf16.mxu0 0
    %1168 = vmatpush1.bf16.xpose.msra.mxu0 0
    %1169 = vmatprep.subr.bf16.mxu0 0
    %1170 = vmatpush1.bf16.xpose.msra.mxu0 0
    %1171 = vmatprep.subr.bf16.mxu0 0
    %1172 = vmatpush1.bf16.xpose.msra.mxu0 0
    %1173 = vmatprep.mubr.bf16.mxu0 0
    %1174 = vmatmul.mubr.bf16.gmra.mrb[0].mxu0 %v1136
    %v1175 = vpop.f32.mrb[0].mxu0
    %v1176 = vadd.f32 0.0, %v1175
    %v1177 = vpop.f32.mrb[0].mxu0
    %v1178 = vpop.f32.mrb[0].mxu0
    %v1179 = vpop.f32.mrb[0].mxu0
    %1180 = vdwg.mxu0
    %v1182 = vsel %vm1134, %v519, 0
    %v1185 = vsel %vm1134, %v823, 0
    %1187 = vmatprep.subr.bf16.mxu0 0
    %1188 = vmatpush1.bf16.xpose.msra.mxu0 %v1185
    %1189 = vmatprep.subr.bf16.mxu0 0
    %1190 = vmatpush1.bf16.xpose.msra.mxu0 0
    %1191 = vmatprep.subr.bf16.mxu0 0
    %1192 = vmatpush1.bf16.xpose.msra.mxu0 0
    %1193 = vmatprep.subr.bf16.mxu0 0
    %1194 = vmatpush1.bf16.xpose.msra.mxu0 0
    %1195 = vmatprep.subr.bf16.mxu0 0
    %1196 = vmatpush1.bf16.xpose.msra.mxu0 0
    %1197 = vmatprep.subr.bf16.mxu0 0
    %1198 = vmatpush1.bf16.xpose.msra.mxu0 0
    %1199 = vmatprep.subr.bf16.mxu0 0
    %1200 = vmatpush1.bf16.xpose.msra.mxu0 0
    %1201 = vmatprep.subr.bf16.mxu0 0
    %1202 = vmatpush1.bf16.xpose.msra.mxu0 0
    %1203 = vmatprep.subr.bf16.mxu0 0
    %1204 = vmatpush1.bf16.xpose.msra.mxu0 0
    %1205 = vmatprep.subr.bf16.mxu0 0
    %1206 = vmatpush1.bf16.xpose.msra.mxu0 0
    %1207 = vmatprep.subr.bf16.mxu0 0
    %1208 = vmatpush1.bf16.xpose.msra.mxu0 0
    %1209 = vmatprep.subr.bf16.mxu0 0
    %1210 = vmatpush1.bf16.xpose.msra.mxu0 0
    %1211 = vmatprep.subr.bf16.mxu0 0
    %1212 = vmatpush1.bf16.xpose.msra.mxu0 0
    %1213 = vmatprep.subr.bf16.mxu0 0
    %1214 = vmatpush1.bf16.xpose.msra.mxu0 0
    %1215 = vmatprep.subr.bf16.mxu0 0
    %1216 = vmatpush1.bf16.xpose.msra.mxu0 0
    %1217 = vmatprep.subr.bf16.mxu0 0
    %1218 = vmatpush1.bf16.xpose.msra.mxu0 0
    %1219 = vmatprep.mubr.bf16.mxu0 0
    %1220 = vmatmul.mubr.bf16.gmra.mrb[0].mxu0 %v1182
    %v1221 = vpop.f32.mrb[0].mxu0
    %v1222 = vadd.f32 0.0, %v1221
    %v1223 = vpop.f32.mrb[0].mxu0
    %v1224 = vpop.f32.mrb[0].mxu0
    %v1225 = vpop.f32.mrb[0].mxu0
    %1226 = vdwg.mxu0
    %v1228 = vsel %vm1134, %v520, 0
    %v1231 = vsel %vm1134, %v824, 0
    %1233 = vmatprep.subr.bf16.mxu0 0
    %1234 = vmatpush1.bf16.xpose.msra.mxu0 %v1231
    %1235 = vmatprep.subr.bf16.mxu0 0
    %1236 = vmatpush1.bf16.xpose.msra.mxu0 0
    %1237 = vmatprep.subr.bf16.mxu0 0
    %1238 = vmatpush1.bf16.xpose.msra.mxu0 0
    %1239 = vmatprep.subr.bf16.mxu0 0
    %1240 = vmatpush1.bf16.xpose.msra.mxu0 0
    %1241 = vmatprep.subr.bf16.mxu0 0
    %1242 = vmatpush1.bf16.xpose.msra.mxu0 0
    %1243 = vmatprep.subr.bf16.mxu0 0
    %1244 = vmatpush1.bf16.xpose.msra.mxu0 0
    %1245 = vmatprep.subr.bf16.mxu0 0
    %1246 = vmatpush1.bf16.xpose.msra.mxu0 0
    %1247 = vmatprep.subr.bf16.mxu0 0
    %1248 = vmatpush1.bf16.xpose.msra.mxu0 0
    %1249 = vmatprep.subr.bf16.mxu0 0
    %1250 = vmatpush1.bf16.xpose.msra.mxu0 0
    %1251 = vmatprep.subr.bf16.mxu0 0
    %1252 = vmatpush1.bf16.xpose.msra.mxu0 0
    %1253 = vmatprep.subr.bf16.mxu0 0
    %1254 = vmatpush1.bf16.xpose.msra.mxu0 0
    %1255 = vmatprep.subr.bf16.mxu0 0
    %1256 = vmatpush1.bf16.xpose.msra.mxu0 0
    %1257 = vmatprep.subr.bf16.mxu0 0
    %1258 = vmatpush1.bf16.xpose.msra.mxu0 0
    %1259 = vmatprep.subr.bf16.mxu0 0
    %1260 = vmatpush1.bf16.xpose.msra.mxu0 0
    %1261 = vmatprep.subr.bf16.mxu0 0
    %1262 = vmatpush1.bf16.xpose.msra.mxu0 0
    %1263 = vmatprep.subr.bf16.mxu0 0
    %1264 = vmatpush1.bf16.xpose.msra.mxu0 0
    %1265 = vmatprep.mubr.bf16.mxu0 0
    %1266 = vmatmul.mubr.bf16.gmra.mrb[0].mxu0 %v1228
    %v1267 = vpop.f32.mrb[0].mxu0
    %v1268 = vadd.f32 0.0, %v1267
    %v1269 = vpop.f32.mrb[0].mxu0
    %v1270 = vpop.f32.mrb[0].mxu0
    %v1271 = vpop.f32.mrb[0].mxu0
    %1272 = vdwg.mxu0
    %v1274 = vsel %vm1134, %v521, 0
    %v1277 = vsel %vm1134, %v825, 0
    %1279 = vmatprep.subr.bf16.mxu0 0
    %1280 = vmatpush1.bf16.xpose.msra.mxu0 %v1277
    %1281 = vmatprep.subr.bf16.mxu0 0
    %1282 = vmatpush1.bf16.xpose.msra.mxu0 0
    %1283 = vmatprep.subr.bf16.mxu0 0
    %1284 = vmatpush1.bf16.xpose.msra.mxu0 0
    %1285 = vmatprep.subr.bf16.mxu0 0
    %1286 = vmatpush1.bf16.xpose.msra.mxu0 0
    %1287 = vmatprep.subr.bf16.mxu0 0
    %1288 = vmatpush1.bf16.xpose.msra.mxu0 0
    %1289 = vmatprep.subr.bf16.mxu0 0
    %1290 = vmatpush1.bf16.xpose.msra.mxu0 0
    %1291 = vmatprep.subr.bf16.mxu0 0
    %1292 = vmatpush1.bf16.xpose.msra.mxu0 0
    %1293 = vmatprep.subr.bf16.mxu0 0
    %1294 = vmatpush1.bf16.xpose.msra.mxu0 0
    %1295 = vmatprep.subr.bf16.mxu0 0
    %1296 = vmatpush1.bf16.xpose.msra.mxu0 0
    %1297 = vmatprep.subr.bf16.mxu0 0
    %1298 = vmatpush1.bf16.xpose.msra.mxu0 0
    %1299 = vmatprep.subr.bf16.mxu0 0
    %1300 = vmatpush1.bf16.xpose.msra.mxu0 0
    %1301 = vmatprep.subr.bf16.mxu0 0
    %1302 = vmatpush1.bf16.xpose.msra.mxu0 0
    %1303 = vmatprep.subr.bf16.mxu0 0
    %1304 = vmatpush1.bf16.xpose.msra.mxu0 0
    %1305 = vmatprep.subr.bf16.mxu0 0
    %1306 = vmatpush1.bf16.xpose.msra.mxu0 0
    %1307 = vmatprep.subr.bf16.mxu0 0
    %1308 = vmatpush1.bf16.xpose.msra.mxu0 0
    %1309 = vmatprep.subr.bf16.mxu0 0
    %1310 = vmatpush1.bf16.xpose.msra.mxu0 0
    %1311 = vmatprep.mubr.bf16.mxu0 0
    %1312 = vmatmul.mubr.bf16.gmra.mrb[0].mxu0 %v1274
    %v1313 = vpop.f32.mrb[0].mxu0
    %v1314 = vadd.f32 0.0, %v1313
    %v1315 = vpop.f32.mrb[0].mxu0
    %v1316 = vpop.f32.mrb[0].mxu0
    %v1317 = vpop.f32.mrb[0].mxu0
    %1318 = vdwg.mxu0
    %v1320 = vsel %vm1134, %v522, 0
    %v1323 = vsel %vm1134, %v826, 0
    %1325 = vmatprep.subr.bf16.mxu0 0
    %1326 = vmatpush1.bf16.xpose.msra.mxu0 %v1323
    %1327 = vmatprep.subr.bf16.mxu0 0
    %1328 = vmatpush1.bf16.xpose.msra.mxu0 0
    %1329 = vmatprep.subr.bf16.mxu0 0
    %1330 = vmatpush1.bf16.xpose.msra.mxu0 0
    %1331 = vmatprep.subr.bf16.mxu0 0
    %1332 = vmatpush1.bf16.xpose.msra.mxu0 0
    %1333 = vmatprep.subr.bf16.mxu0 0
    %1334 = vmatpush1.bf16.xpose.msra.mxu0 0
    %1335 = vmatprep.subr.bf16.mxu0 0
    %1336 = vmatpush1.bf16.xpose.msra.mxu0 0
    %1337 = vmatprep.subr.bf16.mxu0 0
    %1338 = vmatpush1.bf16.xpose.msra.mxu0 0
    %1339 = vmatprep.subr.bf16.mxu0 0
    %1340 = vmatpush1.bf16.xpose.msra.mxu0 0
    %1341 = vmatprep.subr.bf16.mxu0 0
    %1342 = vmatpush1.bf16.xpose.msra.mxu0 0
    %1343 = vmatprep.subr.bf16.mxu0 0
    %1344 = vmatpush1.bf16.xpose.msra.mxu0 0
    %1345 = vmatprep.subr.bf16.mxu0 0
    %1346 = vmatpush1.bf16.xpose.msra.mxu0 0
    %1347 = vmatprep.subr.bf16.mxu0 0
    %1348 = vmatpush1.bf16.xpose.msra.mxu0 0
    %1349 = vmatprep.subr.bf16.mxu0 0
    %1350 = vmatpush1.bf16.xpose.msra.mxu0 0
    %1351 = vmatprep.subr.bf16.mxu0 0
    %1352 = vmatpush1.bf16.xpose.msra.mxu0 0
    %1353 = vmatprep.subr.bf16.mxu0 0
    %1354 = vmatpush1.bf16.xpose.msra.mxu0 0
    %1355 = vmatprep.subr.bf16.mxu0 0
    %1356 = vmatpush1.bf16.xpose.msra.mxu0 0
    %1357 = vmatprep.mubr.bf16.mxu0 0
    %1358 = vmatmul.mubr.bf16.gmra.mrb[0].mxu0 %v1320
    %v1359 = vpop.f32.mrb[0].mxu0
    %v1360 = vadd.f32 0.0, %v1359
    %v1361 = vpop.f32.mrb[0].mxu0
    %v1362 = vpop.f32.mrb[0].mxu0
    %v1363 = vpop.f32.mrb[0].mxu0
    %1364 = vdwg.mxu0
    %v1366 = vsel %vm1134, %v523, 0
    %v1369 = vsel %vm1134, %v827, 0
    %1371 = vmatprep.subr.bf16.mxu0 0
    %1372 = vmatpush1.bf16.xpose.msra.mxu0 %v1369
    %1373 = vmatprep.subr.bf16.mxu0 0
    %1374 = vmatpush1.bf16.xpose.msra.mxu0 0
    %1375 = vmatprep.subr.bf16.mxu0 0
    %1376 = vmatpush1.bf16.xpose.msra.mxu0 0
    %1377 = vmatprep.subr.bf16.mxu0 0
    %1378 = vmatpush1.bf16.xpose.msra.mxu0 0
    %1379 = vmatprep.subr.bf16.mxu0 0
    %1380 = vmatpush1.bf16.xpose.msra.mxu0 0
    %1381 = vmatprep.subr.bf16.mxu0 0
    %1382 = vmatpush1.bf16.xpose.msra.mxu0 0
    %1383 = vmatprep.subr.bf16.mxu0 0
    %1384 = vmatpush1.bf16.xpose.msra.mxu0 0
    %1385 = vmatprep.subr.bf16.mxu0 0
    %1386 = vmatpush1.bf16.xpose.msra.mxu0 0
    %1387 = vmatprep.subr.bf16.mxu0 0
    %1388 = vmatpush1.bf16.xpose.msra.mxu0 0
    %1389 = vmatprep.subr.bf16.mxu0 0
    %1390 = vmatpush1.bf16.xpose.msra.mxu0 0
    %1391 = vmatprep.subr.bf16.mxu0 0
    %1392 = vmatpush1.bf16.xpose.msra.mxu0 0
    %1393 = vmatprep.subr.bf16.mxu0 0
    %1394 = vmatpush1.bf16.xpose.msra.mxu0 0
    %1395 = vmatprep.subr.bf16.mxu0 0
    %1396 = vmatpush1.bf16.xpose.msra.mxu0 0
    %1397 = vmatprep.subr.bf16.mxu0 0
    %1398 = vmatpush1.bf16.xpose.msra.mxu0 0
    %1399 = vmatprep.subr.bf16.mxu0 0
    %1400 = vmatpush1.bf16.xpose.msra.mxu0 0
    %1401 = vmatprep.subr.bf16.mxu0 0
    %1402 = vmatpush1.bf16.xpose.msra.mxu0 0
    %1403 = vmatprep.mubr.bf16.mxu0 0
    %1404 = vmatmul.mubr.bf16.gmra.mrb[0].mxu0 %v1366
    %v1405 = vpop.f32.mrb[0].mxu0
    %v1406 = vadd.f32 0.0, %v1405
    %v1407 = vpop.f32.mrb[0].mxu0
    %v1408 = vpop.f32.mrb[0].mxu0
    %v1409 = vpop.f32.mrb[0].mxu0
    %1410 = vdwg.mxu0
    %v1412 = vsel %vm1134, %v524, 0
    %v1415 = vsel %vm1134, %v828, 0
    %1417 = vmatprep.subr.bf16.mxu0 0
    %1418 = vmatpush1.bf16.xpose.msra.mxu0 %v1415
    %1419 = vmatprep.subr.bf16.mxu0 0
    %1420 = vmatpush1.bf16.xpose.msra.mxu0 0
    %1421 = vmatprep.subr.bf16.mxu0 0
    %1422 = vmatpush1.bf16.xpose.msra.mxu0 0
    %1423 = vmatprep.subr.bf16.mxu0 0
    %1424 = vmatpush1.bf16.xpose.msra.mxu0 0
    %1425 = vmatprep.subr.bf16.mxu0 0
    %1426 = vmatpush1.bf16.xpose.msra.mxu0 0
    %1427 = vmatprep.subr.bf16.mxu0 0
    %1428 = vmatpush1.bf16.xpose.msra.mxu0 0
    %1429 = vmatprep.subr.bf16.mxu0 0
    %1430 = vmatpush1.bf16.xpose.msra.mxu0 0
    %1431 = vmatprep.subr.bf16.mxu0 0
    %1432 = vmatpush1.bf16.xpose.msra.mxu0 0
    %1433 = vmatprep.subr.bf16.mxu0 0
    %1434 = vmatpush1.bf16.xpose.msra.mxu0 0
    %1435 = vmatprep.subr.bf16.mxu0 0
    %1436 = vmatpush1.bf16.xpose.msra.mxu0 0
    %1437 = vmatprep.subr.bf16.mxu0 0
    %1438 = vmatpush1.bf16.xpose.msra.mxu0 0
    %1439 = vmatprep.subr.bf16.mxu0 0
    %1440 = vmatpush1.bf16.xpose.msra.mxu0 0
    %1441 = vmatprep.subr.bf16.mxu0 0
    %1442 = vmatpush1.bf16.xpose.msra.mxu0 0
    %1443 = vmatprep.subr.bf16.mxu0 0
    %1444 = vmatpush1.bf16.xpose.msra.mxu0 0
    %1445 = vmatprep.subr.bf16.mxu0 0
    %1446 = vmatpush1.bf16.xpose.msra.mxu0 0
    %1447 = vmatprep.subr.bf16.mxu0 0
    %1448 = vmatpush1.bf16.xpose.msra.mxu0 0
    %1449 = vmatprep.mubr.bf16.mxu0 0
    %1450 = vmatmul.mubr.bf16.gmra.mrb[0].mxu0 %v1412
    %v1451 = vpop.f32.mrb[0].mxu0
    %v1452 = vadd.f32 0.0, %v1451
    %v1453 = vpop.f32.mrb[0].mxu0
    %v1454 = vpop.f32.mrb[0].mxu0
    %v1455 = vpop.f32.mrb[0].mxu0
    %1456 = vdwg.mxu0
    %v1458 = vsel %vm1134, %v525, 0
    %v1461 = vsel %vm1134, %v829, 0
    %1463 = vmatprep.subr.bf16.mxu0 0
    %1464 = vmatpush1.bf16.xpose.msra.mxu0 %v1461
    %1465 = vmatprep.subr.bf16.mxu0 0
    %1466 = vmatpush1.bf16.xpose.msra.mxu0 0
    %1467 = vmatprep.subr.bf16.mxu0 0
    %1468 = vmatpush1.bf16.xpose.msra.mxu0 0
    %1469 = vmatprep.subr.bf16.mxu0 0
    %1470 = vmatpush1.bf16.xpose.msra.mxu0 0
    %1471 = vmatprep.subr.bf16.mxu0 0
    %1472 = vmatpush1.bf16.xpose.msra.mxu0 0
    %1473 = vmatprep.subr.bf16.mxu0 0
    %1474 = vmatpush1.bf16.xpose.msra.mxu0 0
    %1475 = vmatprep.subr.bf16.mxu0 0
    %1476 = vmatpush1.bf16.xpose.msra.mxu0 0
    %1477 = vmatprep.subr.bf16.mxu0 0
    %1478 = vmatpush1.bf16.xpose.msra.mxu0 0
    %1479 = vmatprep.subr.bf16.mxu0 0
    %1480 = vmatpush1.bf16.xpose.msra.mxu0 0
    %1481 = vmatprep.subr.bf16.mxu0 0
    %1482 = vmatpush1.bf16.xpose.msra.mxu0 0
    %1483 = vmatprep.subr.bf16.mxu0 0
    %1484 = vmatpush1.bf16.xpose.msra.mxu0 0
    %1485 = vmatprep.subr.bf16.mxu0 0
    %1486 = vmatpush1.bf16.xpose.msra.mxu0 0
    %1487 = vmatprep.subr.bf16.mxu0 0
    %1488 = vmatpush1.bf16.xpose.msra.mxu0 0
    %1489 = vmatprep.subr.bf16.mxu0 0
    %1490 = vmatpush1.bf16.xpose.msra.mxu0 0
    %1491 = vmatprep.subr.bf16.mxu0 0
    %1492 = vmatpush1.bf16.xpose.msra.mxu0 0
    %1493 = vmatprep.subr.bf16.mxu0 0
    %1494 = vmatpush1.bf16.xpose.msra.mxu0 0
    %1495 = vmatprep.mubr.bf16.mxu0 0
    %1496 = vmatmul.mubr.bf16.gmra.mrb[0].mxu0 %v1458
    %v1497 = vpop.f32.mrb[0].mxu0
    %v1498 = vadd.f32 0.0, %v1497
    %v1499 = vpop.f32.mrb[0].mxu0
    %v1500 = vpop.f32.mrb[0].mxu0
    %v1501 = vpop.f32.mrb[0].mxu0
    %1502 = vdwg.mxu0
    %v1503 = vsel %vm1134, %v1176, -inf
    %1504 = vmax.xlane.f32.xlu0 %v1503
    %v1505 = vpop.xlane.xlu0 %1504
    %v1506 = vsel %vm1134, %v1222, -inf
    %1507 = vmax.xlane.f32.xlu0 %v1506
    %v1508 = vpop.xlane.xlu0 %1507
    %v1509 = vsel %vm1134, %v1268, -inf
    %1510 = vmax.xlane.f32.xlu0 %v1509
    %v1511 = vpop.xlane.xlu0 %1510
    %v1512 = vsel %vm1134, %v1314, -inf
    %1513 = vmax.xlane.f32.xlu0 %v1512
    %v1514 = vpop.xlane.xlu0 %1513
    %v1515 = vsel %vm1134, %v1360, -inf
    %1516 = vmax.xlane.f32.xlu0 %v1515
    %v1517 = vpop.xlane.xlu0 %1516
    %v1518 = vsel %vm1134, %v1406, -inf
    %1519 = vmax.xlane.f32.xlu0 %v1518
    %v1520 = vpop.xlane.xlu0 %1519
    %v1521 = vsel %vm1134, %v1452, -inf
    %1522 = vmax.xlane.f32.xlu0 %v1521
    %v1523 = vpop.xlane.xlu0 %1522
    %v1524 = vsel %vm1134, %v1498, -inf
    %1525 = vmax.xlane.f32.xlu0 %v1524
    %v1526 = vpop.xlane.xlu0 %1525
    %v1527 = vsub.f32 -inf, %v1505
    %v1528 = vsub.f32 -inf, %v1508
    %v1529 = vsub.f32 -inf, %v1511
    %v1530 = vsub.f32 -inf, %v1514
    %v1531 = vsub.f32 -inf, %v1517
    %v1532 = vsub.f32 -inf, %v1520
    %v1533 = vsub.f32 -inf, %v1523
    %v1534 = vsub.f32 -inf, %v1526
    %v1535 = vmul.f32 %v1527, 1.442695
    %v1536 = vpow.pop %v1535
    %v1537 = vmul.f32 %v1528, 1.442695
    %v1538 = vpow.pop %v1537
    %v1539 = vmul.f32 %v1529, 1.442695
    %v1540 = vpow.pop %v1539
    %v1541 = vmul.f32 %v1530, 1.442695
    %v1542 = vpow.pop %v1541
    %v1543 = vmul.f32 %v1531, 1.442695
    %v1544 = vpow.pop %v1543
    %v1545 = vmul.f32 %v1532, 1.442695
    %v1546 = vpow.pop %v1545
    %v1547 = vmul.f32 %v1533, 1.442695
    %v1548 = vpow.pop %v1547
    %v1549 = vmul.f32 %v1534, 1.442695
    %v1550 = vpow.pop %v1549
    %v1551 = vsub.f32 %v1176, %v1505
    %v1552 = vsub.f32 %v1222, %v1508
    %v1553 = vsub.f32 %v1268, %v1511
    %v1554 = vsub.f32 %v1314, %v1514
    %v1555 = vsub.f32 %v1360, %v1517
    %v1556 = vsub.f32 %v1406, %v1520
    %v1557 = vsub.f32 %v1452, %v1523
    %v1558 = vsub.f32 %v1498, %v1526
    %v1559 = vmul.f32 %v1551, 1.442695
    %v1560 = vpow.pop %v1559
    %v1561 = vmul.f32 %v1552, 1.442695
    %v1562 = vpow.pop %v1561
    %v1563 = vmul.f32 %v1553, 1.442695
    %v1564 = vpow.pop %v1563
    %v1565 = vmul.f32 %v1554, 1.442695
    %v1566 = vpow.pop %v1565
    %v1567 = vmul.f32 %v1555, 1.442695
    %v1568 = vpow.pop %v1567
    %v1569 = vmul.f32 %v1556, 1.442695
    %v1570 = vpow.pop %v1569
    %v1571 = vmul.f32 %v1557, 1.442695
    %v1572 = vpow.pop %v1571
    %v1573 = vmul.f32 %v1558, 1.442695
    %v1574 = vpow.pop %v1573
    %v1575 = vmul.f32 %v1536, 0.0
    %v1576 = vmul.f32 %v1538, 0.0
    %v1577 = vmul.f32 %v1540, 0.0
    %v1578 = vmul.f32 %v1542, 0.0
    %v1579 = vmul.f32 %v1544, 0.0
    %v1580 = vmul.f32 %v1546, 0.0
    %v1581 = vmul.f32 %v1548, 0.0
    %v1582 = vmul.f32 %v1550, 0.0
    %v1583 = vsel %vm1134, %v1560, 0.0
    %1584 = vadd.xlane.f32.xlu0 %v1583
    %v1585 = vpop.xlane.xlu0 %1584
    %v1586 = vsel %vm1134, %v1562, 0.0
    %1587 = vadd.xlane.f32.xlu0 %v1586
    %v1588 = vpop.xlane.xlu0 %1587
    %v1589 = vsel %vm1134, %v1564, 0.0
    %1590 = vadd.xlane.f32.xlu0 %v1589
    %v1591 = vpop.xlane.xlu0 %1590
    %v1592 = vsel %vm1134, %v1566, 0.0
    %1593 = vadd.xlane.f32.xlu0 %v1592
    %v1594 = vpop.xlane.xlu0 %1593
    %v1595 = vsel %vm1134, %v1568, 0.0
    %1596 = vadd.xlane.f32.xlu0 %v1595
    %v1597 = vpop.xlane.xlu0 %1596
    %v1598 = vsel %vm1134, %v1570, 0.0
    %1599 = vadd.xlane.f32.xlu0 %v1598
    %v1600 = vpop.xlane.xlu0 %1599
    %v1601 = vsel %vm1134, %v1572, 0.0
    %1602 = vadd.xlane.f32.xlu0 %v1601
    %v1603 = vpop.xlane.xlu0 %1602
    %v1604 = vsel %vm1134, %v1574, 0.0
    %1605 = vadd.xlane.f32.xlu0 %v1604
    %v1606 = vpop.xlane.xlu0 %1605
    %v1607 = vadd.f32 %v1575, %v1585
    %v1608 = vadd.f32 %v1576, %v1588
    %v1609 = vadd.f32 %v1577, %v1591
    %v1610 = vadd.f32 %v1578, %v1594
    %v1611 = vadd.f32 %v1579, %v1597
    %v1612 = vadd.f32 %v1580, %v1600
    %v1613 = vadd.f32 %v1581, %v1603
    %v1614 = vadd.f32 %v1582, %v1606
    %v1615 = vpack.c.bf16 %v1560, %v1560
    %v1616 = vpack.c.bf16 %v1562, %v1562
    %v1617 = vpack.c.bf16 %v1564, %v1564
    %v1618 = vpack.c.bf16 %v1566, %v1566
    %v1619 = vpack.c.bf16 %v1568, %v1568
    %v1620 = vpack.c.bf16 %v1570, %v1570
    %v1621 = vpack.c.bf16 %v1572, %v1572
    %v1622 = vpack.c.bf16 %v1574, %v1574
    %v1624 = vsel %vm1134, %v1615, 0
    %vm1626 = vcmask 1043456
    %v1628 = vsel %vm1626, %v1126, 0
    %1630 = vmatprep.subr.bf16.mxu0 0
    %1631 = vmatpush1.bf16.msra.mxu0 %v1628
    %1632 = vmatprep.subr.bf16.mxu0 0
    %1633 = vmatpush1.bf16.msra.mxu0 0
    %1634 = vmatprep.subr.bf16.mxu0 0
    %1635 = vmatpush1.bf16.msra.mxu0 0
    %1636 = vmatprep.subr.bf16.mxu0 0
    %1637 = vmatpush1.bf16.msra.mxu0 0
    %1638 = vmatprep.subr.bf16.mxu0 0
    %1639 = vmatpush1.bf16.msra.mxu0 0
    %1640 = vmatprep.subr.bf16.mxu0 0
    %1641 = vmatpush1.bf16.msra.mxu0 0
    %1642 = vmatprep.subr.bf16.mxu0 0
    %1643 = vmatpush1.bf16.msra.mxu0 0
    %1644 = vmatprep.subr.bf16.mxu0 0
    %1645 = vmatpush1.bf16.msra.mxu0 0
    %1646 = vmatprep.subr.bf16.mxu0 0
    %1647 = vmatpush1.bf16.msra.mxu0 0
    %1648 = vmatprep.subr.bf16.mxu0 0
    %1649 = vmatpush1.bf16.msra.mxu0 0
    %1650 = vmatprep.subr.bf16.mxu0 0
    %1651 = vmatpush1.bf16.msra.mxu0 0
    %1652 = vmatprep.subr.bf16.mxu0 0
    %1653 = vmatpush1.bf16.msra.mxu0 0
    %1654 = vmatprep.subr.bf16.mxu0 0
    %1655 = vmatpush1.bf16.msra.mxu0 0
    %1656 = vmatprep.subr.bf16.mxu0 0
    %1657 = vmatpush1.bf16.msra.mxu0 0
    %1658 = vmatprep.subr.bf16.mxu0 0
    %1659 = vmatpush1.bf16.msra.mxu0 0
    %1660 = vmatprep.subr.bf16.mxu0 0
    %1661 = vmatpush1.bf16.msra.mxu0 0
    %1662 = vmatprep.mubr.bf16.mxu0 0
    %1663 = vmatmul.mubr.bf16.gmra.mrb[0].mxu0 %v1624
    %v1664 = vpop.f32.mrb[0].mxu0
    %v1665 = vadd.f32 0.0, %v1664
    %v1666 = vpop.f32.mrb[0].mxu0
    %v1667 = vpop.f32.mrb[0].mxu0
    %v1668 = vpop.f32.mrb[0].mxu0
    %1669 = vdwg.mxu0
    %v1671 = vsel %vm1134, %v1616, 0
    %v1674 = vsel %vm1626, %v1127, 0
    %1676 = vmatprep.subr.bf16.mxu0 0
    %1677 = vmatpush1.bf16.msra.mxu0 %v1674
    %1678 = vmatprep.subr.bf16.mxu0 0
    %1679 = vmatpush1.bf16.msra.mxu0 0
    %1680 = vmatprep.subr.bf16.mxu0 0
    %1681 = vmatpush1.bf16.msra.mxu0 0
    %1682 = vmatprep.subr.bf16.mxu0 0
    %1683 = vmatpush1.bf16.msra.mxu0 0
    %1684 = vmatprep.subr.bf16.mxu0 0
    %1685 = vmatpush1.bf16.msra.mxu0 0
    %1686 = vmatprep.subr.bf16.mxu0 0
    %1687 = vmatpush1.bf16.msra.mxu0 0
    %1688 = vmatprep.subr.bf16.mxu0 0
    %1689 = vmatpush1.bf16.msra.mxu0 0
    %1690 = vmatprep.subr.bf16.mxu0 0
    %1691 = vmatpush1.bf16.msra.mxu0 0
    %1692 = vmatprep.subr.bf16.mxu0 0
    %1693 = vmatpush1.bf16.msra.mxu0 0
    %1694 = vmatprep.subr.bf16.mxu0 0
    %1695 = vmatpush1.bf16.msra.mxu0 0
    %1696 = vmatprep.subr.bf16.mxu0 0
    %1697 = vmatpush1.bf16.msra.mxu0 0
    %1698 = vmatprep.subr.bf16.mxu0 0
    %1699 = vmatpush1.bf16.msra.mxu0 0
    %1700 = vmatprep.subr.bf16.mxu0 0
    %1701 = vmatpush1.bf16.msra.mxu0 0
    %1702 = vmatprep.subr.bf16.mxu0 0
    %1703 = vmatpush1.bf16.msra.mxu0 0
    %1704 = vmatprep.subr.bf16.mxu0 0
    %1705 = vmatpush1.bf16.msra.mxu0 0
    %1706 = vmatprep.subr.bf16.mxu0 0
    %1707 = vmatpush1.bf16.msra.mxu0 0
    %1708 = vmatprep.mubr.bf16.mxu0 0
    %1709 = vmatmul.mubr.bf16.gmra.mrb[0].mxu0 %v1671
    %v1710 = vpop.f32.mrb[0].mxu0
    %v1711 = vadd.f32 0.0, %v1710
    %v1712 = vpop.f32.mrb[0].mxu0
    %v1713 = vpop.f32.mrb[0].mxu0
    %v1714 = vpop.f32.mrb[0].mxu0
    %1715 = vdwg.mxu0
    %v1717 = vsel %vm1134, %v1617, 0
    %v1720 = vsel %vm1626, %v1128, 0
    %1722 = vmatprep.subr.bf16.mxu0 0
    %1723 = vmatpush1.bf16.msra.mxu0 %v1720
    %1724 = vmatprep.subr.bf16.mxu0 0
    %1725 = vmatpush1.bf16.msra.mxu0 0
    %1726 = vmatprep.subr.bf16.mxu0 0
    %1727 = vmatpush1.bf16.msra.mxu0 0
    %1728 = vmatprep.subr.bf16.mxu0 0
    %1729 = vmatpush1.bf16.msra.mxu0 0
    %1730 = vmatprep.subr.bf16.mxu0 0
    %1731 = vmatpush1.bf16.msra.mxu0 0
    %1732 = vmatprep.subr.bf16.mxu0 0
    %1733 = vmatpush1.bf16.msra.mxu0 0
    %1734 = vmatprep.subr.bf16.mxu0 0
    %1735 = vmatpush1.bf16.msra.mxu0 0
    %1736 = vmatprep.subr.bf16.mxu0 0
    %1737 = vmatpush1.bf16.msra.mxu0 0
    %1738 = vmatprep.subr.bf16.mxu0 0
    %1739 = vmatpush1.bf16.msra.mxu0 0
    %1740 = vmatprep.subr.bf16.mxu0 0
    %1741 = vmatpush1.bf16.msra.mxu0 0
    %1742 = vmatprep.subr.bf16.mxu0 0
    %1743 = vmatpush1.bf16.msra.mxu0 0
    %1744 = vmatprep.subr.bf16.mxu0 0
    %1745 = vmatpush1.bf16.msra.mxu0 0
    %1746 = vmatprep.subr.bf16.mxu0 0
    %1747 = vmatpush1.bf16.msra.mxu0 0
    %1748 = vmatprep.subr.bf16.mxu0 0
    %1749 = vmatpush1.bf16.msra.mxu0 0
    %1750 = vmatprep.subr.bf16.mxu0 0
    %1751 = vmatpush1.bf16.msra.mxu0 0
    %1752 = vmatprep.subr.bf16.mxu0 0
    %1753 = vmatpush1.bf16.msra.mxu0 0
    %1754 = vmatprep.mubr.bf16.mxu0 0
    %1755 = vmatmul.mubr.bf16.gmra.mrb[0].mxu0 %v1717
    %v1756 = vpop.f32.mrb[0].mxu0
    %v1757 = vadd.f32 0.0, %v1756
    %v1758 = vpop.f32.mrb[0].mxu0
    %v1759 = vpop.f32.mrb[0].mxu0
    %v1760 = vpop.f32.mrb[0].mxu0
    %1761 = vdwg.mxu0
    %v1763 = vsel %vm1134, %v1618, 0
    %v1766 = vsel %vm1626, %v1129, 0
    %1768 = vmatprep.subr.bf16.mxu0 0
    %1769 = vmatpush1.bf16.msra.mxu0 %v1766
    %1770 = vmatprep.subr.bf16.mxu0 0
    %1771 = vmatpush1.bf16.msra.mxu0 0
    %1772 = vmatprep.subr.bf16.mxu0 0
    %1773 = vmatpush1.bf16.msra.mxu0 0
    %1774 = vmatprep.subr.bf16.mxu0 0
    %1775 = vmatpush1.bf16.msra.mxu0 0
    %1776 = vmatprep.subr.bf16.mxu0 0
    %1777 = vmatpush1.bf16.msra.mxu0 0
    %1778 = vmatprep.subr.bf16.mxu0 0
    %1779 = vmatpush1.bf16.msra.mxu0 0
    %1780 = vmatprep.subr.bf16.mxu0 0
    %1781 = vmatpush1.bf16.msra.mxu0 0
    %1782 = vmatprep.subr.bf16.mxu0 0
    %1783 = vmatpush1.bf16.msra.mxu0 0
    %1784 = vmatprep.subr.bf16.mxu0 0
    %1785 = vmatpush1.bf16.msra.mxu0 0
    %1786 = vmatprep.subr.bf16.mxu0 0
    %1787 = vmatpush1.bf16.msra.mxu0 0
    %1788 = vmatprep.subr.bf16.mxu0 0
    %1789 = vmatpush1.bf16.msra.mxu0 0
    %1790 = vmatprep.subr.bf16.mxu0 0
    %1791 = vmatpush1.bf16.msra.mxu0 0
    %1792 = vmatprep.subr.bf16.mxu0 0
    %1793 = vmatpush1.bf16.msra.mxu0 0
    %1794 = vmatprep.subr.bf16.mxu0 0
    %1795 = vmatpush1.bf16.msra.mxu0 0
    %1796 = vmatprep.subr.bf16.mxu0 0
    %1797 = vmatpush1.bf16.msra.mxu0 0
    %1798 = vmatprep.subr.bf16.mxu0 0
    %1799 = vmatpush1.bf16.msra.mxu0 0
    %1800 = vmatprep.mubr.bf16.mxu0 0
    %1801 = vmatmul.mubr.bf16.gmra.mrb[0].mxu0 %v1763
    %v1802 = vpop.f32.mrb[0].mxu0
    %v1803 = vadd.f32 0.0, %v1802
    %v1804 = vpop.f32.mrb[0].mxu0
    %v1805 = vpop.f32.mrb[0].mxu0
    %v1806 = vpop.f32.mrb[0].mxu0
    %1807 = vdwg.mxu0
    %v1809 = vsel %vm1134, %v1619, 0
    %v1812 = vsel %vm1626, %v1130, 0
    %1814 = vmatprep.subr.bf16.mxu0 0
    %1815 = vmatpush1.bf16.msra.mxu0 %v1812
    %1816 = vmatprep.subr.bf16.mxu0 0
    %1817 = vmatpush1.bf16.msra.mxu0 0
    %1818 = vmatprep.subr.bf16.mxu0 0
    %1819 = vmatpush1.bf16.msra.mxu0 0
    %1820 = vmatprep.subr.bf16.mxu0 0
    %1821 = vmatpush1.bf16.msra.mxu0 0
    %1822 = vmatprep.subr.bf16.mxu0 0
    %1823 = vmatpush1.bf16.msra.mxu0 0
    %1824 = vmatprep.subr.bf16.mxu0 0
    %1825 = vmatpush1.bf16.msra.mxu0 0
    %1826 = vmatprep.subr.bf16.mxu0 0
    %1827 = vmatpush1.bf16.msra.mxu0 0
    %1828 = vmatprep.subr.bf16.mxu0 0
    %1829 = vmatpush1.bf16.msra.mxu0 0
    %1830 = vmatprep.subr.bf16.mxu0 0
    %1831 = vmatpush1.bf16.msra.mxu0 0
    %1832 = vmatprep.subr.bf16.mxu0 0
    %1833 = vmatpush1.bf16.msra.mxu0 0
    %1834 = vmatprep.subr.bf16.mxu0 0
    %1835 = vmatpush1.bf16.msra.mxu0 0
    %1836 = vmatprep.subr.bf16.mxu0 0
    %1837 = vmatpush1.bf16.msra.mxu0 0
    %1838 = vmatprep.subr.bf16.mxu0 0
    %1839 = vmatpush1.bf16.msra.mxu0 0
    %1840 = vmatprep.subr.bf16.mxu0 0
    %1841 = vmatpush1.bf16.msra.mxu0 0
    %1842 = vmatprep.subr.bf16.mxu0 0
    %1843 = vmatpush1.bf16.msra.mxu0 0
    %1844 = vmatprep.subr.bf16.mxu0 0
    %1845 = vmatpush1.bf16.msra.mxu0 0
    %1846 = vmatprep.mubr.bf16.mxu0 0
    %1847 = vmatmul.mubr.bf16.gmra.mrb[0].mxu0 %v1809
    %v1848 = vpop.f32.mrb[0].mxu0
    %v1849 = vadd.f32 0.0, %v1848
    %v1850 = vpop.f32.mrb[0].mxu0
    %v1851 = vpop.f32.mrb[0].mxu0
    %v1852 = vpop.f32.mrb[0].mxu0
    %1853 = vdwg.mxu0
    %v1855 = vsel %vm1134, %v1620, 0
    %v1858 = vsel %vm1626, %v1131, 0
    %1860 = vmatprep.subr.bf16.mxu0 0
    %1861 = vmatpush1.bf16.msra.mxu0 %v1858
    %1862 = vmatprep.subr.bf16.mxu0 0
    %1863 = vmatpush1.bf16.msra.mxu0 0
    %1864 = vmatprep.subr.bf16.mxu0 0
    %1865 = vmatpush1.bf16.msra.mxu0 0
    %1866 = vmatprep.subr.bf16.mxu0 0
    %1867 = vmatpush1.bf16.msra.mxu0 0
    %1868 = vmatprep.subr.bf16.mxu0 0
    %1869 = vmatpush1.bf16.msra.mxu0 0
    %1870 = vmatprep.subr.bf16.mxu0 0
    %1871 = vmatpush1.bf16.msra.mxu0 0
    %1872 = vmatprep.subr.bf16.mxu0 0
    %1873 = vmatpush1.bf16.msra.mxu0 0
    %1874 = vmatprep.subr.bf16.mxu0 0
    %1875 = vmatpush1.bf16.msra.mxu0 0
    %1876 = vmatprep.subr.bf16.mxu0 0
    %1877 = vmatpush1.bf16.msra.mxu0 0
    %1878 = vmatprep.subr.bf16.mxu0 0
    %1879 = vmatpush1.bf16.msra.mxu0 0
    %1880 = vmatprep.subr.bf16.mxu0 0
    %1881 = vmatpush1.bf16.msra.mxu0 0
    %1882 = vmatprep.subr.bf16.mxu0 0
    %1883 = vmatpush1.bf16.msra.mxu0 0
    %1884 = vmatprep.subr.bf16.mxu0 0
    %1885 = vmatpush1.bf16.msra.mxu0 0
    %1886 = vmatprep.subr.bf16.mxu0 0
    %1887 = vmatpush1.bf16.msra.mxu0 0
    %1888 = vmatprep.subr.bf16.mxu0 0
    %1889 = vmatpush1.bf16.msra.mxu0 0
    %1890 = vmatprep.subr.bf16.mxu0 0
    %1891 = vmatpush1.bf16.msra.mxu0 0
    %1892 = vmatprep.mubr.bf16.mxu0 0
    %1893 = vmatmul.mubr.bf16.gmra.mrb[0].mxu0 %v1855
    %v1894 = vpop.f32.mrb[0].mxu0
    %v1895 = vadd.f32 0.0, %v1894
    %v1896 = vpop.f32.mrb[0].mxu0
    %v1897 = vpop.f32.mrb[0].mxu0
    %v1898 = vpop.f32.mrb[0].mxu0
    %1899 = vdwg.mxu0
    %v1901 = vsel %vm1134, %v1621, 0
    %v1904 = vsel %vm1626, %v1132, 0
    %1906 = vmatprep.subr.bf16.mxu0 0
    %1907 = vmatpush1.bf16.msra.mxu0 %v1904
    %1908 = vmatprep.subr.bf16.mxu0 0
    %1909 = vmatpush1.bf16.msra.mxu0 0
    %1910 = vmatprep.subr.bf16.mxu0 0
    %1911 = vmatpush1.bf16.msra.mxu0 0
    %1912 = vmatprep.subr.bf16.mxu0 0
    %1913 = vmatpush1.bf16.msra.mxu0 0
    %1914 = vmatprep.subr.bf16.mxu0 0
    %1915 = vmatpush1.bf16.msra.mxu0 0
    %1916 = vmatprep.subr.bf16.mxu0 0
    %1917 = vmatpush1.bf16.msra.mxu0 0
    %1918 = vmatprep.subr.bf16.mxu0 0
    %1919 = vmatpush1.bf16.msra.mxu0 0
    %1920 = vmatprep.subr.bf16.mxu0 0
    %1921 = vmatpush1.bf16.msra.mxu0 0
    %1922 = vmatprep.subr.bf16.mxu0 0
    %1923 = vmatpush1.bf16.msra.mxu0 0
    %1924 = vmatprep.subr.bf16.mxu0 0
    %1925 = vmatpush1.bf16.msra.mxu0 0
    %1926 = vmatprep.subr.bf16.mxu0 0
    %1927 = vmatpush1.bf16.msra.mxu0 0
    %1928 = vmatprep.subr.bf16.mxu0 0
    %1929 = vmatpush1.bf16.msra.mxu0 0
    %1930 = vmatprep.subr.bf16.mxu0 0
    %1931 = vmatpush1.bf16.msra.mxu0 0
    %1932 = vmatprep.subr.bf16.mxu0 0
    %1933 = vmatpush1.bf16.msra.mxu0 0
    %1934 = vmatprep.subr.bf16.mxu0 0
    %1935 = vmatpush1.bf16.msra.mxu0 0
    %1936 = vmatprep.subr.bf16.mxu0 0
    %1937 = vmatpush1.bf16.msra.mxu0 0
    %1938 = vmatprep.mubr.bf16.mxu0 0
    %1939 = vmatmul.mubr.bf16.gmra.mrb[0].mxu0 %v1901
    %v1940 = vpop.f32.mrb[0].mxu0
    %v1941 = vadd.f32 0.0, %v1940
    %v1942 = vpop.f32.mrb[0].mxu0
    %v1943 = vpop.f32.mrb[0].mxu0
    %v1944 = vpop.f32.mrb[0].mxu0
    %1945 = vdwg.mxu0
    %v1947 = vsel %vm1134, %v1622, 0
    %v1950 = vsel %vm1626, %v1133, 0
    %1952 = vmatprep.subr.bf16.mxu0 0
    %1953 = vmatpush1.bf16.msra.mxu0 %v1950
    %1954 = vmatprep.subr.bf16.mxu0 0
    %1955 = vmatpush1.bf16.msra.mxu0 0
    %1956 = vmatprep.subr.bf16.mxu0 0
    %1957 = vmatpush1.bf16.msra.mxu0 0
    %1958 = vmatprep.subr.bf16.mxu0 0
    %1959 = vmatpush1.bf16.msra.mxu0 0
    %1960 = vmatprep.subr.bf16.mxu0 0
    %1961 = vmatpush1.bf16.msra.mxu0 0
    %1962 = vmatprep.subr.bf16.mxu0 0
    %1963 = vmatpush1.bf16.msra.mxu0 0
    %1964 = vmatprep.subr.bf16.mxu0 0
    %1965 = vmatpush1.bf16.msra.mxu0 0
    %1966 = vmatprep.subr.bf16.mxu0 0
    %1967 = vmatpush1.bf16.msra.mxu0 0
    %1968 = vmatprep.subr.bf16.mxu0 0
    %1969 = vmatpush1.bf16.msra.mxu0 0
    %1970 = vmatprep.subr.bf16.mxu0 0
    %1971 = vmatpush1.bf16.msra.mxu0 0
    %1972 = vmatprep.subr.bf16.mxu0 0
    %1973 = vmatpush1.bf16.msra.mxu0 0
    %1974 = vmatprep.subr.bf16.mxu0 0
    %1975 = vmatpush1.bf16.msra.mxu0 0
    %1976 = vmatprep.subr.bf16.mxu0 0
    %1977 = vmatpush1.bf16.msra.mxu0 0
    %1978 = vmatprep.subr.bf16.mxu0 0
    %1979 = vmatpush1.bf16.msra.mxu0 0
    %1980 = vmatprep.subr.bf16.mxu0 0
    %1981 = vmatpush1.bf16.msra.mxu0 0
    %1982 = vmatprep.subr.bf16.mxu0 0
    %1983 = vmatpush1.bf16.msra.mxu0 0
    %1984 = vmatprep.mubr.bf16.mxu0 0
    %1985 = vmatmul.mubr.bf16.gmra.mrb[0].mxu0 %v1947
    %v1986 = vpop.f32.mrb[0].mxu0
    %v1987 = vadd.f32 0.0, %v1986
    %v1988 = vpop.f32.mrb[0].mxu0
    %v1989 = vpop.f32.mrb[0].mxu0
    %v1990 = vpop.f32.mrb[0].mxu0
    %1991 = vdwg.mxu0
    %v1992 = vadd.f32 %v1575, %v1665
    %v1993 = vadd.f32 %v1576, %v1711
    %v1994 = vadd.f32 %v1577, %v1757
    %v1995 = vadd.f32 %v1578, %v1803
    %v1996 = vadd.f32 %v1579, %v1849
    %v1997 = vadd.f32 %v1580, %v1895
    %v1998 = vadd.f32 %v1581, %v1941
    %v1999 = vadd.f32 %v1582, %v1987
    %v2000 = vrcp.pop %v1607
    %v2001 = vrcp.pop %v1608
    %v2002 = vrcp.pop %v1609
    %v2003 = vrcp.pop %v1610
    %v2004 = vrcp.pop %v1611
    %v2005 = vrcp.pop %v1612
    %v2006 = vrcp.pop %v1613
    %v2007 = vrcp.pop %v1614
    %v2008 = vmul.f32 %v1992, %v2000
    %v2009 = vmul.f32 %v1993, %v2001
    %v2010 = vmul.f32 %v1994, %v2002
    %v2011 = vmul.f32 %v1995, %v2003
    %v2012 = vmul.f32 %v1996, %v2004
    %v2013 = vmul.f32 %v1997, %v2005
    %v2014 = vmul.f32 %v1998, %v2006
    %v2015 = vmul.f32 %v1999, %v2007
    %v2016 = vcombine.low %v2008, %v2010
    %v2017 = vcombine.high %v2008, %v2010
    %v2019 = vunpack.c.l.s4 1983009808
    %v2020 = vunpack.c.0.s8 %v2019
    %v2021 = vlaneseq
    %v2022 = vshrl.u32 %v2021, 7
    %v2023 = vsub.s32 %v2020, %v2022
    %v2024 = vrot.slane %v2016, %v2023
    %v2026 = vunpack.c.l.s4 1983009808
    %v2027 = vunpack.c.0.s8 %v2026
    %v2028 = vlaneseq
    %v2029 = vshrl.u32 %v2028, 7
    %v2030 = vsub.s32 %v2027, %v2029
    %v2031 = vrot.slane %v2017, %v2030
    %v2032 = vcombine.low %v2009, %v2011
    %v2033 = vcombine.high %v2009, %v2011
    %v2035 = vunpack.c.l.s4 1983009808
    %v2036 = vunpack.c.0.s8 %v2035
    %v2037 = vlaneseq
    %v2038 = vshrl.u32 %v2037, 7
    %v2039 = vsub.s32 %v2036, %v2038
    %v2040 = vrot.slane %v2032, %v2039
    %v2042 = vunpack.c.l.s4 1983009808
    %v2043 = vunpack.c.0.s8 %v2042
    %v2044 = vlaneseq
    %v2045 = vshrl.u32 %v2044, 7
    %v2046 = vsub.s32 %v2043, %v2045
    %v2047 = vrot.slane %v2033, %v2046
    %v2048 = vcombine.low %v2024, %v2040
    %v2049 = vcombine.high %v2024, %v2040
    %v2051 = vunpack.c.l.s4 1934713408
    %v2052 = vunpack.c.0.s8 %v2051
    %v2053 = vlaneseq
    %v2054 = vshrl.u32 %v2053, 7
    %v2055 = vsub.s32 %v2052, %v2054
    %v2056 = vrot.slane %v2048, %v2055
    %v2058 = vunpack.c.l.s4 1934713408
    %v2059 = vunpack.c.0.s8 %v2058
    %v2060 = vlaneseq
    %v2061 = vshrl.u32 %v2060, 7
    %v2062 = vsub.s32 %v2059, %v2061
    %v2063 = vrot.slane %v2049, %v2062
    %v2064 = vcombine.low %v2031, %v2047
    %v2065 = vcombine.high %v2031, %v2047
    %v2067 = vunpack.c.l.s4 1934713408
    %v2068 = vunpack.c.0.s8 %v2067
    %v2069 = vlaneseq
    %v2070 = vshrl.u32 %v2069, 7
    %v2071 = vsub.s32 %v2068, %v2070
    %v2072 = vrot.slane %v2064, %v2071
    %v2074 = vunpack.c.l.s4 1934713408
    %v2075 = vunpack.c.0.s8 %v2074
    %v2076 = vlaneseq
    %v2077 = vshrl.u32 %v2076, 7
    %v2078 = vsub.s32 %v2075, %v2077
    %v2079 = vrot.slane %v2065, %v2078
    %v2080 = vcombine.high %v2056, 0.0
    %v2081 = vcombine.high %v2063, 0.0
    %v2082 = vcombine.high %v2072, 0.0
    %v2083 = vcombine.high %v2079, 0.0
    %v2084 = vcombine.low %v2012, %v2014
    %v2085 = vcombine.high %v2012, %v2014
    %v2087 = vunpack.c.l.s4 1983009808
    %v2088 = vunpack.c.0.s8 %v2087
    %v2089 = vlaneseq
    %v2090 = vshrl.u32 %v2089, 7
    %v2091 = vsub.s32 %v2088, %v2090
    %v2092 = vrot.slane %v2084, %v2091
    %v2094 = vunpack.c.l.s4 1983009808
    %v2095 = vunpack.c.0.s8 %v2094
    %v2096 = vlaneseq
    %v2097 = vshrl.u32 %v2096, 7
    %v2098 = vsub.s32 %v2095, %v2097
    %v2099 = vrot.slane %v2085, %v2098
    %v2100 = vcombine.low %v2013, %v2015
    %v2101 = vcombine.high %v2013, %v2015
    %v2103 = vunpack.c.l.s4 1983009808
    %v2104 = vunpack.c.0.s8 %v2103
    %v2105 = vlaneseq
    %v2106 = vshrl.u32 %v2105, 7
    %v2107 = vsub.s32 %v2104, %v2106
    %v2108 = vrot.slane %v2100, %v2107
    %v2110 = vunpack.c.l.s4 1983009808
    %v2111 = vunpack.c.0.s8 %v2110
    %v2112 = vlaneseq
    %v2113 = vshrl.u32 %v2112, 7
    %v2114 = vsub.s32 %v2111, %v2113
    %v2115 = vrot.slane %v2101, %v2114
    %v2116 = vcombine.low %v2092, %v2108
    %v2117 = vcombine.high %v2092, %v2108
    %v2119 = vunpack.c.l.s4 1934713408
    %v2120 = vunpack.c.0.s8 %v2119
    %v2121 = vlaneseq
    %v2122 = vshrl.u32 %v2121, 7
    %v2123 = vsub.s32 %v2120, %v2122
    %v2124 = vrot.slane %v2116, %v2123
    %v2126 = vunpack.c.l.s4 1934713408
    %v2127 = vunpack.c.0.s8 %v2126
    %v2128 = vlaneseq
    %v2129 = vshrl.u32 %v2128, 7
    %v2130 = vsub.s32 %v2127, %v2129
    %v2131 = vrot.slane %v2117, %v2130
    %v2132 = vcombine.low %v2099, %v2115
    %v2133 = vcombine.high %v2099, %v2115
    %v2135 = vunpack.c.l.s4 1934713408
    %v2136 = vunpack.c.0.s8 %v2135
    %v2137 = vlaneseq
    %v2138 = vshrl.u32 %v2137, 7
    %v2139 = vsub.s32 %v2136, %v2138
    %v2140 = vrot.slane %v2132, %v2139
    %v2142 = vunpack.c.l.s4 1934713408
    %v2143 = vunpack.c.0.s8 %v2142
    %v2144 = vlaneseq
    %v2145 = vshrl.u32 %v2144, 7
    %v2146 = vsub.s32 %v2143, %v2145
    %v2147 = vrot.slane %v2133, %v2146
    %v2148 = vcombine.high %v2124, 0.0
    %v2149 = vcombine.high %v2131, 0.0
    %v2150 = vcombine.high %v2140, 0.0
    %v2151 = vcombine.high %v2147, 0.0
    %v2152 = vcombine.low %v2056, %v2063
    %v2154 = vunpack.c.l.s4 1983009808
    %v2155 = vunpack.c.0.s8 %v2154
    %v2156 = vlaneseq
    %v2157 = vshrl.u32 %v2156, 7
    %v2158 = vsub.s32 %v2155, %v2157
    %v2159 = vrot.slane %v2152, %v2158
    %v2160 = vcombine.low %v2080, %v2081
    %v2162 = vunpack.c.l.s4 1983009808
    %v2163 = vunpack.c.0.s8 %v2162
    %v2164 = vlaneseq
    %v2165 = vshrl.u32 %v2164, 7
    %v2166 = vsub.s32 %v2163, %v2165
    %v2167 = vrot.slane %v2160, %v2166
    %v2168 = vcombine.low %v2072, %v2079
    %v2170 = vunpack.c.l.s4 1983009808
    %v2171 = vunpack.c.0.s8 %v2170
    %v2172 = vlaneseq
    %v2173 = vshrl.u32 %v2172, 7
    %v2174 = vsub.s32 %v2171, %v2173
    %v2175 = vrot.slane %v2168, %v2174
    %v2176 = vcombine.low %v2082, %v2083
    %v2178 = vunpack.c.l.s4 1983009808
    %v2179 = vunpack.c.0.s8 %v2178
    %v2180 = vlaneseq
    %v2181 = vshrl.u32 %v2180, 7
    %v2182 = vsub.s32 %v2179, %v2181
    %v2183 = vrot.slane %v2176, %v2182
    %v2184 = vcombine.low %v2159, %v2167
    %v2185 = vcombine.high %v2159, %v2167
    %v2187 = vunpack.c.l.s4 1934713408
    %v2188 = vunpack.c.0.s8 %v2187
    %v2189 = vlaneseq
    %v2190 = vshrl.u32 %v2189, 7
    %v2191 = vsub.s32 %v2188, %v2190
    %v2192 = vrot.slane %v2184, %v2191
    %v2194 = vunpack.c.l.s4 1934713408
    %v2195 = vunpack.c.0.s8 %v2194
    %v2196 = vlaneseq
    %v2197 = vshrl.u32 %v2196, 7
    %v2198 = vsub.s32 %v2195, %v2197
    %v2199 = vrot.slane %v2185, %v2198
    %v2200 = vcombine.low %v2175, %v2183
    %v2201 = vcombine.high %v2175, %v2183
    %v2203 = vunpack.c.l.s4 1934713408
    %v2204 = vunpack.c.0.s8 %v2203
    %v2205 = vlaneseq
    %v2206 = vshrl.u32 %v2205, 7
    %v2207 = vsub.s32 %v2204, %v2206
    %v2208 = vrot.slane %v2200, %v2207
    %v2210 = vunpack.c.l.s4 1934713408
    %v2211 = vunpack.c.0.s8 %v2210
    %v2212 = vlaneseq
    %v2213 = vshrl.u32 %v2212, 7
    %v2214 = vsub.s32 %v2211, %v2213
    %v2215 = vrot.slane %v2201, %v2214
    %v2216 = vcombine.low %v2192, %v2208
    %v2217 = vcombine.high %v2192, %v2208
    %v2218 = vcombine.low %v2199, %v2215
    %v2219 = vcombine.high %v2199, %v2215
    %v2220 = vcombine.low %v2124, %v2131
    %v2222 = vunpack.c.l.s4 1983009808
    %v2223 = vunpack.c.0.s8 %v2222
    %v2224 = vlaneseq
    %v2225 = vshrl.u32 %v2224, 7
    %v2226 = vsub.s32 %v2223, %v2225
    %v2227 = vrot.slane %v2220, %v2226
    %v2228 = vcombine.low %v2148, %v2149
    %v2230 = vunpack.c.l.s4 1983009808
    %v2231 = vunpack.c.0.s8 %v2230
    %v2232 = vlaneseq
    %v2233 = vshrl.u32 %v2232, 7
    %v2234 = vsub.s32 %v2231, %v2233
    %v2235 = vrot.slane %v2228, %v2234
    %v2236 = vcombine.low %v2140, %v2147
    %v2238 = vunpack.c.l.s4 1983009808
    %v2239 = vunpack.c.0.s8 %v2238
    %v2240 = vlaneseq
    %v2241 = vshrl.u32 %v2240, 7
    %v2242 = vsub.s32 %v2239, %v2241
    %v2243 = vrot.slane %v2236, %v2242
    %v2244 = vcombine.low %v2150, %v2151
    %v2246 = vunpack.c.l.s4 1983009808
    %v2247 = vunpack.c.0.s8 %v2246
    %v2248 = vlaneseq
    %v2249 = vshrl.u32 %v2248, 7
    %v2250 = vsub.s32 %v2247, %v2249
    %v2251 = vrot.slane %v2244, %v2250
    %v2252 = vcombine.low %v2227, %v2235
    %v2253 = vcombine.high %v2227, %v2235
    %v2255 = vunpack.c.l.s4 1934713408
    %v2256 = vunpack.c.0.s8 %v2255
    %v2257 = vlaneseq
    %v2258 = vshrl.u32 %v2257, 7
    %v2259 = vsub.s32 %v2256, %v2258
    %v2260 = vrot.slane %v2252, %v2259
    %v2262 = vunpack.c.l.s4 1934713408
    %v2263 = vunpack.c.0.s8 %v2262
    %v2264 = vlaneseq
    %v2265 = vshrl.u32 %v2264, 7
    %v2266 = vsub.s32 %v2263, %v2265
    %v2267 = vrot.slane %v2253, %v2266
    %v2268 = vcombine.low %v2243, %v2251
    %v2269 = vcombine.high %v2243, %v2251
    %v2271 = vunpack.c.l.s4 1934713408
    %v2272 = vunpack.c.0.s8 %v2271
    %v2273 = vlaneseq
    %v2274 = vshrl.u32 %v2273, 7
    %v2275 = vsub.s32 %v2272, %v2274
    %v2276 = vrot.slane %v2268, %v2275
    %v2278 = vunpack.c.l.s4 1934713408
    %v2279 = vunpack.c.0.s8 %v2278
    %v2280 = vlaneseq
    %v2281 = vshrl.u32 %v2280, 7
    %v2282 = vsub.s32 %v2279, %v2281
    %v2283 = vrot.slane %v2269, %v2282
    %v2284 = vcombine.low %v2260, %v2276
    %v2285 = vcombine.high %v2260, %v2276
    %v2286 = vcombine.low %v2267, %v2283
    %v2287 = vcombine.high %v2267, %v2283
    %2290 = vrot.lane.b32.xlu0 %v2217, 8
    %v2291 = vpop.permute.xlu0 %2290
    %2292 = vrot.lane.b32.xlu0 %v2285, 8
    %v2293 = vpop.permute.xlu0 %2292
    %2298 = vrot.lane.b32.xlu0 %v2218, 16
    %v2299 = vpop.permute.xlu0 %2298
    %2300 = vrot.lane.b32.xlu0 %v2286, 16
    %v2301 = vpop.permute.xlu0 %2300
    %2306 = vrot.lane.b32.xlu0 %v2219, 24
    %v2307 = vpop.permute.xlu0 %2306
    %2308 = vrot.lane.b32.xlu0 %v2287, 24
    %v2309 = vpop.permute.xlu0 %2308
    %v2312 = vsel %vm1134, %v2216, %v2291
    %v2313 = vsel %vm1134, %v2284, %v2293
    %vm2314 = vcmask 130048
    %v2315 = vsel %vm2314, %v2312, %v2299
    %v2316 = vsel %vm2314, %v2313, %v2301
    %vm2317 = vcmask 195584
    %v2318 = vsel %vm2317, %v2315, %v2307
    %v2319 = vsel %vm2317, %v2316, %v2309
    %v2320 = vpack.c.bf16 %v2319, %v2318
    %v2321 = vld [vmem:[%s5] sm:$0xf]
    %v2322 = vld [vmem:[%s5 + $0x4] sm:$0xf]
    %v2323 = vld [vmem:[%s5 + $0x8] sm:$0xf]
    %v2324 = vld [vmem:[%s5 + $0xc] sm:$0xf]
    %v2325 = vld [vmem:[%s6] sm:$0x1]
    %v2327 = vlaneseq
    %v2328 = vshrl.u32 %v2327, 7
    %v2329 = vsub.s32 0, %v2328
    %v2330 = vrot.slane %v2325, %v2329
    %v2336 = vunpack.c.l.b16 %v2321
    %v2337 = vunpack.c.l.b16 %v2322
    %v2338 = vunpack.c.l.b16 %v2323
    %v2339 = vunpack.c.l.b16 %v2324
    %v2340 = vpack.c.b16 %v2337, %v2336
    %v2341 = vpack.c.b16 %v2339, %v2338
    %v2345 = vsel %vm114, %v2320, 0
    %2347 = vmatprep.subr.bf16.mxu0 0
    %2348 = vmatpush1.bf16.msra.mxu0 %v2340
    %2349 = vmatprep.subr.bf16.mxu0 0
    %2350 = vmatpush1.bf16.msra.mxu0 %v2341
    %2351 = vmatprep.subr.bf16.mxu0 0
    %2352 = vmatpush1.bf16.msra.mxu0 0
    %2353 = vmatprep.subr.bf16.mxu0 0
    %2354 = vmatpush1.bf16.msra.mxu0 0
    %2355 = vmatprep.subr.bf16.mxu0 0
    %2356 = vmatpush1.bf16.msra.mxu0 0
    %2357 = vmatprep.subr.bf16.mxu0 0
    %2358 = vmatpush1.bf16.msra.mxu0 0
    %2359 = vmatprep.subr.bf16.mxu0 0
    %2360 = vmatpush1.bf16.msra.mxu0 0
    %2361 = vmatprep.subr.bf16.mxu0 0
    %2362 = vmatpush1.bf16.msra.mxu0 0
    %2363 = vmatprep.subr.bf16.mxu0 0
    %2364 = vmatpush1.bf16.msra.mxu0 0
    %2365 = vmatprep.subr.bf16.mxu0 0
    %2366 = vmatpush1.bf16.msra.mxu0 0
    %2367 = vmatprep.subr.bf16.mxu0 0
    %2368 = vmatpush1.bf16.msra.mxu0 0
    %2369 = vmatprep.subr.bf16.mxu0 0
    %2370 = vmatpush1.bf16.msra.mxu0 0
    %2371 = vmatprep.subr.bf16.mxu0 0
    %2372 = vmatpush1.bf16.msra.mxu0 0
    %2373 = vmatprep.subr.bf16.mxu0 0
    %2374 = vmatpush1.bf16.msra.mxu0 0
    %2375 = vmatprep.subr.bf16.mxu0 0
    %2376 = vmatpush1.bf16.msra.mxu0 0
    %2377 = vmatprep.subr.bf16.mxu0 0
    %2378 = vmatpush1.bf16.msra.mxu0 0
    %2379 = vmatprep.mubr.bf16.mxu0 0
    %2380 = vmatmul.mubr.bf16.gmra.mrb[0].mxu0 %v2345
    %v2381 = vpop.f32.mrb[0].mxu0
    %v2382 = vadd.f32 %v2330, %v2381
    %v2383 = vpop.f32.mrb[0].mxu0
    %v2384 = vpop.f32.mrb[0].mxu0
    %v2385 = vadd.f32 %v2330, %v2384
    %v2386 = vpop.f32.mrb[0].mxu0
    %2387 = vdwg.mxu0
    %v2388 = vadd.f32 %v2382, %v112
    %v2389 = vadd.f32 %v2385, %v113
    %v2390 = vsel %vm114, %v2388, 0.0
    %2391 = vadd.xlane.f32.xlu0 %v2390
    %v2392 = vpop.xlane.xlu0 %2391
    %v2393 = vsel %vm114, %v2389, 0.0
    %2394 = vadd.xlane.f32.xlu0 %v2393
    %v2395 = vpop.xlane.xlu0 %2394
    %v2396 = vmul.f32 %v2392, %v121
    %v2397 = vmul.f32 %v2395, %v121
    %v2398 = vsub.f32 %v2388, %v2396
    %v2399 = vsub.f32 %v2389, %v2397
    %v2400 = vmul.f32 %v2398, %v2398
    %v2401 = vmul.f32 %v2399, %v2399
    %v2402 = vsel %vm114, %v2400, 0.0
    %2403 = vadd.xlane.f32.xlu0 %v2402
    %v2404 = vpop.xlane.xlu0 %2403
    %v2405 = vsel %vm114, %v2401, 0.0
    %2406 = vadd.xlane.f32.xlu0 %v2405
    %v2407 = vpop.xlane.xlu0 %2406
    %v2408 = vmul.f32 %v2404, %v121
    %v2409 = vmul.f32 %v2407, %v121
    %v2410 = vadd.f32 %v2408, 1e-05
    %v2411 = vadd.f32 %v2409, 1e-05
    %v2412 = vrsqrt.pop %v2410
    %v2413 = vrsqrt.pop %v2411
    %v2414 = vmul.f32 %v2398, %v2412
    %v2415 = vmul.f32 %v2399, %v2413
    %v2416 = vmul.f32 %v2414, %v146
    %v2417 = vmul.f32 %v2415, %v146
    %v2418 = vadd.f32 %v2416, %v154
    %v2419 = vadd.f32 %v2417, %v154
    %v2420 = vpack.c.bf16 %v2419, %v2418
    %v2421 = vld [vmem:[#allocation2] sm:$0xf]
    %v2422 = vld [vmem:[#allocation2 + $0x4] sm:$0xf]
    %v2423 = vld [vmem:[#allocation2 + $0x8] sm:$0xf]
    %v2424 = vld [vmem:[#allocation2 + $0xc] sm:$0xf]
    %v2425 = vld [vmem:[%s8] sm:$0x1]
    %v2427 = vlaneseq
    %v2428 = vshrl.u32 %v2427, 7
    %v2429 = vsub.s32 0, %v2428
    %v2430 = vrot.slane %v2425, %v2429
    %v2436 = vunpack.c.l.b16 %v2421
    %v2437 = vunpack.c.l.b16 %v2422
    %v2438 = vunpack.c.l.b16 %v2423
    %v2439 = vunpack.c.l.b16 %v2424
    %v2440 = vpack.c.b16 %v2437, %v2436
    %v2441 = vpack.c.b16 %v2439, %v2438
    %v2445 = vsel %vm114, %v2420, 0
    %2447 = vmatprep.subr.bf16.mxu0 0
    %2448 = vmatpush1.bf16.msra.mxu0 %v2440
    %2449 = vmatprep.subr.bf16.mxu0 0
    %2450 = vmatpush1.bf16.msra.mxu0 %v2441
    %2451 = vmatprep.subr.bf16.mxu0 0
    %2452 = vmatpush1.bf16.msra.mxu0 0
    %2453 = vmatprep.subr.bf16.mxu0 0
    %2454 = vmatpush1.bf16.msra.mxu0 0
    %2455 = vmatprep.subr.bf16.mxu0 0
    %2456 = vmatpush1.bf16.msra.mxu0 0
    %2457 = vmatprep.subr.bf16.mxu0 0
    %2458 = vmatpush1.bf16.msra.mxu0 0
    %2459 = vmatprep.subr.bf16.mxu0 0
    %2460 = vmatpush1.bf16.msra.mxu0 0
    %2461 = vmatprep.subr.bf16.mxu0 0
    %2462 = vmatpush1.bf16.msra.mxu0 0
    %2463 = vmatprep.subr.bf16.mxu0 0
    %2464 = vmatpush1.bf16.msra.mxu0 0
    %2465 = vmatprep.subr.bf16.mxu0 0
    %2466 = vmatpush1.bf16.msra.mxu0 0
    %2467 = vmatprep.subr.bf16.mxu0 0
    %2468 = vmatpush1.bf16.msra.mxu0 0
    %2469 = vmatprep.subr.bf16.mxu0 0
    %2470 = vmatpush1.bf16.msra.mxu0 0
    %2471 = vmatprep.subr.bf16.mxu0 0
    %2472 = vmatpush1.bf16.msra.mxu0 0
    %2473 = vmatprep.subr.bf16.mxu0 0
    %2474 = vmatpush1.bf16.msra.mxu0 0
    %2475 = vmatprep.subr.bf16.mxu0 0
    %2476 = vmatpush1.bf16.msra.mxu0 0
    %2477 = vmatprep.subr.bf16.mxu0 0
    %2478 = vmatpush1.bf16.msra.mxu0 0
    %2479 = vmatprep.mubr.bf16.mxu0 0
    %2480 = vmatmul.mubr.bf16.gmra.mrb[0].mxu0 %v2445
    %v2481 = vpop.f32.mrb[0].mxu0
    %v2482 = vadd.f32 %v2430, %v2481
    %v2483 = vpop.f32.mrb[0].mxu0
    %v2484 = vpop.f32.mrb[0].mxu0
    %v2485 = vadd.f32 %v2430, %v2484
    %v2486 = vpop.f32.mrb[0].mxu0
    %2487 = vdwg.mxu0
    %v2488 = vmul.f32 %v2482, 0.5
    %v2489 = vmul.f32 %v2485, 0.5
    %v2490 = vmul.f32 %v2482, 0.70710677
    %v2491 = vmul.f32 %v2485, 0.70710677
    %v2492 = verf.f32.pop %v2490
    %v2493 = verf.f32.pop %v2491
    %v2494 = vadd.f32 %v2492, 1.0
    %v2495 = vadd.f32 %v2493, 1.0
    %v2496 = vmul.f32 %v2488, %v2494
    %v2497 = vmul.f32 %v2489, %v2495
    %v2498 = vpack.c.bf16 %v2497, %v2496
    %v2499 = vld [vmem:[%s9] sm:$0xf]
    %v2500 = vld [vmem:[%s9 + $0x4] sm:$0xf]
    %v2501 = vld [vmem:[%s9 + $0x8] sm:$0xf]
    %v2502 = vld [vmem:[%s9 + $0xc] sm:$0xf]
    %v2503 = vld [vmem:[%s9 + $0x10] sm:$0xf]
    %v2504 = vld [vmem:[%s9 + $0x14] sm:$0xf]
    %v2505 = vld [vmem:[%s9 + $0x18] sm:$0xf]
    %v2506 = vld [vmem:[%s9 + $0x1c] sm:$0xf]
    %v2507 = vld [vmem:[%s10] sm:$0x1]
    %v2509 = vlaneseq
    %v2510 = vshrl.u32 %v2509, 7
    %v2511 = vsub.s32 0, %v2510
    %v2512 = vrot.slane %v2507, %v2511
    %v2522 = vunpack.c.l.b16 %v2499
    %v2523 = vunpack.c.l.b16 %v2500
    %v2524 = vunpack.c.l.b16 %v2501
    %v2525 = vunpack.c.l.b16 %v2502
    %v2526 = vunpack.c.l.b16 %v2503
    %v2527 = vunpack.c.l.b16 %v2504
    %v2528 = vunpack.c.l.b16 %v2505
    %v2529 = vunpack.c.l.b16 %v2506
    %v2530 = vpack.c.b16 %v2523, %v2522
    %v2531 = vpack.c.b16 %v2525, %v2524
    %v2532 = vpack.c.b16 %v2527, %v2526
    %v2533 = vpack.c.b16 %v2529, %v2528
    %vm2538 = vcmask 523264
    %v2540 = vsel %vm2538, %v2498, 0
    %2542 = vmatprep.subr.bf16.mxu0 0
    %2543 = vmatpush1.bf16.msra.mxu0 %v2530
    %2544 = vmatprep.subr.bf16.mxu0 0
    %2545 = vmatpush1.bf16.msra.mxu0 %v2531
    %2546 = vmatprep.subr.bf16.mxu0 0
    %2547 = vmatpush1.bf16.msra.mxu0 %v2532
    %2548 = vmatprep.subr.bf16.mxu0 0
    %2549 = vmatpush1.bf16.msra.mxu0 %v2533
    %2550 = vmatprep.subr.bf16.mxu0 0
    %2551 = vmatpush1.bf16.msra.mxu0 0
    %2552 = vmatprep.subr.bf16.mxu0 0
    %2553 = vmatpush1.bf16.msra.mxu0 0
    %2554 = vmatprep.subr.bf16.mxu0 0
    %2555 = vmatpush1.bf16.msra.mxu0 0
    %2556 = vmatprep.subr.bf16.mxu0 0
    %2557 = vmatpush1.bf16.msra.mxu0 0
    %2558 = vmatprep.subr.bf16.mxu0 0
    %2559 = vmatpush1.bf16.msra.mxu0 0
    %2560 = vmatprep.subr.bf16.mxu0 0
    %2561 = vmatpush1.bf16.msra.mxu0 0
    %2562 = vmatprep.subr.bf16.mxu0 0
    %2563 = vmatpush1.bf16.msra.mxu0 0
    %2564 = vmatprep.subr.bf16.mxu0 0
    %2565 = vmatpush1.bf16.msra.mxu0 0
    %2566 = vmatprep.subr.bf16.mxu0 0
    %2567 = vmatpush1.bf16.msra.mxu0 0
    %2568 = vmatprep.subr.bf16.mxu0 0
    %2569 = vmatpush1.bf16.msra.mxu0 0
    %2570 = vmatprep.subr.bf16.mxu0 0
    %2571 = vmatpush1.bf16.msra.mxu0 0
    %2572 = vmatprep.subr.bf16.mxu0 0
    %2573 = vmatpush1.bf16.msra.mxu0 0
    %2574 = vmatprep.mubr.bf16.mxu0 0
    %2575 = vmatmul.mubr.bf16.gmra.mrb[0].mxu0 %v2540
    %v2576 = vpop.f32.mrb[0].mxu0
    %v2577 = vadd.f32 %v2512, %v2576
    %v2578 = vpop.f32.mrb[0].mxu0
    %v2579 = vpop.f32.mrb[0].mxu0
    %v2580 = vadd.f32 %v2512, %v2579
    %v2581 = vpop.f32.mrb[0].mxu0
    %2582 = vdwg.mxu0
    %v2583 = vmul.f32 %v2577, 0.5
    %v2584 = vmul.f32 %v2580, 0.5
    %v2585 = vmul.f32 %v2577, 0.70710677
    %v2586 = vmul.f32 %v2580, 0.70710677
    %v2587 = verf.f32.pop %v2585
    %v2588 = verf.f32.pop %v2586
    %v2589 = vadd.f32 %v2587, 1.0
    %v2590 = vadd.f32 %v2588, 1.0
    %v2591 = vmul.f32 %v2583, %v2589
    %v2592 = vmul.f32 %v2584, %v2590
    %v2593 = vadd.f32 %v2591, %v2388
    %v2594 = vadd.f32 %v2592, %v2389
    %v2595 = vcombine.high %v2593, 0.0
    %v2597 = vunpack.c.l.s4 1983009808
    %v2598 = vunpack.c.0.s8 %v2597
    %v2599 = vlaneseq
    %v2600 = vshrl.u32 %v2599, 7
    %v2601 = vsub.s32 %v2598, %v2600
    %v2602 = vrot.slane %v2593, %v2601
    %v2604 = vunpack.c.l.s4 1983009808
    %v2605 = vunpack.c.0.s8 %v2604
    %v2606 = vlaneseq
    %v2607 = vshrl.u32 %v2606, 7
    %v2608 = vsub.s32 %v2605, %v2607
    %v2609 = vrot.slane %v2595, %v2608
    %v2610 = vcombine.high %v2594, 0.0
    %v2612 = vunpack.c.l.s4 1983009808
    %v2613 = vunpack.c.0.s8 %v2612
    %v2614 = vlaneseq
    %v2615 = vshrl.u32 %v2614, 7
    %v2616 = vsub.s32 %v2613, %v2615
    %v2617 = vrot.slane %v2594, %v2616
    %v2619 = vunpack.c.l.s4 1983009808
    %v2620 = vunpack.c.0.s8 %v2619
    %v2621 = vlaneseq
    %v2622 = vshrl.u32 %v2621, 7
    %v2623 = vsub.s32 %v2620, %v2622
    %v2624 = vrot.slane %v2610, %v2623
    %v2625 = vcombine.low %v2602, %v2617
    %v2626 = vcombine.high %v2602, %v2617
    %v2628 = vunpack.c.l.s4 1934713408
    %v2629 = vunpack.c.0.s8 %v2628
    %v2630 = vlaneseq
    %v2631 = vshrl.u32 %v2630, 7
    %v2632 = vsub.s32 %v2629, %v2631
    %v2633 = vrot.slane %v2625, %v2632
    %v2635 = vunpack.c.l.s4 1934713408
    %v2636 = vunpack.c.0.s8 %v2635
    %v2637 = vlaneseq
    %v2638 = vshrl.u32 %v2637, 7
    %v2639 = vsub.s32 %v2636, %v2638
    %v2640 = vrot.slane %v2626, %v2639
    %v2641 = vcombine.low %v2609, %v2624
    %v2642 = vcombine.high %v2609, %v2624
    %v2644 = vunpack.c.l.s4 1934713408
    %v2645 = vunpack.c.0.s8 %v2644
    %v2646 = vlaneseq
    %v2647 = vshrl.u32 %v2646, 7
    %v2648 = vsub.s32 %v2645, %v2647
    %v2649 = vrot.slane %v2641, %v2648
    %v2651 = vunpack.c.l.s4 1934713408
    %v2652 = vunpack.c.0.s8 %v2651
    %v2653 = vlaneseq
    %v2654 = vshrl.u32 %v2653, 7
    %v2655 = vsub.s32 %v2652, %v2654
    %v2656 = vrot.slane %v2642, %v2655
    %v2657 = vcombine.high %v2633, 0.0
    %v2658 = vcombine.high %v2640, 0.0
    %v2659 = vcombine.high %v2649, 0.0
    %v2660 = vcombine.high %v2656, 0.0
    %vm2661 = vcmask 254976
    %2662 = vst.msk [vmem:[#allocation5] sm:$0x3] %vm2661, %v2633
    %2663 = vst.msk [vmem:[#allocation5 + $0x2] sm:$0x3] %vm2661, %v2657
    %2664 = vst.msk [vmem:[#allocation5 + $0x4] sm:$0x3] %vm2661, %v2640
    %2665 = vst.msk [vmem:[#allocation5 + $0x6] sm:$0x3] %vm2661, %v2658
    %2666 = vst.msk [vmem:[#allocation5 + $0x8] sm:$0x3] %vm2661, %v2649
    %2667 = vst.msk [vmem:[#allocation5 + $0xa] sm:$0x3] %vm2661, %v2659
    %2668 = vst.msk [vmem:[#allocation5 + $0xc] sm:$0x3] %vm2661, %v2656
    %2669 = vst.msk [vmem:[#allocation5 + $0xe] sm:$0x3] %vm2661, %v2660
    // Predicated region
    $region50: #{tpu_custom_call.1} parent=1 // pred_check
      _
    $region51: #{tpu_custom_call.1} parent=1 // pred_check_branch
      %2671 = sbr.rel (0) target = $region53
    $region52: #{tpu_custom_call.1} parent=1 // pred_region
      %s2673 = ssub.s32 256, 256
      %2674 = vsyncadd [#allocation4], %s2673
      %s2675 = sshll.u32 [#allocation5], 4
      %s2676 = int_to_ptr.vmem [resolvable:$true] %s2675
      %2681 = dma.vmem_to_hbm [thread:$0]  %s2676, 256, %s11, [#allocation4], 32, 32, 2
    $region53: #{tpu_custom_call.1} parent=1 // pred_fallthru
      _
    // Predicated region
    $region54: #{tpu_custom_call.1} parent=1 // pred_check
      _
    $region55: #{tpu_custom_call.1} parent=1 // pred_check_branch
      %2683 = sbr.rel (0) target = $region57
    $region56: #{tpu_custom_call.1} parent=1 // pred_region
      %2684 = dma.done [#allocation4], 256
    $region57: #{tpu_custom_call.1} parent=1 // pred_fallthru
      _
    %2685 = vsyncpa [#allocation3], 1
    %2686 = vsyncpa [#allocation4], 1

</llo_original>
